<compile_context>
chip_gen: v7x
topology: tpu7x:2x2x1
jax: 0.10.0
libtpu: 0.0.40
codegen_flags: <defaults>
</compile_context>

<pallas_src>
import functools

import jax
import jax.numpy as jnp
from jax import lax
from jax.experimental import pallas as pl
from jax.experimental.pallas import tpu as pltpu


def _target_repr_kernel(x_ref,                     # (R, Cp) f32, R = TB*L gathered embeddings
                        w1_ref, b1_ref,            # (3*Cp, Cp), (1, Cp)
                        w2_ref, b2_ref,            # (5*Cp, Cp), (1, Cp)
                        w3_ref, b3_ref,            # (7*Cp, Cp), (1, Cp)
                        out_ref,                   # (R, Cp) f32
                        *, L):
    R, Cp = x_ref.shape
    # in-sequence position of each row (batch folded into rows); kept (R,1), broadcast on use
    pos = lax.broadcasted_iota(jnp.int32, (R, 1), 0) % L

    def conv_relu(x, w_ref, b_ref):
        K = w_ref.shape[0] // Cp
        P = (K - 1) // 2
        views = []
        for k in range(K):                         # static: builds the im2col operand
            d = k - P                              # row r needs x[r + d]
            if d == 0:
                views.append(x)
                continue
            # XLU rotate instead of pad+slice; rows that wrap (or cross a sequence boundary)
            # are exactly the rows whose in-sequence source is outside [0, L) -> masked to 0.
            v = pltpu.roll(x, shift=(-d) % R, axis=0)
            valid = jnp.logical_and(pos + d >= 0, pos + d < L)     # (R,1) boundary mask
            views.append(jnp.where(valid, v, 0.0))
        cols = jnp.concatenate(views, axis=-1)     # (R, K*Cp), 128-aligned lane chunks
        y = jnp.dot(cols.astype(w_ref.dtype), w_ref[...],          # one MXU matmul, f32 acc
                    preferred_element_type=jnp.float32)
        return jnp.maximum(y + b_ref[...], 0.0)

    x = x_ref[...]
    x1 = conv_relu(x, w1_ref, b1_ref)
    acc = x1
    x2 = conv_relu(x1, w2_ref, b2_ref)
    acc = acc + x2
    x3 = conv_relu(x2, w3_ref, b3_ref)
    out_ref[...] = (acc + x3).astype(out_ref.dtype)


def _round_up(x, m):
    return (x + m - 1) // m * m


def _pick_tb(B, L, Cp):
    """Batch elements per grid step.

    Targets ~512-1024 rows/step at Cp=128 (scaled down for larger Cp so the im2col temp stays
    modest), keeps blocks sublane-aligned, and keeps >=2 (preferably an even number of) grid
    steps when B >= 2 so v7x's two TensorCores both get work under the 'parallel' axis.
    """
    if B == 1:
        return 1
    target_rows = max(256, (1024 * 128) // Cp)
    cands = [tb for tb in range(1, B) if B % tb == 0 and (tb * L) % 8 == 0]
    if not cands:
        return B                                   # single full-array step (always legal)
    under = [tb for tb in cands if tb * L <= target_rows] or [min(cands)]
    even = [tb for tb in under if (B // tb) % 2 == 0]
    return max(even) if even else max(under)


def target_representation(idx, table, w1, b1, w2, b2, w3, b3, *,
                          matmul_dtype=jnp.float32):
    """idx: (B, L) int; table: (V, C); w_i: (K_i, C_in, C_out); b_i: (C,).
    Returns (L, C) if B == 1 else (B, L, C) (matches torch's .squeeze(0)).
    matmul_dtype=jnp.bfloat16 is the v6e/v7x MXU-throughput knob (f32 accumulation kept);
    it may need a looser tolerance than 1e-4 vs an f32 reference."""
    B, L = idx.shape
    V, C = table.shape
    Cp = _round_up(C, 128)                         # lane-dense channel dim

    # Pad the embedding table once, then gather -> rows are already lane-dense (no extra
    # pad pass over the (B, L, C) activations).
    # NOTE: jnp.take clamps out-of-range token ids (torch raises); padding_idx=0 semantics
    # rely on table row 0 being zero (torch enforces this at init).
    table_p = jnp.pad(table.astype(jnp.float32), ((0, 0), (0, Cp - C)))
    x = jnp.take(table_p, idx.astype(jnp.int32).reshape(-1), axis=0)       # (B*L, Cp)

    def prep_w(w, b):
        K = w.shape[0]
        wp = jnp.pad(w.astype(jnp.float32), ((0, 0), (0, Cp - C), (0, Cp - C)))
        bp = jnp.pad(b.astype(jnp.float32), (0, Cp - C)).reshape(1, Cp)
        return wp.reshape(K * Cp, Cp).astype(matmul_dtype), bp   # im2col weight, f32 bias

    w1p, b1p = prep_w(w1, b1)
    w2p, b2p = prep_w(w2, b2)
    w3p, b3p = prep_w(w3, b3)

    TB = _pick_tb(B, L, Cp)
    R = TB * L
    grid = (B // TB,)

    # TODO(synk): for very large Cp (>=512) the three resident im2col weights (~15*Cp^2*4 B)
    # should get an extra output-channel grid axis instead of staying fully resident
    # (v7x 64 MiB VMEM); not needed at these channel counts.

    def build(single_buffer_weights):
        wkw = {"pipeline_mode": pl.Buffered(1)} if single_buffer_weights else {}
        full = lambda a: pl.BlockSpec(a.shape, lambda i: (0, 0), **wkw)
        return pl.pallas_call(
            functools.partial(_target_repr_kernel, L=L),
            out_shape=jax.ShapeDtypeStruct((B * L, Cp), jnp.float32),
            grid=grid,
            in_specs=[
                pl.BlockSpec((R, Cp), lambda i: (i, 0)),        # activation rows this step
                full(w1p), full(b1p),
                full(w2p), full(b2p),
                full(w3p), full(b3p),
            ],
            out_specs=pl.BlockSpec((R, Cp), lambda i: (i, 0)),  # lane-dense writeback
            compiler_params=pltpu.CompilerParams(dimension_semantics=("parallel",)),
        )

    args = (x, w1p, b1p, w2p, b2p, w3p, b3p)
    try:
        out = build(single_buffer_weights=True)(*args)
    except Exception:
        # pipeline_mode=pl.Buffered(1) unsupported in this build -> default double-buffering
        out = build(single_buffer_weights=False)(*args)

    out = out.reshape(B, L, Cp)[:, :, :C]
    return out[0] if B == 1 else out


# ----------------------------- pure-JAX reference -----------------------------
def _reference(idx, table, w1, b1, w2, b2, w3, b3):
    emb = jnp.take(table, idx, axis=0)               # (B, L, C)
    x = jnp.transpose(emb, (0, 2, 1))                # (B, C, L)  -- NCL like PyTorch

    def conv(x_ncl, w_kio, b):
        K = w_kio.shape[0]
        P = (K - 1) // 2
        w_oik = jnp.transpose(w_kio, (2, 1, 0))      # (C_out, C_in, K) -- PyTorch layout
        y = lax.conv_general_dilated(
            x_ncl, w_oik, window_strides=(1,), padding=[(P, P)],
            dimension_numbers=("NCH", "OIH", "NCH"))
        return jax.nn.relu(y + b.reshape(1, -1, 1))

    x1 = conv(x, w1, b1)
    x2 = conv(x1, w2, b2)
    x3 = conv(x2, w3, b3)
    out = jnp.transpose(x1 + x2 + x3, (0, 2, 1))     # (B, L, C)
    return out[0] if out.shape[0] == 1 else out


if __name__ == "__main__":
    # small shapes: block_num is unused in forward; vocab_size=32, embedding_num=8 -> C=32
    B, L = 2, 8
    vocab_size = 32
    embedding_num = 8
    C = embedding_num * 4

    key = jax.random.PRNGKey(0)
    keys = jax.random.split(key, 8)

    idx = jax.random.randint(keys[0], (B, L), 0, vocab_size, dtype=jnp.int32)

    # deterministic parameter init (synthetic weights, not a checkpoint)
    table = 0.02 * jax.random.normal(keys[1], (vocab_size, C), dtype=jnp.float32)
    table = table.at[0].set(0.0)                     # padding_idx=0 -> zero embedding row

    def mk_conv(k, K):
        w = 0.05 * jax.random.normal(k, (K, C, C), dtype=jnp.float32)   # (K, C_in, C_out)
        b = 0.01 * jax.random.normal(jax.random.fold_in(k, 7), (C,), dtype=jnp.float32)
        return w, b

    w1, b1 = mk_conv(keys[2], 3)
    w2, b2 = mk_conv(keys[3], 5)
    w3, b3 = mk_conv(keys[4], 7)

    out = target_representation(idx, table, w1, b1, w2, b2, w3, b3)
    out = jax.block_until_ready(out)

    ref = _reference(idx, table, w1, b1, w2, b2, w3, b3)
    assert out.shape == ref.shape, (out.shape, ref.shape)
    assert jnp.allclose(out, ref, atol=1e-4, rtol=1e-4), float(jnp.max(jnp.abs(out - ref)))

    print("KERNEL_OK")
</pallas_src>

<mosaic_0001>
module attributes {stable_mosaic.version = 11 : i64} {
  func.func @_target_repr_kernel(%arg0: i32, %arg1: memref<8x128xf32, #tpu.memory_space<vmem>>, %arg2: memref<384x128xf32, #tpu.memory_space<vmem>>, %arg3: memref<1x128xf32, #tpu.memory_space<vmem>>, %arg4: memref<640x128xf32, #tpu.memory_space<vmem>>, %arg5: memref<1x128xf32, #tpu.memory_space<vmem>>, %arg6: memref<896x128xf32, #tpu.memory_space<vmem>>, %arg7: memref<1x128xf32, #tpu.memory_space<vmem>>, %arg8: memref<8x128xf32, #tpu.memory_space<vmem>>) attributes {dimension_semantics = [#tpu.dimension_semantics<parallel>], iteration_bounds = array<i64: 2>, scalar_prefetch = 0 : i64, scratch_operands = 0 : i64, tpu.core_type = #tpu.core_type<tc>, window_params = [{transform_indices = @transform_0, window_bounds = array<i64: 8, 128>}, {pipeline_mode = #tpu.pipeline_mode<synchronous>, transform_indices = @transform_1, window_bounds = array<i64: 384, 128>}, {pipeline_mode = #tpu.pipeline_mode<synchronous>, transform_indices = @transform_2, window_bounds = array<i64: 1, 128>}, {pipeline_mode = #tpu.pipeline_mode<synchronous>, transform_indices = @transform_3, window_bounds = array<i64: 640, 128>}, {pipeline_mode = #tpu.pipeline_mode<synchronous>, transform_indices = @transform_4, window_bounds = array<i64: 1, 128>}, {pipeline_mode = #tpu.pipeline_mode<synchronous>, transform_indices = @transform_5, window_bounds = array<i64: 896, 128>}, {pipeline_mode = #tpu.pipeline_mode<synchronous>, transform_indices = @transform_6, window_bounds = array<i64: 1, 128>}, {transform_indices = @transform_7, window_bounds = array<i64: 8, 128>}]} {
    %0 = tpu.iota {dimensions = array<i32: 0>} : vector<8x1xi32>
    %c8_i32 = arith.constant 8 : i32
    %c0_i32 = arith.constant 0 : i32
    %1 = arith.cmpi eq, %c8_i32, %c0_i32 : i32
    %c1_i32 = arith.constant 1 : i32
    %2 = arith.select %1, %c1_i32, %c8_i32 : i32
    %3 = vector.broadcast %2 : i32 to vector<8x1xi32>
    %4 = arith.remsi %0, %3 : vector<8x1xi32>
    %c0_i32_0 = arith.constant 0 : i32
    %5 = vector.broadcast %c0_i32_0 : i32 to vector<8x1xi32>
    %6 = arith.cmpi ne, %4, %5 : vector<8x1xi32>
    %c0_i32_1 = arith.constant 0 : i32
    %7 = vector.broadcast %c0_i32_1 : i32 to vector<8x1xi32>
    %8 = arith.cmpi slt, %4, %7 : vector<8x1xi32>
    %c0_i32_2 = arith.constant 0 : i32
    %9 = arith.cmpi slt, %2, %c0_i32_2 : i32
    %10 = vector.broadcast %9 : i1 to vector<8x1xi1>
    %11 = vector.broadcast %10 : vector<8x1xi1> to vector<8x1xi1>
    %12 = arith.xori %8, %11 : vector<8x1xi1>
    %13 = arith.andi %12, %6 : vector<8x1xi1>
    %14 = vector.broadcast %2 : i32 to vector<8x1xi32>
    %15 = arith.addi %4, %14 : vector<8x1xi32>
    %16 = arith.select %13, %15, %4 : vector<8x1xi1>, vector<8x1xi32>
    %c0 = arith.constant 0 : index
    %c0_3 = arith.constant 0 : index
    %17 = vector.load %arg1[%c0, %c0_3] : memref<8x128xf32, #tpu.memory_space<vmem>>, vector<8x128xf32>
    %c1_i32_4 = arith.constant 1 : i32
    %18 = tpu.dynamic_rotate %17 by %c1_i32_4 dim 0 : vector<8x128xf32>, i32 -> vector<8x128xf32>
    %c-1_i32 = arith.constant -1 : i32
    %19 = vector.broadcast %c-1_i32 : i32 to vector<8x1xi32>
    %20 = arith.addi %16, %19 : vector<8x1xi32>
    %c0_i32_5 = arith.constant 0 : i32
    %21 = vector.broadcast %c0_i32_5 : i32 to vector<8x1xi32>
    %22 = arith.cmpi sge, %20, %21 : vector<8x1xi32>
    %c-1_i32_6 = arith.constant -1 : i32
    %23 = vector.broadcast %c-1_i32_6 : i32 to vector<8x1xi32>
    %24 = arith.addi %16, %23 : vector<8x1xi32>
    %c8_i32_7 = arith.constant 8 : i32
    %25 = vector.broadcast %c8_i32_7 : i32 to vector<8x1xi32>
    %26 = arith.cmpi slt, %24, %25 : vector<8x1xi32>
    %27 = arith.andi %22, %26 : vector<8x1xi1>
    %cst = arith.constant 0.000000e+00 : f32
    %28 = vector.shape_cast %27 : vector<8x1xi1> to vector<8x1xi1>
    %29 = vector.broadcast %28 : vector<8x1xi1> to vector<8x128xi1>
    %30 = vector.broadcast %cst : f32 to vector<8x128xf32>
    %31 = arith.select %29, %18, %30 : vector<8x128xi1>, vector<8x128xf32>
    %c7_i32 = arith.constant 7 : i32
    %32 = tpu.dynamic_rotate %17 by %c7_i32 dim 0 : vector<8x128xf32>, i32 -> vector<8x128xf32>
    %c1_i32_8 = arith.constant 1 : i32
    %33 = vector.broadcast %c1_i32_8 : i32 to vector<8x1xi32>
    %34 = arith.addi %16, %33 : vector<8x1xi32>
    %c0_i32_9 = arith.constant 0 : i32
    %35 = vector.broadcast %c0_i32_9 : i32 to vector<8x1xi32>
    %36 = arith.cmpi sge, %34, %35 : vector<8x1xi32>
    %c1_i32_10 = arith.constant 1 : i32
    %37 = vector.broadcast %c1_i32_10 : i32 to vector<8x1xi32>
    %38 = arith.addi %16, %37 : vector<8x1xi32>
    %c8_i32_11 = arith.constant 8 : i32
    %39 = vector.broadcast %c8_i32_11 : i32 to vector<8x1xi32>
    %40 = arith.cmpi slt, %38, %39 : vector<8x1xi32>
    %41 = arith.andi %36, %40 : vector<8x1xi1>
    %cst_12 = arith.constant 0.000000e+00 : f32
    %42 = vector.shape_cast %41 : vector<8x1xi1> to vector<8x1xi1>
    %43 = vector.broadcast %42 : vector<8x1xi1> to vector<8x128xi1>
    %44 = vector.broadcast %cst_12 : f32 to vector<8x128xf32>
    %45 = arith.select %43, %32, %44 : vector<8x128xi1>, vector<8x128xf32>
    %46 = tpu.concatenate %31, %17, %45 in 1 : vector<8x128xf32>, vector<8x128xf32>, vector<8x128xf32> -> vector<8x384xf32>
    %c0_13 = arith.constant 0 : index
    %c0_14 = arith.constant 0 : index
    %47 = vector.load %arg2[%c0_13, %c0_14] : memref<384x128xf32, #tpu.memory_space<vmem>>, vector<384x128xf32>
    %cst_15 = arith.constant dense<0.000000e+00> : vector<8x128xf32>
    %48 = tpu.matmul %46, %47, %cst_15 {dimension_numbers = #tpu.dot_dimension_numbers<[1], [0], [0], [1], [0, 0, 1, 1], [], []>} : vector<8x384xf32>, vector<384x128xf32>, vector<8x128xf32> -> vector<8x128xf32>
    %c0_16 = arith.constant 0 : index
    %c0_17 = arith.constant 0 : index
    %49 = vector.load %arg3[%c0_16, %c0_17] : memref<1x128xf32, #tpu.memory_space<vmem>>, vector<1x128xf32>
    %50 = vector.broadcast %49 : vector<1x128xf32> to vector<8x128xf32>
    %51 = arith.addf %48, %50 : vector<8x128xf32>
    %cst_18 = arith.constant 0.000000e+00 : f32
    %52 = vector.broadcast %cst_18 : f32 to vector<8x128xf32>
    %53 = arith.maximumf %51, %52 : vector<8x128xf32>
    %c2_i32 = arith.constant 2 : i32
    %54 = tpu.dynamic_rotate %53 by %c2_i32 dim 0 : vector<8x128xf32>, i32 -> vector<8x128xf32>
    %c-2_i32 = arith.constant -2 : i32
    %55 = vector.broadcast %c-2_i32 : i32 to vector<8x1xi32>
    %56 = arith.addi %16, %55 : vector<8x1xi32>
    %c0_i32_19 = arith.constant 0 : i32
    %57 = vector.broadcast %c0_i32_19 : i32 to vector<8x1xi32>
    %58 = arith.cmpi sge, %56, %57 : vector<8x1xi32>
    %c-2_i32_20 = arith.constant -2 : i32
    %59 = vector.broadcast %c-2_i32_20 : i32 to vector<8x1xi32>
    %60 = arith.addi %16, %59 : vector<8x1xi32>
    %c8_i32_21 = arith.constant 8 : i32
    %61 = vector.broadcast %c8_i32_21 : i32 to vector<8x1xi32>
    %62 = arith.cmpi slt, %60, %61 : vector<8x1xi32>
    %63 = arith.andi %58, %62 : vector<8x1xi1>
    %cst_22 = arith.constant 0.000000e+00 : f32
    %64 = vector.shape_cast %63 : vector<8x1xi1> to vector<8x1xi1>
    %65 = vector.broadcast %64 : vector<8x1xi1> to vector<8x128xi1>
    %66 = vector.broadcast %cst_22 : f32 to vector<8x128xf32>
    %67 = arith.select %65, %54, %66 : vector<8x128xi1>, vector<8x128xf32>
    %c1_i32_23 = arith.constant 1 : i32
    %68 = tpu.dynamic_rotate %53 by %c1_i32_23 dim 0 : vector<8x128xf32>, i32 -> vector<8x128xf32>
    %c-1_i32_24 = arith.constant -1 : i32
    %69 = vector.broadcast %c-1_i32_24 : i32 to vector<8x1xi32>
    %70 = arith.addi %16, %69 : vector<8x1xi32>
    %c0_i32_25 = arith.constant 0 : i32
    %71 = vector.broadcast %c0_i32_25 : i32 to vector<8x1xi32>
    %72 = arith.cmpi sge, %70, %71 : vector<8x1xi32>
    %c-1_i32_26 = arith.constant -1 : i32
    %73 = vector.broadcast %c-1_i32_26 : i32 to vector<8x1xi32>
    %74 = arith.addi %16, %73 : vector<8x1xi32>
    %c8_i32_27 = arith.constant 8 : i32
    %75 = vector.broadcast %c8_i32_27 : i32 to vector<8x1xi32>
    %76 = arith.cmpi slt, %74, %75 : vector<8x1xi32>
    %77 = arith.andi %72, %76 : vector<8x1xi1>
    %cst_28 = arith.constant 0.000000e+00 : f32
    %78 = vector.shape_cast %77 : vector<8x1xi1> to vector<8x1xi1>
    %79 = vector.broadcast %78 : vector<8x1xi1> to vector<8x128xi1>
    %80 = vector.broadcast %cst_28 : f32 to vector<8x128xf32>
    %81 = arith.select %79, %68, %80 : vector<8x128xi1>, vector<8x128xf32>
    %c7_i32_29 = arith.constant 7 : i32
    %82 = tpu.dynamic_rotate %53 by %c7_i32_29 dim 0 : vector<8x128xf32>, i32 -> vector<8x128xf32>
    %c1_i32_30 = arith.constant 1 : i32
    %83 = vector.broadcast %c1_i32_30 : i32 to vector<8x1xi32>
    %84 = arith.addi %16, %83 : vector<8x1xi32>
    %c0_i32_31 = arith.constant 0 : i32
    %85 = vector.broadcast %c0_i32_31 : i32 to vector<8x1xi32>
    %86 = arith.cmpi sge, %84, %85 : vector<8x1xi32>
    %c1_i32_32 = arith.constant 1 : i32
    %87 = vector.broadcast %c1_i32_32 : i32 to vector<8x1xi32>
    %88 = arith.addi %16, %87 : vector<8x1xi32>
    %c8_i32_33 = arith.constant 8 : i32
    %89 = vector.broadcast %c8_i32_33 : i32 to vector<8x1xi32>
    %90 = arith.cmpi slt, %88, %89 : vector<8x1xi32>
    %91 = arith.andi %86, %90 : vector<8x1xi1>
    %cst_34 = arith.constant 0.000000e+00 : f32
    %92 = vector.shape_cast %91 : vector<8x1xi1> to vector<8x1xi1>
    %93 = vector.broadcast %92 : vector<8x1xi1> to vector<8x128xi1>
    %94 = vector.broadcast %cst_34 : f32 to vector<8x128xf32>
    %95 = arith.select %93, %82, %94 : vector<8x128xi1>, vector<8x128xf32>
    %c6_i32 = arith.constant 6 : i32
    %96 = tpu.dynamic_rotate %53 by %c6_i32 dim 0 : vector<8x128xf32>, i32 -> vector<8x128xf32>
    %c2_i32_35 = arith.constant 2 : i32
    %97 = vector.broadcast %c2_i32_35 : i32 to vector<8x1xi32>
    %98 = arith.addi %16, %97 : vector<8x1xi32>
    %c0_i32_36 = arith.constant 0 : i32
    %99 = vector.broadcast %c0_i32_36 : i32 to vector<8x1xi32>
    %100 = arith.cmpi sge, %98, %99 : vector<8x1xi32>
    %c2_i32_37 = arith.constant 2 : i32
    %101 = vector.broadcast %c2_i32_37 : i32 to vector<8x1xi32>
    %102 = arith.addi %16, %101 : vector<8x1xi32>
    %c8_i32_38 = arith.constant 8 : i32
    %103 = vector.broadcast %c8_i32_38 : i32 to vector<8x1xi32>
    %104 = arith.cmpi slt, %102, %103 : vector<8x1xi32>
    %105 = arith.andi %100, %104 : vector<8x1xi1>
    %cst_39 = arith.constant 0.000000e+00 : f32
    %106 = vector.shape_cast %105 : vector<8x1xi1> to vector<8x1xi1>
    %107 = vector.broadcast %106 : vector<8x1xi1> to vector<8x128xi1>
    %108 = vector.broadcast %cst_39 : f32 to vector<8x128xf32>
    %109 = arith.select %107, %96, %108 : vector<8x128xi1>, vector<8x128xf32>
    %110 = tpu.concatenate %67, %81, %53, %95, %109 in 1 : vector<8x128xf32>, vector<8x128xf32>, vector<8x128xf32>, vector<8x128xf32>, vector<8x128xf32> -> vector<8x640xf32>
    %c0_40 = arith.constant 0 : index
    %c0_41 = arith.constant 0 : index
    %111 = vector.load %arg4[%c0_40, %c0_41] : memref<640x128xf32, #tpu.memory_space<vmem>>, vector<640x128xf32>
    %cst_42 = arith.constant dense<0.000000e+00> : vector<8x128xf32>
    %112 = tpu.matmul %110, %111, %cst_42 {dimension_numbers = #tpu.dot_dimension_numbers<[1], [0], [0], [1], [0, 0, 1, 1], [], []>} : vector<8x640xf32>, vector<640x128xf32>, vector<8x128xf32> -> vector<8x128xf32>
    %c0_43 = arith.constant 0 : index
    %c0_44 = arith.constant 0 : index
    %113 = vector.load %arg5[%c0_43, %c0_44] : memref<1x128xf32, #tpu.memory_space<vmem>>, vector<1x128xf32>
    %114 = vector.broadcast %113 : vector<1x128xf32> to vector<8x128xf32>
    %115 = arith.addf %112, %114 : vector<8x128xf32>
    %cst_45 = arith.constant 0.000000e+00 : f32
    %116 = vector.broadcast %cst_45 : f32 to vector<8x128xf32>
    %117 = arith.maximumf %115, %116 : vector<8x128xf32>
    %118 = arith.addf %53, %117 : vector<8x128xf32>
    %c3_i32 = arith.constant 3 : i32
    %119 = tpu.dynamic_rotate %117 by %c3_i32 dim 0 : vector<8x128xf32>, i32 -> vector<8x128xf32>
    %c-3_i32 = arith.constant -3 : i32
    %120 = vector.broadcast %c-3_i32 : i32 to vector<8x1xi32>
    %121 = arith.addi %16, %120 : vector<8x1xi32>
    %c0_i32_46 = arith.constant 0 : i32
    %122 = vector.broadcast %c0_i32_46 : i32 to vector<8x1xi32>
    %123 = arith.cmpi sge, %121, %122 : vector<8x1xi32>
    %c-3_i32_47 = arith.constant -3 : i32
    %124 = vector.broadcast %c-3_i32_47 : i32 to vector<8x1xi32>
    %125 = arith.addi %16, %124 : vector<8x1xi32>
    %c8_i32_48 = arith.constant 8 : i32
    %126 = vector.broadcast %c8_i32_48 : i32 to vector<8x1xi32>
    %127 = arith.cmpi slt, %125, %126 : vector<8x1xi32>
    %128 = arith.andi %123, %127 : vector<8x1xi1>
    %cst_49 = arith.constant 0.000000e+00 : f32
    %129 = vector.shape_cast %128 : vector<8x1xi1> to vector<8x1xi1>
    %130 = vector.broadcast %129 : vector<8x1xi1> to vector<8x128xi1>
    %131 = vector.broadcast %cst_49 : f32 to vector<8x128xf32>
    %132 = arith.select %130, %119, %131 : vector<8x128xi1>, vector<8x128xf32>
    %c2_i32_50 = arith.constant 2 : i32
    %133 = tpu.dynamic_rotate %117 by %c2_i32_50 dim 0 : vector<8x128xf32>, i32 -> vector<8x128xf32>
    %c-2_i32_51 = arith.constant -2 : i32
    %134 = vector.broadcast %c-2_i32_51 : i32 to vector<8x1xi32>
    %135 = arith.addi %16, %134 : vector<8x1xi32>
    %c0_i32_52 = arith.constant 0 : i32
    %136 = vector.broadcast %c0_i32_52 : i32 to vector<8x1xi32>
    %137 = arith.cmpi sge, %135, %136 : vector<8x1xi32>
    %c-2_i32_53 = arith.constant -2 : i32
    %138 = vector.broadcast %c-2_i32_53 : i32 to vector<8x1xi32>
    %139 = arith.addi %16, %138 : vector<8x1xi32>
    %c8_i32_54 = arith.constant 8 : i32
    %140 = vector.broadcast %c8_i32_54 : i32 to vector<8x1xi32>
    %141 = arith.cmpi slt, %139, %140 : vector<8x1xi32>
    %142 = arith.andi %137, %141 : vector<8x1xi1>
    %cst_55 = arith.constant 0.000000e+00 : f32
    %143 = vector.shape_cast %142 : vector<8x1xi1> to vector<8x1xi1>
    %144 = vector.broadcast %143 : vector<8x1xi1> to vector<8x128xi1>
    %145 = vector.broadcast %cst_55 : f32 to vector<8x128xf32>
    %146 = arith.select %144, %133, %145 : vector<8x128xi1>, vector<8x128xf32>
    %c1_i32_56 = arith.constant 1 : i32
    %147 = tpu.dynamic_rotate %117 by %c1_i32_56 dim 0 : vector<8x128xf32>, i32 -> vector<8x128xf32>
    %c-1_i32_57 = arith.constant -1 : i32
    %148 = vector.broadcast %c-1_i32_57 : i32 to vector<8x1xi32>
    %149 = arith.addi %16, %148 : vector<8x1xi32>
    %c0_i32_58 = arith.constant 0 : i32
    %150 = vector.broadcast %c0_i32_58 : i32 to vector<8x1xi32>
    %151 = arith.cmpi sge, %149, %150 : vector<8x1xi32>
    %c-1_i32_59 = arith.constant -1 : i32
    %152 = vector.broadcast %c-1_i32_59 : i32 to vector<8x1xi32>
    %153 = arith.addi %16, %152 : vector<8x1xi32>
    %c8_i32_60 = arith.constant 8 : i32
    %154 = vector.broadcast %c8_i32_60 : i32 to vector<8x1xi32>
    %155 = arith.cmpi slt, %153, %154 : vector<8x1xi32>
    %156 = arith.andi %151, %155 : vector<8x1xi1>
    %cst_61 = arith.constant 0.000000e+00 : f32
    %157 = vector.shape_cast %156 : vector<8x1xi1> to vector<8x1xi1>
    %158 = vector.broadcast %157 : vector<8x1xi1> to vector<8x128xi1>
    %159 = vector.broadcast %cst_61 : f32 to vector<8x128xf32>
    %160 = arith.select %158, %147, %159 : vector<8x128xi1>, vector<8x128xf32>
    %c7_i32_62 = arith.constant 7 : i32
    %161 = tpu.dynamic_rotate %117 by %c7_i32_62 dim 0 : vector<8x128xf32>, i32 -> vector<8x128xf32>
    %c1_i32_63 = arith.constant 1 : i32
    %162 = vector.broadcast %c1_i32_63 : i32 to vector<8x1xi32>
    %163 = arith.addi %16, %162 : vector<8x1xi32>
    %c0_i32_64 = arith.constant 0 : i32
    %164 = vector.broadcast %c0_i32_64 : i32 to vector<8x1xi32>
    %165 = arith.cmpi sge, %163, %164 : vector<8x1xi32>
    %c1_i32_65 = arith.constant 1 : i32
    %166 = vector.broadcast %c1_i32_65 : i32 to vector<8x1xi32>
    %167 = arith.addi %16, %166 : vector<8x1xi32>
    %c8_i32_66 = arith.constant 8 : i32
    %168 = vector.broadcast %c8_i32_66 : i32 to vector<8x1xi32>
    %169 = arith.cmpi slt, %167, %168 : vector<8x1xi32>
    %170 = arith.andi %165, %169 : vector<8x1xi1>
    %cst_67 = arith.constant 0.000000e+00 : f32
    %171 = vector.shape_cast %170 : vector<8x1xi1> to vector<8x1xi1>
    %172 = vector.broadcast %171 : vector<8x1xi1> to vector<8x128xi1>
    %173 = vector.broadcast %cst_67 : f32 to vector<8x128xf32>
    %174 = arith.select %172, %161, %173 : vector<8x128xi1>, vector<8x128xf32>
    %c6_i32_68 = arith.constant 6 : i32
    %175 = tpu.dynamic_rotate %117 by %c6_i32_68 dim 0 : vector<8x128xf32>, i32 -> vector<8x128xf32>
    %c2_i32_69 = arith.constant 2 : i32
    %176 = vector.broadcast %c2_i32_69 : i32 to vector<8x1xi32>
    %177 = arith.addi %16, %176 : vector<8x1xi32>
    %c0_i32_70 = arith.constant 0 : i32
    %178 = vector.broadcast %c0_i32_70 : i32 to vector<8x1xi32>
    %179 = arith.cmpi sge, %177, %178 : vector<8x1xi32>
    %c2_i32_71 = arith.constant 2 : i32
    %180 = vector.broadcast %c2_i32_71 : i32 to vector<8x1xi32>
    %181 = arith.addi %16, %180 : vector<8x1xi32>
    %c8_i32_72 = arith.constant 8 : i32
    %182 = vector.broadcast %c8_i32_72 : i32 to vector<8x1xi32>
    %183 = arith.cmpi slt, %181, %182 : vector<8x1xi32>
    %184 = arith.andi %179, %183 : vector<8x1xi1>
    %cst_73 = arith.constant 0.000000e+00 : f32
    %185 = vector.shape_cast %184 : vector<8x1xi1> to vector<8x1xi1>
    %186 = vector.broadcast %185 : vector<8x1xi1> to vector<8x128xi1>
    %187 = vector.broadcast %cst_73 : f32 to vector<8x128xf32>
    %188 = arith.select %186, %175, %187 : vector<8x128xi1>, vector<8x128xf32>
    %c5_i32 = arith.constant 5 : i32
    %189 = tpu.dynamic_rotate %117 by %c5_i32 dim 0 : vector<8x128xf32>, i32 -> vector<8x128xf32>
    %c3_i32_74 = arith.constant 3 : i32
    %190 = vector.broadcast %c3_i32_74 : i32 to vector<8x1xi32>
    %191 = arith.addi %16, %190 : vector<8x1xi32>
    %c0_i32_75 = arith.constant 0 : i32
    %192 = vector.broadcast %c0_i32_75 : i32 to vector<8x1xi32>
    %193 = arith.cmpi sge, %191, %192 : vector<8x1xi32>
    %c3_i32_76 = arith.constant 3 : i32
    %194 = vector.broadcast %c3_i32_76 : i32 to vector<8x1xi32>
    %195 = arith.addi %16, %194 : vector<8x1xi32>
    %c8_i32_77 = arith.constant 8 : i32
    %196 = vector.broadcast %c8_i32_77 : i32 to vector<8x1xi32>
    %197 = arith.cmpi slt, %195, %196 : vector<8x1xi32>
    %198 = arith.andi %193, %197 : vector<8x1xi1>
    %cst_78 = arith.constant 0.000000e+00 : f32
    %199 = vector.shape_cast %198 : vector<8x1xi1> to vector<8x1xi1>
    %200 = vector.broadcast %199 : vector<8x1xi1> to vector<8x128xi1>
    %201 = vector.broadcast %cst_78 : f32 to vector<8x128xf32>
    %202 = arith.select %200, %189, %201 : vector<8x128xi1>, vector<8x128xf32>
    %203 = tpu.concatenate %132, %146, %160, %117, %174, %188, %202 in 1 : vector<8x128xf32>, vector<8x128xf32>, vector<8x128xf32>, vector<8x128xf32>, vector<8x128xf32>, vector<8x128xf32>, vector<8x128xf32> -> vector<8x896xf32>
    %c0_79 = arith.constant 0 : index
    %c0_80 = arith.constant 0 : index
    %204 = vector.load %arg6[%c0_79, %c0_80] : memref<896x128xf32, #tpu.memory_space<vmem>>, vector<896x128xf32>
    %cst_81 = arith.constant dense<0.000000e+00> : vector<8x128xf32>
    %205 = tpu.matmul %203, %204, %cst_81 {dimension_numbers = #tpu.dot_dimension_numbers<[1], [0], [0], [1], [0, 0, 1, 1], [], []>} : vector<8x896xf32>, vector<896x128xf32>, vector<8x128xf32> -> vector<8x128xf32>
    %c0_82 = arith.constant 0 : index
    %c0_83 = arith.constant 0 : index
    %206 = vector.load %arg7[%c0_82, %c0_83] : memref<1x128xf32, #tpu.memory_space<vmem>>, vector<1x128xf32>
    %207 = vector.broadcast %206 : vector<1x128xf32> to vector<8x128xf32>
    %208 = arith.addf %205, %207 : vector<8x128xf32>
    %cst_84 = arith.constant 0.000000e+00 : f32
    %209 = vector.broadcast %cst_84 : f32 to vector<8x128xf32>
    %210 = arith.maximumf %208, %209 : vector<8x128xf32>
    %211 = arith.addf %118, %210 : vector<8x128xf32>
    %c0_85 = arith.constant 0 : index
    %c0_86 = arith.constant 0 : index
    %212 = vector.load %arg8[%c0_85, %c0_86] : memref<8x128xf32, #tpu.memory_space<vmem>>, vector<8x128xf32>
    tpu.vector_store %arg8[%c0_85, %c0_86], %211 {strides = array<i32>} : memref<8x128xf32, #tpu.memory_space<vmem>>, vector<8x128xf32>,
    return
  }
  func.func @transform_0(%arg0: i32) -> (i32, i32) {
    %c0_i32 = arith.constant 0 : i32
    %c0_i32_0 = arith.constant 0 : i32
    return %arg0, %c0_i32 : i32, i32
  }
  func.func @transform_1(%arg0: i32) -> (i32, i32) {
    %c0_i32 = arith.constant 0 : i32
    %c0_i32_0 = arith.constant 0 : i32
    %c0_i32_1 = arith.constant 0 : i32
    return %c0_i32, %c0_i32_0 : i32, i32
  }
  func.func @transform_2(%arg0: i32) -> (i32, i32) {
    %c0_i32 = arith.constant 0 : i32
    %c0_i32_0 = arith.constant 0 : i32
    %c0_i32_1 = arith.constant 0 : i32
    return %c0_i32, %c0_i32_0 : i32, i32
  }
  func.func @transform_3(%arg0: i32) -> (i32, i32) {
    %c0_i32 = arith.constant 0 : i32
    %c0_i32_0 = arith.constant 0 : i32
    %c0_i32_1 = arith.constant 0 : i32
    return %c0_i32, %c0_i32_0 : i32, i32
  }
  func.func @transform_4(%arg0: i32) -> (i32, i32) {
    %c0_i32 = arith.constant 0 : i32
    %c0_i32_0 = arith.constant 0 : i32
    %c0_i32_1 = arith.constant 0 : i32
    return %c0_i32, %c0_i32_0 : i32, i32
  }
  func.func @transform_5(%arg0: i32) -> (i32, i32) {
    %c0_i32 = arith.constant 0 : i32
    %c0_i32_0 = arith.constant 0 : i32
    %c0_i32_1 = arith.constant 0 : i32
    return %c0_i32, %c0_i32_0 : i32, i32
  }
  func.func @transform_6(%arg0: i32) -> (i32, i32) {
    %c0_i32 = arith.constant 0 : i32
    %c0_i32_0 = arith.constant 0 : i32
    %c0_i32_1 = arith.constant 0 : i32
    return %c0_i32, %c0_i32_0 : i32, i32
  }
  func.func @transform_7(%arg0: i32) -> (i32, i32) {
    %c0_i32 = arith.constant 0 : i32
    %c0_i32_0 = arith.constant 0 : i32
    return %arg0, %c0_i32 : i32, i32
  }
}

module attributes {stable_mosaic.version = 11 : i64} {
  func.func @_target_repr_kernel(%arg0: i32, %arg1: memref<8x128xf32, #tpu.memory_space<vmem>>, %arg2: memref<384x128xf32, #tpu.memory_space<vmem>>, %arg3: memref<1x128xf32, #tpu.memory_space<vmem>>, %arg4: memref<640x128xf32, #tpu.memory_space<vmem>>, %arg5: memref<1x128xf32, #tpu.memory_space<vmem>>, %arg6: memref<896x128xf32, #tpu.memory_space<vmem>>, %arg7: memref<1x128xf32, #tpu.memory_space<vmem>>, %arg8: memref<8x128xf32, #tpu.memory_space<vmem>>) attributes {dimension_semantics = [#tpu.dimension_semantics<parallel>], iteration_bounds = array<i64: 2>, scalar_prefetch = 0 : i64, scratch_operands = 0 : i64, tpu.core_type = #tpu.core_type<tc>, window_params = [{transform_indices = @transform_0, window_bounds = array<i64: 8, 128>}, {pipeline_mode = #tpu.pipeline_mode<synchronous>, transform_indices = @transform_1, window_bounds = array<i64: 384, 128>}, {pipeline_mode = #tpu.pipeline_mode<synchronous>, transform_indices = @transform_2, window_bounds = array<i64: 1, 128>}, {pipeline_mode = #tpu.pipeline_mode<synchronous>, transform_indices = @transform_3, window_bounds = array<i64: 640, 128>}, {pipeline_mode = #tpu.pipeline_mode<synchronous>, transform_indices = @transform_4, window_bounds = array<i64: 1, 128>}, {pipeline_mode = #tpu.pipeline_mode<synchronous>, transform_indices = @transform_5, window_bounds = array<i64: 896, 128>}, {pipeline_mode = #tpu.pipeline_mode<synchronous>, transform_indices = @transform_6, window_bounds = array<i64: 1, 128>}, {transform_indices = @transform_7, window_bounds = array<i64: 8, 128>}]} {
    %0 = tpu.iota {dimensions = array<i32: 0>} : vector<8x1xi32>
    %c8_i32 = arith.constant 8 : i32
    %c0_i32 = arith.constant 0 : i32
    %1 = arith.cmpi eq, %c8_i32, %c0_i32 : i32
    %c1_i32 = arith.constant 1 : i32
    %2 = arith.select %1, %c1_i32, %c8_i32 : i32
    %3 = vector.broadcast %2 : i32 to vector<8x1xi32>
    %4 = arith.remsi %0, %3 : vector<8x1xi32>
    %c0_i32_0 = arith.constant 0 : i32
    %5 = vector.broadcast %c0_i32_0 : i32 to vector<8x1xi32>
    %6 = arith.cmpi ne, %4, %5 : vector<8x1xi32>
    %c0_i32_1 = arith.constant 0 : i32
    %7 = vector.broadcast %c0_i32_1 : i32 to vector<8x1xi32>
    %8 = arith.cmpi slt, %4, %7 : vector<8x1xi32>
    %c0_i32_2 = arith.constant 0 : i32
    %9 = arith.cmpi slt, %2, %c0_i32_2 : i32
    %10 = vector.broadcast %9 : i1 to vector<8x1xi1>
    %11 = vector.broadcast %10 : vector<8x1xi1> to vector<8x1xi1>
    %12 = arith.xori %8, %11 : vector<8x1xi1>
    %13 = arith.andi %12, %6 : vector<8x1xi1>
    %14 = vector.broadcast %2 : i32 to vector<8x1xi32>
    %15 = arith.addi %4, %14 : vector<8x1xi32>
    %16 = arith.select %13, %15, %4 : vector<8x1xi1>, vector<8x1xi32>
    %c0 = arith.constant 0 : index
    %c0_3 = arith.constant 0 : index
    %17 = vector.load %arg1[%c0, %c0_3] : memref<8x128xf32, #tpu.memory_space<vmem>>, vector<8x128xf32>
    %c1_i32_4 = arith.constant 1 : i32
    %18 = tpu.dynamic_rotate %17 by %c1_i32_4 dim 0 : vector<8x128xf32>, i32 -> vector<8x128xf32>
    %c-1_i32 = arith.constant -1 : i32
    %19 = vector.broadcast %c-1_i32 : i32 to vector<8x1xi32>
    %20 = arith.addi %16, %19 : vector<8x1xi32>
    %c0_i32_5 = arith.constant 0 : i32
    %21 = vector.broadcast %c0_i32_5 : i32 to vector<8x1xi32>
    %22 = arith.cmpi sge, %20, %21 : vector<8x1xi32>
    %c-1_i32_6 = arith.constant -1 : i32
    %23 = vector.broadcast %c-1_i32_6 : i32 to vector<8x1xi32>
    %24 = arith.addi %16, %23 : vector<8x1xi32>
    %c8_i32_7 = arith.constant 8 : i32
    %25 = vector.broadcast %c8_i32_7 : i32 to vector<8x1xi32>
    %26 = arith.cmpi slt, %24, %25 : vector<8x1xi32>
    %27 = arith.andi %22, %26 : vector<8x1xi1>
    %cst = arith.constant 0.000000e+00 : f32
    %28 = vector.shape_cast %27 : vector<8x1xi1> to vector<8x1xi1>
    %29 = vector.broadcast %28 : vector<8x1xi1> to vector<8x128xi1>
    %30 = vector.broadcast %cst : f32 to vector<8x128xf32>
    %31 = arith.select %29, %18, %30 : vector<8x128xi1>, vector<8x128xf32>
    %c7_i32 = arith.constant 7 : i32
    %32 = tpu.dynamic_rotate %17 by %c7_i32 dim 0 : vector<8x128xf32>, i32 -> vector<8x128xf32>
    %c1_i32_8 = arith.constant 1 : i32
    %33 = vector.broadcast %c1_i32_8 : i32 to vector<8x1xi32>
    %34 = arith.addi %16, %33 : vector<8x1xi32>
    %c0_i32_9 = arith.constant 0 : i32
    %35 = vector.broadcast %c0_i32_9 : i32 to vector<8x1xi32>
    %36 = arith.cmpi sge, %34, %35 : vector<8x1xi32>
    %c1_i32_10 = arith.constant 1 : i32
    %37 = vector.broadcast %c1_i32_10 : i32 to vector<8x1xi32>
    %38 = arith.addi %16, %37 : vector<8x1xi32>
    %c8_i32_11 = arith.constant 8 : i32
    %39 = vector.broadcast %c8_i32_11 : i32 to vector<8x1xi32>
    %40 = arith.cmpi slt, %38, %39 : vector<8x1xi32>
    %41 = arith.andi %36, %40 : vector<8x1xi1>
    %cst_12 = arith.constant 0.000000e+00 : f32
    %42 = vector.shape_cast %41 : vector<8x1xi1> to vector<8x1xi1>
    %43 = vector.broadcast %42 : vector<8x1xi1> to vector<8x128xi1>
    %44 = vector.broadcast %cst_12 : f32 to vector<8x128xf32>
    %45 = arith.select %43, %32, %44 : vector<8x128xi1>, vector<8x128xf32>
    %46 = tpu.concatenate %31, %17, %45 in 1 : vector<8x128xf32>, vector<8x128xf32>, vector<8x128xf32> -> vector<8x384xf32>
    %c0_13 = arith.constant 0 : index
    %c0_14 = arith.constant 0 : index
    %47 = vector.load %arg2[%c0_13, %c0_14] : memref<384x128xf32, #tpu.memory_space<vmem>>, vector<384x128xf32>
    %cst_15 = arith.constant dense<0.000000e+00> : vector<8x128xf32>
    %48 = tpu.matmul %46, %47, %cst_15 {dimension_numbers = #tpu.dot_dimension_numbers<[1], [0], [0], [1], [0, 0, 1, 1], [], []>} : vector<8x384xf32>, vector<384x128xf32>, vector<8x128xf32> -> vector<8x128xf32>
    %c0_16 = arith.constant 0 : index
    %c0_17 = arith.constant 0 : index
    %49 = vector.load %arg3[%c0_16, %c0_17] : memref<1x128xf32, #tpu.memory_space<vmem>>, vector<1x128xf32>
    %50 = vector.broadcast %49 : vector<1x128xf32> to vector<8x128xf32>
    %51 = arith.addf %48, %50 : vector<8x128xf32>
    %cst_18 = arith.constant 0.000000e+00 : f32
    %52 = vector.broadcast %cst_18 : f32 to vector<8x128xf32>
    %53 = arith.maximumf %51, %52 : vector<8x128xf32>
    %c2_i32 = arith.constant 2 : i32
    %54 = tpu.dynamic_rotate %53 by %c2_i32 dim 0 : vector<8x128xf32>, i32 -> vector<8x128xf32>
    %c-2_i32 = arith.constant -2 : i32
    %55 = vector.broadcast %c-2_i32 : i32 to vector<8x1xi32>
    %56 = arith.addi %16, %55 : vector<8x1xi32>
    %c0_i32_19 = arith.constant 0 : i32
    %57 = vector.broadcast %c0_i32_19 : i32 to vector<8x1xi32>
    %58 = arith.cmpi sge, %56, %57 : vector<8x1xi32>
    %c-2_i32_20 = arith.constant -2 : i32
    %59 = vector.broadcast %c-2_i32_20 : i32 to vector<8x1xi32>
    %60 = arith.addi %16, %59 : vector<8x1xi32>
    %c8_i32_21 = arith.constant 8 : i32
    %61 = vector.broadcast %c8_i32_21 : i32 to vector<8x1xi32>
    %62 = arith.cmpi slt, %60, %61 : vector<8x1xi32>
    %63 = arith.andi %58, %62 : vector<8x1xi1>
    %cst_22 = arith.constant 0.000000e+00 : f32
    %64 = vector.shape_cast %63 : vector<8x1xi1> to vector<8x1xi1>
    %65 = vector.broadcast %64 : vector<8x1xi1> to vector<8x128xi1>
    %66 = vector.broadcast %cst_22 : f32 to vector<8x128xf32>
    %67 = arith.select %65, %54, %66 : vector<8x128xi1>, vector<8x128xf32>
    %c1_i32_23 = arith.constant 1 : i32
    %68 = tpu.dynamic_rotate %53 by %c1_i32_23 dim 0 : vector<8x128xf32>, i32 -> vector<8x128xf32>
    %c-1_i32_24 = arith.constant -1 : i32
    %69 = vector.broadcast %c-1_i32_24 : i32 to vector<8x1xi32>
    %70 = arith.addi %16, %69 : vector<8x1xi32>
    %c0_i32_25 = arith.constant 0 : i32
    %71 = vector.broadcast %c0_i32_25 : i32 to vector<8x1xi32>
    %72 = arith.cmpi sge, %70, %71 : vector<8x1xi32>
    %c-1_i32_26 = arith.constant -1 : i32
    %73 = vector.broadcast %c-1_i32_26 : i32 to vector<8x1xi32>
    %74 = arith.addi %16, %73 : vector<8x1xi32>
    %c8_i32_27 = arith.constant 8 : i32
    %75 = vector.broadcast %c8_i32_27 : i32 to vector<8x1xi32>
    %76 = arith.cmpi slt, %74, %75 : vector<8x1xi32>
    %77 = arith.andi %72, %76 : vector<8x1xi1>
    %cst_28 = arith.constant 0.000000e+00 : f32
    %78 = vector.shape_cast %77 : vector<8x1xi1> to vector<8x1xi1>
    %79 = vector.broadcast %78 : vector<8x1xi1> to vector<8x128xi1>
    %80 = vector.broadcast %cst_28 : f32 to vector<8x128xf32>
    %81 = arith.select %79, %68, %80 : vector<8x128xi1>, vector<8x128xf32>
    %c7_i32_29 = arith.constant 7 : i32
    %82 = tpu.dynamic_rotate %53 by %c7_i32_29 dim 0 : vector<8x128xf32>, i32 -> vector<8x128xf32>
    %c1_i32_30 = arith.constant 1 : i32
    %83 = vector.broadcast %c1_i32_30 : i32 to vector<8x1xi32>
    %84 = arith.addi %16, %83 : vector<8x1xi32>
    %c0_i32_31 = arith.constant 0 : i32
    %85 = vector.broadcast %c0_i32_31 : i32 to vector<8x1xi32>
    %86 = arith.cmpi sge, %84, %85 : vector<8x1xi32>
    %c1_i32_32 = arith.constant 1 : i32
    %87 = vector.broadcast %c1_i32_32 : i32 to vector<8x1xi32>
    %88 = arith.addi %16, %87 : vector<8x1xi32>
    %c8_i32_33 = arith.constant 8 : i32
    %89 = vector.broadcast %c8_i32_33 : i32 to vector<8x1xi32>
    %90 = arith.cmpi slt, %88, %89 : vector<8x1xi32>
    %91 = arith.andi %86, %90 : vector<8x1xi1>
    %cst_34 = arith.constant 0.000000e+00 : f32
    %92 = vector.shape_cast %91 : vector<8x1xi1> to vector<8x1xi1>
    %93 = vector.broadcast %92 : vector<8x1xi1> to vector<8x128xi1>
    %94 = vector.broadcast %cst_34 : f32 to vector<8x128xf32>
    %95 = arith.select %93, %82, %94 : vector<8x128xi1>, vector<8x128xf32>
    %c6_i32 = arith.constant 6 : i32
    %96 = tpu.dynamic_rotate %53 by %c6_i32 dim 0 : vector<8x128xf32>, i32 -> vector<8x128xf32>
    %c2_i32_35 = arith.constant 2 : i32
    %97 = vector.broadcast %c2_i32_35 : i32 to vector<8x1xi32>
    %98 = arith.addi %16, %97 : vector<8x1xi32>
    %c0_i32_36 = arith.constant 0 : i32
    %99 = vector.broadcast %c0_i32_36 : i32 to vector<8x1xi32>
    %100 = arith.cmpi sge, %98, %99 : vector<8x1xi32>
    %c2_i32_37 = arith.constant 2 : i32
    %101 = vector.broadcast %c2_i32_37 : i32 to vector<8x1xi32>
    %102 = arith.addi %16, %101 : vector<8x1xi32>
    %c8_i32_38 = arith.constant 8 : i32
    %103 = vector.broadcast %c8_i32_38 : i32 to vector<8x1xi32>
    %104 = arith.cmpi slt, %102, %103 : vector<8x1xi32>
    %105 = arith.andi %100, %104 : vector<8x1xi1>
    %cst_39 = arith.constant 0.000000e+00 : f32
    %106 = vector.shape_cast %105 : vector<8x1xi1> to vector<8x1xi1>
    %107 = vector.broadcast %106 : vector<8x1xi1> to vector<8x128xi1>
    %108 = vector.broadcast %cst_39 : f32 to vector<8x128xf32>
    %109 = arith.select %107, %96, %108 : vector<8x128xi1>, vector<8x128xf32>
    %110 = tpu.concatenate %67, %81, %53, %95, %109 in 1 : vector<8x128xf32>, vector<8x128xf32>, vector<8x128xf32>, vector<8x128xf32>, vector<8x128xf32> -> vector<8x640xf32>
    %c0_40 = arith.constant 0 : index
    %c0_41 = arith.constant 0 : index
    %111 = vector.load %arg4[%c0_40, %c0_41] : memref<640x128xf32, #tpu.memory_space<vmem>>, vector<640x128xf32>
    %cst_42 = arith.constant dense<0.000000e+00> : vector<8x128xf32>
    %112 = tpu.matmul %110, %111, %cst_42 {dimension_numbers = #tpu.dot_dimension_numbers<[1], [0], [0], [1], [0, 0, 1, 1], [], []>} : vector<8x640xf32>, vector<640x128xf32>, vector<8x128xf32> -> vector<8x128xf32>
    %c0_43 = arith.constant 0 : index
    %c0_44 = arith.constant 0 : index
    %113 = vector.load %arg5[%c0_43, %c0_44] : memref<1x128xf32, #tpu.memory_space<vmem>>, vector<1x128xf32>
    %114 = vector.broadcast %113 : vector<1x128xf32> to vector<8x128xf32>
    %115 = arith.addf %112, %114 : vector<8x128xf32>
    %cst_45 = arith.constant 0.000000e+00 : f32
    %116 = vector.broadcast %cst_45 : f32 to vector<8x128xf32>
    %117 = arith.maximumf %115, %116 : vector<8x128xf32>
    %118 = arith.addf %53, %117 : vector<8x128xf32>
    %c3_i32 = arith.constant 3 : i32
    %119 = tpu.dynamic_rotate %117 by %c3_i32 dim 0 : vector<8x128xf32>, i32 -> vector<8x128xf32>
    %c-3_i32 = arith.constant -3 : i32
    %120 = vector.broadcast %c-3_i32 : i32 to vector<8x1xi32>
    %121 = arith.addi %16, %120 : vector<8x1xi32>
    %c0_i32_46 = arith.constant 0 : i32
    %122 = vector.broadcast %c0_i32_46 : i32 to vector<8x1xi32>
    %123 = arith.cmpi sge, %121, %122 : vector<8x1xi32>
    %c-3_i32_47 = arith.constant -3 : i32
    %124 = vector.broadcast %c-3_i32_47 : i32 to vector<8x1xi32>
    %125 = arith.addi %16, %124 : vector<8x1xi32>
    %c8_i32_48 = arith.constant 8 : i32
    %126 = vector.broadcast %c8_i32_48 : i32 to vector<8x1xi32>
    %127 = arith.cmpi slt, %125, %126 : vector<8x1xi32>
    %128 = arith.andi %123, %127 : vector<8x1xi1>
    %cst_49 = arith.constant 0.000000e+00 : f32
    %129 = vector.shape_cast %128 : vector<8x1xi1> to vector<8x1xi1>
    %130 = vector.broadcast %129 : vector<8x1xi1> to vector<8x128xi1>
    %131 = vector.broadcast %cst_49 : f32 to vector<8x128xf32>
    %132 = arith.select %130, %119, %131 : vector<8x128xi1>, vector<8x128xf32>
    %c2_i32_50 = arith.constant 2 : i32
    %133 = tpu.dynamic_rotate %117 by %c2_i32_50 dim 0 : vector<8x128xf32>, i32 -> vector<8x128xf32>
    %c-2_i32_51 = arith.constant -2 : i32
    %134 = vector.broadcast %c-2_i32_51 : i32 to vector<8x1xi32>
    %135 = arith.addi %16, %134 : vector<8x1xi32>
    %c0_i32_52 = arith.constant 0 : i32
    %136 = vector.broadcast %c0_i32_52 : i32 to vector<8x1xi32>
    %137 = arith.cmpi sge, %135, %136 : vector<8x1xi32>
    %c-2_i32_53 = arith.constant -2 : i32
    %138 = vector.broadcast %c-2_i32_53 : i32 to vector<8x1xi32>
    %139 = arith.addi %16, %138 : vector<8x1xi32>
    %c8_i32_54 = arith.constant 8 : i32
    %140 = vector.broadcast %c8_i32_54 : i32 to vector<8x1xi32>
    %141 = arith.cmpi slt, %139, %140 : vector<8x1xi32>
    %142 = arith.andi %137, %141 : vector<8x1xi1>
    %cst_55 = arith.constant 0.000000e+00 : f32
    %143 = vector.shape_cast %142 : vector<8x1xi1> to vector<8x1xi1>
    %144 = vector.broadcast %143 : vector<8x1xi1> to vector<8x128xi1>
    %145 = vector.broadcast %cst_55 : f32 to vector<8x128xf32>
    %146 = arith.select %144, %133, %145 : vector<8x128xi1>, vector<8x128xf32>
    %c1_i32_56 = arith.constant 1 : i32
    %147 = tpu.dynamic_rotate %117 by %c1_i32_56 dim 0 : vector<8x128xf32>, i32 -> vector<8x128xf32>
    %c-1_i32_57 = arith.constant -1 : i32
    %148 = vector.broadcast %c-1_i32_57 : i32 to vector<8x1xi32>
    %149 = arith.addi %16, %148 : vector<8x1xi32>
    %c0_i32_58 = arith.constant 0 : i32
    %150 = vector.broadcast %c0_i32_58 : i32 to vector<8x1xi32>
    %151 = arith.cmpi sge, %149, %150 : vector<8x1xi32>
    %c-1_i32_59 = arith.constant -1 : i32
    %152 = vector.broadcast %c-1_i32_59 : i32 to vector<8x1xi32>
    %153 = arith.addi %16, %152 : vector<8x1xi32>
    %c8_i32_60 = arith.constant 8 : i32
    %154 = vector.broadcast %c8_i32_60 : i32 to vector<8x1xi32>
    %155 = arith.cmpi slt, %153, %154 : vector<8x1xi32>
    %156 = arith.andi %151, %155 : vector<8x1xi1>
    %cst_61 = arith.constant 0.000000e+00 : f32
    %157 = vector.shape_cast %156 : vector<8x1xi1> to vector<8x1xi1>
    %158 = vector.broadcast %157 : vector<8x1xi1> to vector<8x128xi1>
    %159 = vector.broadcast %cst_61 : f32 to vector<8x128xf32>
    %160 = arith.select %158, %147, %159 : vector<8x128xi1>, vector<8x128xf32>
    %c7_i32_62 = arith.constant 7 : i32
    %161 = tpu.dynamic_rotate %117 by %c7_i32_62 dim 0 : vector<8x128xf32>, i32 -> vector<8x128xf32>
    %c1_i32_63 = arith.constant 1 : i32
    %162 = vector.broadcast %c1_i32_63 : i32 to vector<8x1xi32>
    %163 = arith.addi %16, %162 : vector<8x1xi32>
    %c0_i32_64 = arith.constant 0 : i32
    %164 = vector.broadcast %c0_i32_64 : i32 to vector<8x1xi32>
    %165 = arith.cmpi sge, %163, %164 : vector<8x1xi32>
    %c1_i32_65 = arith.constant 1 : i32
    %166 = vector.broadcast %c1_i32_65 : i32 to vector<8x1xi32>
    %167 = arith.addi %16, %166 : vector<8x1xi32>
    %c8_i32_66 = arith.constant 8 : i32
    %168 = vector.broadcast %c8_i32_66 : i32 to vector<8x1xi32>
    %169 = arith.cmpi slt, %167, %168 : vector<8x1xi32>
    %170 = arith.andi %165, %169 : vector<8x1xi1>
    %cst_67 = arith.constant 0.000000e+00 : f32
    %171 = vector.shape_cast %170 : vector<8x1xi1> to vector<8x1xi1>
    %172 = vector.broadcast %171 : vector<8x1xi1> to vector<8x128xi1>
    %173 = vector.broadcast %cst_67 : f32 to vector<8x128xf32>
    %174 = arith.select %172, %161, %173 : vector<8x128xi1>, vector<8x128xf32>
    %c6_i32_68 = arith.constant 6 : i32
    %175 = tpu.dynamic_rotate %117 by %c6_i32_68 dim 0 : vector<8x128xf32>, i32 -> vector<8x128xf32>
    %c2_i32_69 = arith.constant 2 : i32
    %176 = vector.broadcast %c2_i32_69 : i32 to vector<8x1xi32>
    %177 = arith.addi %16, %176 : vector<8x1xi32>
    %c0_i32_70 = arith.constant 0 : i32
    %178 = vector.broadcast %c0_i32_70 : i32 to vector<8x1xi32>
    %179 = arith.cmpi sge, %177, %178 : vector<8x1xi32>
    %c2_i32_71 = arith.constant 2 : i32
    %180 = vector.broadcast %c2_i32_71 : i32 to vector<8x1xi32>
    %181 = arith.addi %16, %180 : vector<8x1xi32>
    %c8_i32_72 = arith.constant 8 : i32
    %182 = vector.broadcast %c8_i32_72 : i32 to vector<8x1xi32>
    %183 = arith.cmpi slt, %181, %182 : vector<8x1xi32>
    %184 = arith.andi %179, %183 : vector<8x1xi1>
    %cst_73 = arith.constant 0.000000e+00 : f32
    %185 = vector.shape_cast %184 : vector<8x1xi1> to vector<8x1xi1>
    %186 = vector.broadcast %185 : vector<8x1xi1> to vector<8x128xi1>
    %187 = vector.broadcast %cst_73 : f32 to vector<8x128xf32>
    %188 = arith.select %186, %175, %187 : vector<8x128xi1>, vector<8x128xf32>
    %c5_i32 = arith.constant 5 : i32
    %189 = tpu.dynamic_rotate %117 by %c5_i32 dim 0 : vector<8x128xf32>, i32 -> vector<8x128xf32>
    %c3_i32_74 = arith.constant 3 : i32
    %190 = vector.broadcast %c3_i32_74 : i32 to vector<8x1xi32>
    %191 = arith.addi %16, %190 : vector<8x1xi32>
    %c0_i32_75 = arith.constant 0 : i32
    %192 = vector.broadcast %c0_i32_75 : i32 to vector<8x1xi32>
    %193 = arith.cmpi sge, %191, %192 : vector<8x1xi32>
    %c3_i32_76 = arith.constant 3 : i32
    %194 = vector.broadcast %c3_i32_76 : i32 to vector<8x1xi32>
    %195 = arith.addi %16, %194 : vector<8x1xi32>
    %c8_i32_77 = arith.constant 8 : i32
    %196 = vector.broadcast %c8_i32_77 : i32 to vector<8x1xi32>
    %197 = arith.cmpi slt, %195, %196 : vector<8x1xi32>
    %198 = arith.andi %193, %197 : vector<8x1xi1>
    %cst_78 = arith.constant 0.000000e+00 : f32
    %199 = vector.shape_cast %198 : vector<8x1xi1> to vector<8x1xi1>
    %200 = vector.broadcast %199 : vector<8x1xi1> to vector<8x128xi1>
    %201 = vector.broadcast %cst_78 : f32 to vector<8x128xf32>
    %202 = arith.select %200, %189, %201 : vector<8x128xi1>, vector<8x128xf32>
    %203 = tpu.concatenate %132, %146, %160, %117, %174, %188, %202 in 1 : vector<8x128xf32>, vector<8x128xf32>, vector<8x128xf32>, vector<8x128xf32>, vector<8x128xf32>, vector<8x128xf32>, vector<8x128xf32> -> vector<8x896xf32>
    %c0_79 = arith.constant 0 : index
    %c0_80 = arith.constant 0 : index
    %204 = vector.load %arg6[%c0_79, %c0_80] : memref<896x128xf32, #tpu.memory_space<vmem>>, vector<896x128xf32>
    %cst_81 = arith.constant dense<0.000000e+00> : vector<8x128xf32>
    %205 = tpu.matmul %203, %204, %cst_81 {dimension_numbers = #tpu.dot_dimension_numbers<[1], [0], [0], [1], [0, 0, 1, 1], [], []>} : vector<8x896xf32>, vector<896x128xf32>, vector<8x128xf32> -> vector<8x128xf32>
    %c0_82 = arith.constant 0 : index
    %c0_83 = arith.constant 0 : index
    %206 = vector.load %arg7[%c0_82, %c0_83] : memref<1x128xf32, #tpu.memory_space<vmem>>, vector<1x128xf32>
    %207 = vector.broadcast %206 : vector<1x128xf32> to vector<8x128xf32>
    %208 = arith.addf %205, %207 : vector<8x128xf32>
    %cst_84 = arith.constant 0.000000e+00 : f32
    %209 = vector.broadcast %cst_84 : f32 to vector<8x128xf32>
    %210 = arith.maximumf %208, %209 : vector<8x128xf32>
    %211 = arith.addf %118, %210 : vector<8x128xf32>
    %c0_85 = arith.constant 0 : index
    %c0_86 = arith.constant 0 : index
    %212 = vector.load %arg8[%c0_85, %c0_86] : memref<8x128xf32, #tpu.memory_space<vmem>>, vector<8x128xf32>
    tpu.vector_store %arg8[%c0_85, %c0_86], %211 {strides = array<i32>} : memref<8x128xf32, #tpu.memory_space<vmem>>, vector<8x128xf32>,
    return
  }
  func.func @transform_0(%arg0: i32) -> (i32, i32) {
    %c0_i32 = arith.constant 0 : i32
    %c0_i32_0 = arith.constant 0 : i32
    return %arg0, %c0_i32 : i32, i32
  }
  func.func @transform_1(%arg0: i32) -> (i32, i32) {
    %c0_i32 = arith.constant 0 : i32
    %c0_i32_0 = arith.constant 0 : i32
    %c0_i32_1 = arith.constant 0 : i32
    return %c0_i32, %c0_i32_0 : i32, i32
  }
  func.func @transform_2(%arg0: i32) -> (i32, i32) {
    %c0_i32 = arith.constant 0 : i32
    %c0_i32_0 = arith.constant 0 : i32
    %c0_i32_1 = arith.constant 0 : i32
    return %c0_i32, %c0_i32_0 : i32, i32
  }
  func.func @transform_3(%arg0: i32) -> (i32, i32) {
    %c0_i32 = arith.constant 0 : i32
    %c0_i32_0 = arith.constant 0 : i32
    %c0_i32_1 = arith.constant 0 : i32
    return %c0_i32, %c0_i32_0 : i32, i32
  }
  func.func @transform_4(%arg0: i32) -> (i32, i32) {
    %c0_i32 = arith.constant 0 : i32
    %c0_i32_0 = arith.constant 0 : i32
    %c0_i32_1 = arith.constant 0 : i32
    return %c0_i32, %c0_i32_0 : i32, i32
  }
  func.func @transform_5(%arg0: i32) -> (i32, i32) {
    %c0_i32 = arith.constant 0 : i32
    %c0_i32_0 = arith.constant 0 : i32
    %c0_i32_1 = arith.constant 0 : i32
    return %c0_i32, %c0_i32_0 : i32, i32
  }
  func.func @transform_6(%arg0: i32) -> (i32, i32) {
    %c0_i32 = arith.constant 0 : i32
    %c0_i32_0 = arith.constant 0 : i32
    %c0_i32_1 = arith.constant 0 : i32
    return %c0_i32, %c0_i32_0 : i32, i32
  }
  func.func @transform_7(%arg0: i32) -> (i32, i32) {
    %c0_i32 = arith.constant 0 : i32
    %c0_i32_0 = arith.constant 0 : i32
    return %arg0, %c0_i32 : i32, i32
  }
}

</mosaic_0001>

<llo_original>
// kernel: tpu_custom_call.1
$region0: #{tpu_custom_call.1}
  #allocation0 [shape = 'u32[]', space=smem, size = 0x4, offset = 0x4, fixed_abs, tag = 'smem constant byte address 0x4 - core index']
  #allocation1 [shape = 'u32[144,128]{1,0:T(1,128)}', space=vmem, size = 0x12000, scoped, tag = 'internal scratch']
  %s0 = inlined_call_operand.hbm [shape: f32[16,128], index: 0, kind: input, shape index: {}]
  %s1 = inlined_call_operand.hbm [shape: f32[384,128], index: 1, kind: input, shape index: {}]
  %s2 = inlined_call_operand.vmem [shape: f32[1,128], index: 2, kind: input, shape index: {}]
  %s3 = inlined_call_operand.hbm [shape: f32[640,128], index: 3, kind: input, shape index: {}]
  %s4 = inlined_call_operand.vmem [shape: f32[1,128], index: 4, kind: input, shape index: {}]
  %s5 = inlined_call_operand.hbm [shape: f32[896,128], index: 5, kind: input, shape index: {}]
  %s6 = inlined_call_operand.vmem [shape: f32[1,128], index: 6, kind: input, shape index: {}]
  %s7 = inlined_call_operand.hbm [shape: f32[16,128], index: 7, kind: output, shape index: {}]
  %s8 = sld [smem:[#allocation0]]
  $region77: #{tpu_custom_call.1} parent=0
    _
  %s10 = ssub.s32 1, %s8
  %s11 = scalar_select 0, %s10, %s8
  $region1: #{tpu_custom_call.1} parent=0
    #allocation2 [shape = 'u8[8192]{0}', space=vmem, size = 0x2000, scoped, tag = 'input window, operand 0']
    #allocation3 [shape = 's32[2]{0}', space=sflag, size = 0x8, scoped, tag = 'scoped memory for tpu_custom_call.1']
    #allocation4 [shape = 's32[2]{0}', space=sflag, size = 0x8, scoped, tag = 'scoped memory for tpu_custom_call.1']
    #allocation5 [shape = 'u8[196608]{0}', space=vmem, size = 0x30000, scoped, tag = 'input window, operand 1, single buffered']
    #allocation6 [shape = 's32[1]{0}', space=sflag, size = 0x4, scoped, tag = 'scoped memory for tpu_custom_call.1']
    #allocation7 [shape = 'u8[327680]{0}', space=vmem, size = 0x50000, scoped, tag = 'input window, operand 3, single buffered']
    #allocation8 [shape = 'u8[458752]{0}', space=vmem, size = 0x70000, scoped, tag = 'input window, operand 5, single buffered']
    #allocation9 [shape = 's32[1]{0}', space=sflag, size = 0x4, scoped, tag = 'scoped memory for tpu_custom_call.1']
    #allocation10 [shape = 'u8[8192]{0}', space=vmem, size = 0x2000, scoped, tag = 'output window, operand 0']
    %12 = vsyncpa [#allocation3], 0
    %s13 = scalar_lea.sflag [#allocation3], 1
    %14 = vsyncpa %s13, 0
    %15 = vsyncpa [#allocation6], 0
    %16 = vsyncpa [#allocation9], 0
    %17 = vsyncpa [#allocation4], 0
    %s18 = scalar_lea.sflag [#allocation4], 1
    %19 = vsyncpa %s18, 0
    loop: start=0, step=1, limit=4
    $region2: #{tpu_custom_call.1} parent=1 // loop_pre_header
      _
    $region3: #{tpu_custom_call.1} parent=1 // loop_header
      %s21 = sphi 0, %s25
      %p22 = scmp.ge.s32.totalorder %s21, 4
      %s31 = sphi 0, %s33
      %s34 = sphi 0, %s31
      %s35 = sphi 0, %s34
      %s51 = sphi 0, %s35
      %s55 = sphi 0, %s55
      %s57 = sphi 0, %s55
      %s58 = sphi 0, %s57
      %s72 = sphi 0, %s58
      %s76 = sphi 0, %s76
      %s78 = sphi 0, %s76
      %s79 = sphi 0, %s78
      %s93 = sphi 0, %s79
      %s97 = sphi 0, %s97
      %s99 = sphi 0, %s97
      %s100 = sphi 0, %s99
      %s114 = sphi 0, %s100
      %s118 = sphi 0, %s118
      %s120 = sphi 0, %s118
      %s121 = sphi 0, %s120
      %s135 = sphi 0, %s121
      %s139 = sphi 0, %s139
      %s141 = sphi 0, %s139
      %s142 = sphi 0, %s141
      %s156 = sphi 0, %s142
      %s160 = sphi 0, %s160
      %s162 = sphi 0, %s160
      %s163 = sphi 0, %s162
      %s177 = sphi 0, %s163
      %s183 = sphi 0, %s185
      %s186 = sphi 0, %s183
      %s187 = sphi 0, %s186
      %s203 = sphi 0, %s187
    $region4: #{tpu_custom_call.1} parent=1 // loop_header_branch
      %24 = sbr.rel (%p22) target = $region8
    $region5: #{tpu_custom_call.1} parent=1 // loop_body
      %s26 = ssub.s32 %s21, 1
      %s27 = ssub.s32 %s21, 2
      %s28 = sadd.s32 %s21, 1
      %s29 = ssub.s32 %s21, %s28
      %p30 = scmp.eq.s32.totalorder %s29, 0
      %s32 = sadd.s32 %s31, 1
      %s33 = scalar_select %p30, %s31, %s32
      %p36 = pneg %p30
      %p37 = scmp.eq.s32.totalorder %s21, 1
      %p38 = por %p36, %p37
      %p39 = scmp.ne.s32.totalorder %s31, %s34
      %p40 = scmp.eq.s32.totalorder %s21, 0
      %p41 = por %p39, %p40
      %p42 = scmp.ne.s32.totalorder %s31, %s34
      %p43 = scmp.eq.s32.totalorder %s26, 1
      %p44 = por %p42, %p43
      %p45 = scmp.ne.s32.totalorder %s34, %s35
      %p46 = scmp.eq.s32.totalorder %s26, 0
      %p47 = por %p45, %p46
      %p48 = scmp.ne.s32.totalorder %s34, %s35
      %p49 = scmp.eq.s32.totalorder %s27, 1
      %p50 = por %p48, %p49
      %p52 = scmp.ne.s32.totalorder %s35, %s51
      %p53 = scmp.eq.s32.totalorder %s27, 0
      %p54 = por %p52, %p53
      %s56 = sadd.s32 %s55, 1
      %p59 = scmp.eq.s32.totalorder %s21, 1
      %p60 = scmp.ne.s32.totalorder %s55, %s57
      %p61 = scmp.eq.s32.totalorder %s21, 0
      %p62 = por %p60, %p61
      %p63 = scmp.ne.s32.totalorder %s55, %s57
      %p64 = scmp.eq.s32.totalorder %s26, 1
      %p65 = por %p63, %p64
      %p66 = scmp.ne.s32.totalorder %s57, %s58
      %p67 = scmp.eq.s32.totalorder %s26, 0
      %p68 = por %p66, %p67
      %p69 = scmp.ne.s32.totalorder %s57, %s58
      %p70 = scmp.eq.s32.totalorder %s27, 1
      %p71 = por %p69, %p70
      %p73 = scmp.ne.s32.totalorder %s58, %s72
      %p74 = scmp.eq.s32.totalorder %s27, 0
      %p75 = por %p73, %p74
      %s77 = sadd.s32 %s76, 1
      %p80 = scmp.eq.s32.totalorder %s21, 1
      %p81 = scmp.ne.s32.totalorder %s76, %s78
      %p82 = scmp.eq.s32.totalorder %s21, 0
      %p83 = por %p81, %p82
      %p84 = scmp.ne.s32.totalorder %s76, %s78
      %p85 = scmp.eq.s32.totalorder %s26, 1
      %p86 = por %p84, %p85
      %p87 = scmp.ne.s32.totalorder %s78, %s79
      %p88 = scmp.eq.s32.totalorder %s26, 0
      %p89 = por %p87, %p88
      %p90 = scmp.ne.s32.totalorder %s78, %s79
      %p91 = scmp.eq.s32.totalorder %s27, 1
      %p92 = por %p90, %p91
      %p94 = scmp.ne.s32.totalorder %s79, %s93
      %p95 = scmp.eq.s32.totalorder %s27, 0
      %p96 = por %p94, %p95
      %s98 = sadd.s32 %s97, 1
      %p101 = scmp.eq.s32.totalorder %s21, 1
      %p102 = scmp.ne.s32.totalorder %s97, %s99
      %p103 = scmp.eq.s32.totalorder %s21, 0
      %p104 = por %p102, %p103
      %p105 = scmp.ne.s32.totalorder %s97, %s99
      %p106 = scmp.eq.s32.totalorder %s26, 1
      %p107 = por %p105, %p106
      %p108 = scmp.ne.s32.totalorder %s99, %s100
      %p109 = scmp.eq.s32.totalorder %s26, 0
      %p110 = por %p108, %p109
      %p111 = scmp.ne.s32.totalorder %s99, %s100
      %p112 = scmp.eq.s32.totalorder %s27, 1
      %p113 = por %p111, %p112
      %p115 = scmp.ne.s32.totalorder %s100, %s114
      %p116 = scmp.eq.s32.totalorder %s27, 0
      %p117 = por %p115, %p116
      %s119 = sadd.s32 %s118, 1
      %p122 = scmp.eq.s32.totalorder %s21, 1
      %p123 = scmp.ne.s32.totalorder %s118, %s120
      %p124 = scmp.eq.s32.totalorder %s21, 0
      %p125 = por %p123, %p124
      %p126 = scmp.ne.s32.totalorder %s118, %s120
      %p127 = scmp.eq.s32.totalorder %s26, 1
      %p128 = por %p126, %p127
      %p129 = scmp.ne.s32.totalorder %s120, %s121
      %p130 = scmp.eq.s32.totalorder %s26, 0
      %p131 = por %p129, %p130
      %p132 = scmp.ne.s32.totalorder %s120, %s121
      %p133 = scmp.eq.s32.totalorder %s27, 1
      %p134 = por %p132, %p133
      %p136 = scmp.ne.s32.totalorder %s121, %s135
      %p137 = scmp.eq.s32.totalorder %s27, 0
      %p138 = por %p136, %p137
      %s140 = sadd.s32 %s139, 1
      %p143 = scmp.eq.s32.totalorder %s21, 1
      %p144 = scmp.ne.s32.totalorder %s139, %s141
      %p145 = scmp.eq.s32.totalorder %s21, 0
      %p146 = por %p144, %p145
      %p147 = scmp.ne.s32.totalorder %s139, %s141
      %p148 = scmp.eq.s32.totalorder %s26, 1
      %p149 = por %p147, %p148
      %p150 = scmp.ne.s32.totalorder %s141, %s142
      %p151 = scmp.eq.s32.totalorder %s26, 0
      %p152 = por %p150, %p151
      %p153 = scmp.ne.s32.totalorder %s141, %s142
      %p154 = scmp.eq.s32.totalorder %s27, 1
      %p155 = por %p153, %p154
      %p157 = scmp.ne.s32.totalorder %s142, %s156
      %p158 = scmp.eq.s32.totalorder %s27, 0
      %p159 = por %p157, %p158
      %s161 = sadd.s32 %s160, 1
      %p164 = scmp.eq.s32.totalorder %s21, 1
      %p165 = scmp.ne.s32.totalorder %s160, %s162
      %p166 = scmp.eq.s32.totalorder %s21, 0
      %p167 = por %p165, %p166
      %p168 = scmp.ne.s32.totalorder %s160, %s162
      %p169 = scmp.eq.s32.totalorder %s26, 1
      %p170 = por %p168, %p169
      %p171 = scmp.ne.s32.totalorder %s162, %s163
      %p172 = scmp.eq.s32.totalorder %s26, 0
      %p173 = por %p171, %p172
      %p174 = scmp.ne.s32.totalorder %s162, %s163
      %p175 = scmp.eq.s32.totalorder %s27, 1
      %p176 = por %p174, %p175
      %p178 = scmp.ne.s32.totalorder %s163, %s177
      %p179 = scmp.eq.s32.totalorder %s27, 0
      %p180 = por %p178, %p179
      %s181 = ssub.s32 %s21, %s28
      %p182 = scmp.eq.s32.totalorder %s181, 0
      %s184 = sadd.s32 %s183, 1
      %s185 = scalar_select %p182, %s183, %s184
      %p188 = pneg %p182
      %p189 = scmp.eq.s32.totalorder %s21, 1
      %p190 = por %p188, %p189
      %p191 = scmp.ne.s32.totalorder %s183, %s186
      %p192 = scmp.eq.s32.totalorder %s21, 0
      %p193 = por %p191, %p192
      %p194 = scmp.ne.s32.totalorder %s183, %s186
      %p195 = scmp.eq.s32.totalorder %s26, 1
      %p196 = por %p194, %p195
      %p197 = scmp.ne.s32.totalorder %s186, %s187
      %p198 = scmp.eq.s32.totalorder %s26, 0
      %p199 = por %p197, %p198
      %p200 = scmp.ne.s32.totalorder %s186, %s187
      %p201 = scmp.eq.s32.totalorder %s27, 1
      %p202 = por %p200, %p201
      %p204 = scmp.ne.s32.totalorder %s187, %s203
      %p205 = scmp.eq.s32.totalorder %s27, 0
      %p206 = por %p204, %p205
      %p207 = scmp.le.s32.totalorder 1, %s21
      %p208 = scmp.lt.s32.totalorder %s21, 3
      %p209 = pnand %p207, %p208
      %p210 = pneg %p209
      // Predicated region
      $region9: #{tpu_custom_call.1} parent=5 // pred_check
        _
      $region10: #{tpu_custom_call.1} parent=5 // pred_check_branch
        %212 = sbr.rel (%p209) target = $region12
      $region11: #{tpu_custom_call.1} parent=5 // pred_region
        %s213 = ssub.s32 %s21, 1
        // Predicated region
        $region13: #{tpu_custom_call.1} parent=11 // pred_check
          %p214 = pneg %p68
        $region14: #{tpu_custom_call.1} parent=11 // pred_check_branch
          %216 = sbr.rel (%p214) target = $region16
        $region15: #{tpu_custom_call.1} parent=11 // pred_region
          %s218 = ssub.s32 6144, 6144
          %219 = vsyncadd [#allocation6], %s218
          %s220 = sshll.u32 [#allocation5], 4
          %s221 = int_to_ptr.vmem [resolvable:$true] %s220
          %226 = dma.hbm_to_vmem [thread:$0]  %s1, 6144, %s221, [#allocation6], 128, 128, 8
        $region16: #{tpu_custom_call.1} parent=11 // pred_fallthru
          _
        // Predicated region
        $region17: #{tpu_custom_call.1} parent=11 // pred_check
          %p227 = pneg %p89
        $region18: #{tpu_custom_call.1} parent=11 // pred_check_branch
          %229 = sbr.rel (%p227) target = $region20
        $region19: #{tpu_custom_call.1} parent=11 // pred_region
          _
        $region20: #{tpu_custom_call.1} parent=11 // pred_fallthru
          _
        // Predicated region
        $region21: #{tpu_custom_call.1} parent=11 // pred_check
          %p230 = pneg %p110
        $region22: #{tpu_custom_call.1} parent=11 // pred_check_branch
          %232 = sbr.rel (%p230) target = $region24
        $region23: #{tpu_custom_call.1} parent=11 // pred_region
          %s234 = ssub.s32 10240, 10240
          %235 = vsyncadd [#allocation6], %s234
          %s236 = sshll.u32 [#allocation7], 4
          %s237 = int_to_ptr.vmem [resolvable:$true] %s236
          %242 = dma.hbm_to_vmem [thread:$0]  %s3, 10240, %s237, [#allocation6], 128, 128, 8
        $region24: #{tpu_custom_call.1} parent=11 // pred_fallthru
          _
        // Predicated region
        $region25: #{tpu_custom_call.1} parent=11 // pred_check
          %p243 = pneg %p131
        $region26: #{tpu_custom_call.1} parent=11 // pred_check_branch
          %245 = sbr.rel (%p243) target = $region28
        $region27: #{tpu_custom_call.1} parent=11 // pred_region
          _
        $region28: #{tpu_custom_call.1} parent=11 // pred_fallthru
          _
        // Predicated region
        $region29: #{tpu_custom_call.1} parent=11 // pred_check
          %p246 = pneg %p152
        $region30: #{tpu_custom_call.1} parent=11 // pred_check_branch
          %248 = sbr.rel (%p246) target = $region32
        $region31: #{tpu_custom_call.1} parent=11 // pred_region
          %s250 = ssub.s32 14336, 14336
          %251 = vsyncadd [#allocation9], %s250
          %s252 = sshll.u32 [#allocation8], 4
          %s253 = int_to_ptr.vmem [resolvable:$true] %s252
          %258 = dma.hbm_to_vmem [thread:$0]  %s5, 14336, %s253, [#allocation9], 128, 128, 8
        $region32: #{tpu_custom_call.1} parent=11 // pred_fallthru
          _
        // Predicated region
        $region33: #{tpu_custom_call.1} parent=11 // pred_check
          %p259 = pneg %p173
        $region34: #{tpu_custom_call.1} parent=11 // pred_check_branch
          %261 = sbr.rel (%p259) target = $region36
        $region35: #{tpu_custom_call.1} parent=11 // pred_region
          _
        $region36: #{tpu_custom_call.1} parent=11 // pred_fallthru
          _
      $region12: #{tpu_custom_call.1} parent=5 // pred_fallthru
        _
      %p262 = scmp.lt.s32.totalorder %s21, 2
      // Predicated region
      $region37: #{tpu_custom_call.1} parent=5 // pred_check
        %p263 = pneg %p262
      $region38: #{tpu_custom_call.1} parent=5 // pred_check_branch
        %265 = sbr.rel (%p263) target = $region40
      $region39: #{tpu_custom_call.1} parent=5 // pred_region
        // Predicated region
        $region41: #{tpu_custom_call.1} parent=39 // pred_check
          %p266 = pneg %p41
        $region42: #{tpu_custom_call.1} parent=39 // pred_check_branch
          %268 = sbr.rel (%p266) target = $region44
        $region43: #{tpu_custom_call.1} parent=39 // pred_region
          %s269 = sand.u32 %s31, 1
          %s270 = scalar_lea.sflag [#allocation3], %s269
          %s271 = sand.u32 %s31, 1
          %s272 = smul.addr %s271, 8
          %s273 = scalar_lea.vmem [#allocation2], %s272
          %s275 = ssub.s32 128, 128
          %276 = vsyncadd %s270, %s275
          %s277 = smul.addr %s21, 128
          %s278 = scalar_lea.hbm %s0, %s277
          %s280 = sshll.u32 %s273, 4
          %s281 = int_to_ptr.vmem [resolvable:$true] %s280
          %283 = dma.hbm_to_vmem [thread:$0]  %s278, 128, %s281, %s270
        $region44: #{tpu_custom_call.1} parent=39 // pred_fallthru
          _
      $region40: #{tpu_custom_call.1} parent=5 // pred_fallthru
        _
      %p284 = scmp.le.s32.totalorder 1, %s21
      %p285 = scmp.lt.s32.totalorder %s21, 3
      %p286 = pnand %p284, %p285
      %p287 = pneg %p286
      // Predicated region
      $region45: #{tpu_custom_call.1} parent=5 // pred_check
        _
      $region46: #{tpu_custom_call.1} parent=5 // pred_check_branch
        %289 = sbr.rel (%p286) target = $region48
      $region47: #{tpu_custom_call.1} parent=5 // pred_region
        %s290 = ssub.s32 %s21, 1
        %s291 = sand.u32 %s34, 1
        %s292 = scalar_lea.sflag [#allocation3], %s291
        %s293 = sand.u32 %s34, 1
        %s294 = smul.addr %s293, 8
        %s295 = scalar_lea.vmem [#allocation2], %s294
        // Predicated region
        $region49: #{tpu_custom_call.1} parent=47 // pred_check
          %p296 = pneg %p47
        $region50: #{tpu_custom_call.1} parent=47 // pred_check_branch
          %298 = sbr.rel (%p296) target = $region52
        $region51: #{tpu_custom_call.1} parent=47 // pred_region
          %299 = dma.done %s292, 128
        $region52: #{tpu_custom_call.1} parent=47 // pred_fallthru
          _
        // Predicated region
        $region53: #{tpu_custom_call.1} parent=47 // pred_check
          %p300 = pneg %p68
        $region54: #{tpu_custom_call.1} parent=47 // pred_check_branch
          %302 = sbr.rel (%p300) target = $region56
        $region55: #{tpu_custom_call.1} parent=47 // pred_region
          %303 = dma.done [#allocation6], 6144
        $region56: #{tpu_custom_call.1} parent=47 // pred_fallthru
          _
        // Predicated region
        $region57: #{tpu_custom_call.1} parent=47 // pred_check
          %p304 = pneg %p110
        $region58: #{tpu_custom_call.1} parent=47 // pred_check_branch
          %306 = sbr.rel (%p304) target = $region60
        $region59: #{tpu_custom_call.1} parent=47 // pred_region
          %307 = dma.done [#allocation6], 10240
        $region60: #{tpu_custom_call.1} parent=47 // pred_fallthru
          _
        // Predicated region
        $region61: #{tpu_custom_call.1} parent=47 // pred_check
          %p308 = pneg %p152
        $region62: #{tpu_custom_call.1} parent=47 // pred_check_branch
          %310 = sbr.rel (%p308) target = $region64
        $region63: #{tpu_custom_call.1} parent=47 // pred_region
          %311 = dma.done [#allocation9], 14336
        $region64: #{tpu_custom_call.1} parent=47 // pred_fallthru
          _
        %s312 = sand.u32 %s34, 1
        %s313 = scalar_lea.sflag [#allocation3], %s312
        %s314 = sand.u32 %s34, 1
        %s315 = smul.addr %s314, 8
        %s316 = scalar_lea.vmem [#allocation2], %s315
        %p317 = pneg %p47
        %p318 = pneg %p44
        %p319 = pneg %p68
        %p320 = pneg %p65
        %p321 = pneg %p89
        %p322 = pneg %p86
        %p323 = pneg %p110
        %p324 = pneg %p107
        %p325 = pneg %p131
        %p326 = pneg %p128
        %p327 = pneg %p152
        %p328 = pneg %p149
        %p329 = pneg %p173
        %p330 = pneg %p170
        %p331 = pneg %p199
        %p332 = pneg %p196
        %s333 = sand.u32 %s186, 1
        %s334 = scalar_lea.sflag [#allocation4], %s333
        %s335 = sand.u32 %s186, 1
        %s336 = smul.addr %s335, 8
        %s337 = scalar_lea.vmem [#allocation10], %s336
        %v338 = vlaneseq
        %v339 = vshrl.u32 %v338, 7
        %vm340 = vcmp.lt.s32.totalorder %v339, 0
        %v341 = vsub.s32 0, %v339
        %v342 = vsel %vm340, %v341, %v339
        %v343 = vshrl.u32 %v342, 3
        %v344 = vand.u32 %v342, 7
        %v345 = vsub.s32 0, %v344
        %v346 = vsel %vm340, %v345, %v344
        %vm347 = vcmp.ne.s32.totalorder %v346, 0
        %vm348 = vcmp.lt.s32.totalorder %v346, 0
        %vm349 = vmand %vm348, %vm347
        %v350 = vadd.s32 %v346, 8
        %v351 = vsel %vm349, %v350, %v346
        %v352 = vld [vmem:[%s295] sm:$0xff]
        %v353 = vrot.slane %v352, 7
        %v354 = vadd.s32 %v351, 4294967295
        %vm355 = vcmp.ge.s32.totalorder %v354, 0
        %vm356 = vcmp.lt.s32.totalorder %v354, 8
        %vm357 = vmand %vm355, %vm356
        %v358 = vsel %vm357, 1, 0
        %vm359 = vcmp.eq.s32.totalorder %v358, 1
        %v360 = vsel %vm359, %v353, 0.0
        %v361 = vrot.slane %v352, 1
        %v362 = vadd.s32 %v351, 1
        %vm363 = vcmp.ge.s32.totalorder %v362, 0
        %vm364 = vcmp.lt.s32.totalorder %v362, 8
        %vm365 = vmand %vm363, %vm364
        %v366 = vsel %vm365, 1, 0
        %vm367 = vcmp.eq.s32.totalorder %v366, 1
        %v368 = vsel %vm367, %v361, 0.0
        %v369 = vld [vmem:[#allocation5] sm:$0xff]
        %v370 = vld [vmem:[#allocation5 + $0x8] sm:$0xff]
        %v371 = vld [vmem:[#allocation5 + $0x10] sm:$0xff]
        %v372 = vld [vmem:[#allocation5 + $0x18] sm:$0xff]
        %v373 = vld [vmem:[#allocation5 + $0x20] sm:$0xff]
        %v374 = vld [vmem:[#allocation5 + $0x28] sm:$0xff]
        %v375 = vld [vmem:[#allocation5 + $0x30] sm:$0xff]
        %v376 = vld [vmem:[#allocation5 + $0x38] sm:$0xff]
        %v377 = vld [vmem:[#allocation5 + $0x40] sm:$0xff]
        %v378 = vld [vmem:[#allocation5 + $0x48] sm:$0xff]
        %v379 = vld [vmem:[#allocation5 + $0x50] sm:$0xff]
        %v380 = vld [vmem:[#allocation5 + $0x58] sm:$0xff]
        %v381 = vld [vmem:[#allocation5 + $0x60] sm:$0xff]
        %v382 = vld [vmem:[#allocation5 + $0x68] sm:$0xff]
        %v383 = vld [vmem:[#allocation5 + $0x70] sm:$0xff]
        %v384 = vld [vmem:[#allocation5 + $0x78] sm:$0xff]
        %v385 = vld [vmem:[#allocation5 + $0x80] sm:$0xff]
        %v386 = vld [vmem:[#allocation5 + $0x88] sm:$0xff]
        %v387 = vld [vmem:[#allocation5 + $0x90] sm:$0xff]
        %v388 = vld [vmem:[#allocation5 + $0x98] sm:$0xff]
        %v389 = vld [vmem:[#allocation5 + $0xa0] sm:$0xff]
        %v390 = vld [vmem:[#allocation5 + $0xa8] sm:$0xff]
        %v391 = vld [vmem:[#allocation5 + $0xb0] sm:$0xff]
        %v392 = vld [vmem:[#allocation5 + $0xb8] sm:$0xff]
        %v393 = vld [vmem:[#allocation5 + $0xc0] sm:$0xff]
        %v394 = vld [vmem:[#allocation5 + $0xc8] sm:$0xff]
        %v395 = vld [vmem:[#allocation5 + $0xd0] sm:$0xff]
        %v396 = vld [vmem:[#allocation5 + $0xd8] sm:$0xff]
        %v397 = vld [vmem:[#allocation5 + $0xe0] sm:$0xff]
        %v398 = vld [vmem:[#allocation5 + $0xe8] sm:$0xff]
        %v399 = vld [vmem:[#allocation5 + $0xf0] sm:$0xff]
        %v400 = vld [vmem:[#allocation5 + $0xf8] sm:$0xff]
        %v401 = vld [vmem:[#allocation5 + $0x100] sm:$0xff]
        %v402 = vld [vmem:[#allocation5 + $0x108] sm:$0xff]
        %v403 = vld [vmem:[#allocation5 + $0x110] sm:$0xff]
        %v404 = vld [vmem:[#allocation5 + $0x118] sm:$0xff]
        %v405 = vld [vmem:[#allocation5 + $0x120] sm:$0xff]
        %v406 = vld [vmem:[#allocation5 + $0x128] sm:$0xff]
        %v407 = vld [vmem:[#allocation5 + $0x130] sm:$0xff]
        %v408 = vld [vmem:[#allocation5 + $0x138] sm:$0xff]
        %v409 = vld [vmem:[#allocation5 + $0x140] sm:$0xff]
        %v410 = vld [vmem:[#allocation5 + $0x148] sm:$0xff]
        %v411 = vld [vmem:[#allocation5 + $0x150] sm:$0xff]
        %v412 = vld [vmem:[#allocation5 + $0x158] sm:$0xff]
        %v413 = vld [vmem:[#allocation5 + $0x160] sm:$0xff]
        %v414 = vld [vmem:[#allocation5 + $0x168] sm:$0xff]
        %v415 = vld [vmem:[#allocation5 + $0x170] sm:$0xff]
        %v416 = vld [vmem:[#allocation5 + $0x178] sm:$0xff]
        %v417 = vld [vmem:[%s2] sm:$0x1]
        %v419 = vlaneseq
        %v420 = vshrl.u32 %v419, 7
        %v421 = vsub.s32 0, %v420
        %v422 = vrot.slane %v417, %v421
        %424 = vmatprep.subr.mxu0 0.0
        %425 = vmatpush1.msra.mxu0 %v369
        %426 = vmatprep.subr.mxu0 0.0
        %427 = vmatpush1.msra.mxu0 %v370
        %428 = vmatprep.subr.mxu0 0.0
        %429 = vmatpush1.msra.mxu0 %v371
        %430 = vmatprep.subr.mxu0 0.0
        %431 = vmatpush1.msra.mxu0 %v372
        %432 = vmatprep.subr.mxu0 0.0
        %433 = vmatpush1.msra.mxu0 %v373
        %434 = vmatprep.subr.mxu0 0.0
        %435 = vmatpush1.msra.mxu0 %v374
        %436 = vmatprep.subr.mxu0 0.0
        %437 = vmatpush1.msra.mxu0 %v375
        %438 = vmatprep.subr.mxu0 0.0
        %439 = vmatpush1.msra.mxu0 %v376
        %440 = vmatprep.subr.mxu0 0.0
        %441 = vmatpush1.msra.mxu0 %v377
        %442 = vmatprep.subr.mxu0 0.0
        %443 = vmatpush1.msra.mxu0 %v378
        %444 = vmatprep.subr.mxu0 0.0
        %445 = vmatpush1.msra.mxu0 %v379
        %446 = vmatprep.subr.mxu0 0.0
        %447 = vmatpush1.msra.mxu0 %v380
        %448 = vmatprep.subr.mxu0 0.0
        %449 = vmatpush1.msra.mxu0 %v381
        %450 = vmatprep.subr.mxu0 0.0
        %451 = vmatpush1.msra.mxu0 %v382
        %452 = vmatprep.subr.mxu0 0.0
        %453 = vmatpush1.msra.mxu0 %v383
        %454 = vmatprep.subr.mxu0 0.0
        %455 = vmatpush1.msra.mxu0 %v384
        %456 = vmatprep.subr.mxu0 0.0
        %457 = vmatpush1.msra.mxu0 %v385
        %458 = vmatprep.subr.mxu0 0.0
        %459 = vmatpush1.msra.mxu0 %v386
        %460 = vmatprep.subr.mxu0 0.0
        %461 = vmatpush1.msra.mxu0 %v387
        %462 = vmatprep.subr.mxu0 0.0
        %463 = vmatpush1.msra.mxu0 %v388
        %464 = vmatprep.subr.mxu0 0.0
        %465 = vmatpush1.msra.mxu0 %v389
        %466 = vmatprep.subr.mxu0 0.0
        %467 = vmatpush1.msra.mxu0 %v390
        %468 = vmatprep.subr.mxu0 0.0
        %469 = vmatpush1.msra.mxu0 %v391
        %470 = vmatprep.subr.mxu0 0.0
        %471 = vmatpush1.msra.mxu0 %v392
        %472 = vmatprep.subr.mxu0 0.0
        %473 = vmatpush1.msra.mxu0 %v393
        %474 = vmatprep.subr.mxu0 0.0
        %475 = vmatpush1.msra.mxu0 %v394
        %476 = vmatprep.subr.mxu0 0.0
        %477 = vmatpush1.msra.mxu0 %v395
        %478 = vmatprep.subr.mxu0 0.0
        %479 = vmatpush1.msra.mxu0 %v396
        %480 = vmatprep.subr.mxu0 0.0
        %481 = vmatpush1.msra.mxu0 %v397
        %482 = vmatprep.subr.mxu0 0.0
        %483 = vmatpush1.msra.mxu0 %v398
        %484 = vmatprep.subr.mxu0 0.0
        %485 = vmatpush1.msra.mxu0 %v399
        %486 = vmatprep.subr.mxu0 0.0
        %487 = vmatpush1.msra.mxu0 %v400
        %488 = vmatprep.mubr.f32.mxu0 %v352
        %489 = vmatmul.mubr.f32.gmra.mrb[0].mxu0 %v360
        %v490 = vpop.f32.mrb[0].mxu0
        %v491 = vadd.f32 %v422, %v490
        %v492 = vpop.f32.mrb[0].mxu0
        %493 = vdwg.mxu0
        %494 = vmatprep.subr.mxu0 0.0
        %495 = vmatpush1.msra.mxu0 %v401
        %496 = vmatprep.subr.mxu0 0.0
        %497 = vmatpush1.msra.mxu0 %v402
        %498 = vmatprep.subr.mxu0 0.0
        %499 = vmatpush1.msra.mxu0 %v403
        %500 = vmatprep.subr.mxu0 0.0
        %501 = vmatpush1.msra.mxu0 %v404
        %502 = vmatprep.subr.mxu0 0.0
        %503 = vmatpush1.msra.mxu0 %v405
        %504 = vmatprep.subr.mxu0 0.0
        %505 = vmatpush1.msra.mxu0 %v406
        %506 = vmatprep.subr.mxu0 0.0
        %507 = vmatpush1.msra.mxu0 %v407
        %508 = vmatprep.subr.mxu0 0.0
        %509 = vmatpush1.msra.mxu0 %v408
        %510 = vmatprep.subr.mxu0 0.0
        %511 = vmatpush1.msra.mxu0 %v409
        %512 = vmatprep.subr.mxu0 0.0
        %513 = vmatpush1.msra.mxu0 %v410
        %514 = vmatprep.subr.mxu0 0.0
        %515 = vmatpush1.msra.mxu0 %v411
        %516 = vmatprep.subr.mxu0 0.0
        %517 = vmatpush1.msra.mxu0 %v412
        %518 = vmatprep.subr.mxu0 0.0
        %519 = vmatpush1.msra.mxu0 %v413
        %520 = vmatprep.subr.mxu0 0.0
        %521 = vmatpush1.msra.mxu0 %v414
        %522 = vmatprep.subr.mxu0 0.0
        %523 = vmatpush1.msra.mxu0 %v415
        %524 = vmatprep.subr.mxu0 0.0
        %525 = vmatpush1.msra.mxu0 %v416
        %526 = vmatprep.subr.mxu0 0.0
        %527 = vmatpush1.msra.mxu0 0.0
        %528 = vmatprep.subr.mxu0 0.0
        %529 = vmatpush1.msra.mxu0 0.0
        %530 = vmatprep.subr.mxu0 0.0
        %531 = vmatpush1.msra.mxu0 0.0
        %532 = vmatprep.subr.mxu0 0.0
        %533 = vmatpush1.msra.mxu0 0.0
        %534 = vmatprep.subr.mxu0 0.0
        %535 = vmatpush1.msra.mxu0 0.0
        %536 = vmatprep.subr.mxu0 0.0
        %537 = vmatpush1.msra.mxu0 0.0
        %538 = vmatprep.subr.mxu0 0.0
        %539 = vmatpush1.msra.mxu0 0.0
        %540 = vmatprep.subr.mxu0 0.0
        %541 = vmatpush1.msra.mxu0 0.0
        %542 = vmatprep.subr.mxu0 0.0
        %543 = vmatpush1.msra.mxu0 0.0
        %544 = vmatprep.subr.mxu0 0.0
        %545 = vmatpush1.msra.mxu0 0.0
        %546 = vmatprep.subr.mxu0 0.0
        %547 = vmatpush1.msra.mxu0 0.0
        %548 = vmatprep.subr.mxu0 0.0
        %549 = vmatpush1.msra.mxu0 0.0
        %550 = vmatprep.subr.mxu0 0.0
        %551 = vmatpush1.msra.mxu0 0.0
        %552 = vmatprep.subr.mxu0 0.0
        %553 = vmatpush1.msra.mxu0 0.0
        %554 = vmatprep.subr.mxu0 0.0
        %555 = vmatpush1.msra.mxu0 0.0
        %556 = vmatprep.subr.mxu0 0.0
        %557 = vmatpush1.msra.mxu0 0.0
        %558 = vmatprep.mubr.f32.mxu0 0.0
        %559 = vmatmul.mubr.f32.gmra.mrb[0].mxu0 %v368
        %v560 = vpop.f32.mrb[0].mxu0
        %v561 = vadd.f32 %v491, %v560
        %v562 = vpop.f32.mrb[0].mxu0
        %563 = vdwg.mxu0
        %v564 = vmax.f32 %v561, 0.0
        %v565 = vrot.slane %v564, 6
        %v566 = vadd.s32 %v351, 4294967294
        %vm567 = vcmp.ge.s32.totalorder %v566, 0
        %vm568 = vcmp.lt.s32.totalorder %v566, 8
        %vm569 = vmand %vm567, %vm568
        %v570 = vsel %vm569, 1, 0
        %vm571 = vcmp.eq.s32.totalorder %v570, 1
        %v572 = vsel %vm571, %v565, 0.0
        %v573 = vrot.slane %v564, 7
        %v574 = vsel %vm359, %v573, 0.0
        %v575 = vrot.slane %v564, 1
        %v576 = vsel %vm367, %v575, 0.0
        %v577 = vrot.slane %v564, 2
        %v578 = vadd.s32 %v351, 2
        %vm579 = vcmp.ge.s32.totalorder %v578, 0
        %vm580 = vcmp.lt.s32.totalorder %v578, 8
        %vm581 = vmand %vm579, %vm580
        %v582 = vsel %vm581, 1, 0
        %vm583 = vcmp.eq.s32.totalorder %v582, 1
        %v584 = vsel %vm583, %v577, 0.0
        %v585 = vld [vmem:[#allocation7] sm:$0xff]
        %v586 = vld [vmem:[#allocation7 + $0x8] sm:$0xff]
        %v587 = vld [vmem:[#allocation7 + $0x10] sm:$0xff]
        %v588 = vld [vmem:[#allocation7 + $0x18] sm:$0xff]
        %v589 = vld [vmem:[#allocation7 + $0x20] sm:$0xff]
        %v590 = vld [vmem:[#allocation7 + $0x28] sm:$0xff]
        %v591 = vld [vmem:[#allocation7 + $0x30] sm:$0xff]
        %v592 = vld [vmem:[#allocation7 + $0x38] sm:$0xff]
        %v593 = vld [vmem:[#allocation7 + $0x40] sm:$0xff]
        %v594 = vld [vmem:[#allocation7 + $0x48] sm:$0xff]
        %v595 = vld [vmem:[#allocation7 + $0x50] sm:$0xff]
        %v596 = vld [vmem:[#allocation7 + $0x58] sm:$0xff]
        %v597 = vld [vmem:[#allocation7 + $0x60] sm:$0xff]
        %v598 = vld [vmem:[#allocation7 + $0x68] sm:$0xff]
        %v599 = vld [vmem:[#allocation7 + $0x70] sm:$0xff]
        %v600 = vld [vmem:[#allocation7 + $0x78] sm:$0xff]
        %v601 = vld [vmem:[#allocation7 + $0x80] sm:$0xff]
        %v602 = vld [vmem:[#allocation7 + $0x88] sm:$0xff]
        %v603 = vld [vmem:[#allocation7 + $0x90] sm:$0xff]
        %v604 = vld [vmem:[#allocation7 + $0x98] sm:$0xff]
        %v605 = vld [vmem:[#allocation7 + $0xa0] sm:$0xff]
        %v606 = vld [vmem:[#allocation7 + $0xa8] sm:$0xff]
        %v607 = vld [vmem:[#allocation7 + $0xb0] sm:$0xff]
        %v608 = vld [vmem:[#allocation7 + $0xb8] sm:$0xff]
        %v609 = vld [vmem:[#allocation7 + $0xc0] sm:$0xff]
        %v610 = vld [vmem:[#allocation7 + $0xc8] sm:$0xff]
        %v611 = vld [vmem:[#allocation7 + $0xd0] sm:$0xff]
        %v612 = vld [vmem:[#allocation7 + $0xd8] sm:$0xff]
        %v613 = vld [vmem:[#allocation7 + $0xe0] sm:$0xff]
        %v614 = vld [vmem:[#allocation7 + $0xe8] sm:$0xff]
        %v615 = vld [vmem:[#allocation7 + $0xf0] sm:$0xff]
        %v616 = vld [vmem:[#allocation7 + $0xf8] sm:$0xff]
        %v617 = vld [vmem:[#allocation7 + $0x100] sm:$0xff]
        %v618 = vld [vmem:[#allocation7 + $0x108] sm:$0xff]
        %v619 = vld [vmem:[#allocation7 + $0x110] sm:$0xff]
        %v620 = vld [vmem:[#allocation7 + $0x118] sm:$0xff]
        %v621 = vld [vmem:[#allocation7 + $0x120] sm:$0xff]
        %v622 = vld [vmem:[#allocation7 + $0x128] sm:$0xff]
        %v623 = vld [vmem:[#allocation7 + $0x130] sm:$0xff]
        %v624 = vld [vmem:[#allocation7 + $0x138] sm:$0xff]
        %v625 = vld [vmem:[#allocation7 + $0x140] sm:$0xff]
        %v626 = vld [vmem:[#allocation7 + $0x148] sm:$0xff]
        %v627 = vld [vmem:[#allocation7 + $0x150] sm:$0xff]
        %v628 = vld [vmem:[#allocation7 + $0x158] sm:$0xff]
        %v629 = vld [vmem:[#allocation7 + $0x160] sm:$0xff]
        %v630 = vld [vmem:[#allocation7 + $0x168] sm:$0xff]
        %v631 = vld [vmem:[#allocation7 + $0x170] sm:$0xff]
        %v632 = vld [vmem:[#allocation7 + $0x178] sm:$0xff]
        %v633 = vld [vmem:[#allocation7 + $0x180] sm:$0xff]
        %v634 = vld [vmem:[#allocation7 + $0x188] sm:$0xff]
        %v635 = vld [vmem:[#allocation7 + $0x190] sm:$0xff]
        %v636 = vld [vmem:[#allocation7 + $0x198] sm:$0xff]
        %v637 = vld [vmem:[#allocation7 + $0x1a0] sm:$0xff]
        %v638 = vld [vmem:[#allocation7 + $0x1a8] sm:$0xff]
        %v639 = vld [vmem:[#allocation7 + $0x1b0] sm:$0xff]
        %v640 = vld [vmem:[#allocation7 + $0x1b8] sm:$0xff]
        %v641 = vld [vmem:[#allocation7 + $0x1c0] sm:$0xff]
        %v642 = vld [vmem:[#allocation7 + $0x1c8] sm:$0xff]
        %v643 = vld [vmem:[#allocation7 + $0x1d0] sm:$0xff]
        %v644 = vld [vmem:[#allocation7 + $0x1d8] sm:$0xff]
        %v645 = vld [vmem:[#allocation7 + $0x1e0] sm:$0xff]
        %v646 = vld [vmem:[#allocation7 + $0x1e8] sm:$0xff]
        %v647 = vld [vmem:[#allocation7 + $0x1f0] sm:$0xff]
        %v648 = vld [vmem:[#allocation7 + $0x1f8] sm:$0xff]
        %v649 = vld [vmem:[#allocation7 + $0x200] sm:$0xff]
        %v650 = vld [vmem:[#allocation7 + $0x208] sm:$0xff]
        %v651 = vld [vmem:[#allocation7 + $0x210] sm:$0xff]
        %v652 = vld [vmem:[#allocation7 + $0x218] sm:$0xff]
        %v653 = vld [vmem:[#allocation7 + $0x220] sm:$0xff]
        %v654 = vld [vmem:[#allocation7 + $0x228] sm:$0xff]
        %v655 = vld [vmem:[#allocation7 + $0x230] sm:$0xff]
        %v656 = vld [vmem:[#allocation7 + $0x238] sm:$0xff]
        %v657 = vld [vmem:[#allocation7 + $0x240] sm:$0xff]
        %v658 = vld [vmem:[#allocation7 + $0x248] sm:$0xff]
        %v659 = vld [vmem:[#allocation7 + $0x250] sm:$0xff]
        %v660 = vld [vmem:[#allocation7 + $0x258] sm:$0xff]
        %v661 = vld [vmem:[#allocation7 + $0x260] sm:$0xff]
        %v662 = vld [vmem:[#allocation7 + $0x268] sm:$0xff]
        %v663 = vld [vmem:[#allocation7 + $0x270] sm:$0xff]
        %v664 = vld [vmem:[#allocation7 + $0x278] sm:$0xff]
        %v665 = vld [vmem:[%s4] sm:$0x1]
        %v667 = vlaneseq
        %v668 = vshrl.u32 %v667, 7
        %v669 = vsub.s32 0, %v668
        %v670 = vrot.slane %v665, %v669
        %672 = vmatprep.subr.mxu0 0.0
        %673 = vmatpush1.msra.mxu0 %v585
        %674 = vmatprep.subr.mxu0 0.0
        %675 = vmatpush1.msra.mxu0 %v586
        %676 = vmatprep.subr.mxu0 0.0
        %677 = vmatpush1.msra.mxu0 %v587
        %678 = vmatprep.subr.mxu0 0.0
        %679 = vmatpush1.msra.mxu0 %v588
        %680 = vmatprep.subr.mxu0 0.0
        %681 = vmatpush1.msra.mxu0 %v589
        %682 = vmatprep.subr.mxu0 0.0
        %683 = vmatpush1.msra.mxu0 %v590
        %684 = vmatprep.subr.mxu0 0.0
        %685 = vmatpush1.msra.mxu0 %v591
        %686 = vmatprep.subr.mxu0 0.0
        %687 = vmatpush1.msra.mxu0 %v592
        %688 = vmatprep.subr.mxu0 0.0
        %689 = vmatpush1.msra.mxu0 %v593
        %690 = vmatprep.subr.mxu0 0.0
        %691 = vmatpush1.msra.mxu0 %v594
        %692 = vmatprep.subr.mxu0 0.0
        %693 = vmatpush1.msra.mxu0 %v595
        %694 = vmatprep.subr.mxu0 0.0
        %695 = vmatpush1.msra.mxu0 %v596
        %696 = vmatprep.subr.mxu0 0.0
        %697 = vmatpush1.msra.mxu0 %v597
        %698 = vmatprep.subr.mxu0 0.0
        %699 = vmatpush1.msra.mxu0 %v598
        %700 = vmatprep.subr.mxu0 0.0
        %701 = vmatpush1.msra.mxu0 %v599
        %702 = vmatprep.subr.mxu0 0.0
        %703 = vmatpush1.msra.mxu0 %v600
        %704 = vmatprep.subr.mxu0 0.0
        %705 = vmatpush1.msra.mxu0 %v601
        %706 = vmatprep.subr.mxu0 0.0
        %707 = vmatpush1.msra.mxu0 %v602
        %708 = vmatprep.subr.mxu0 0.0
        %709 = vmatpush1.msra.mxu0 %v603
        %710 = vmatprep.subr.mxu0 0.0
        %711 = vmatpush1.msra.mxu0 %v604
        %712 = vmatprep.subr.mxu0 0.0
        %713 = vmatpush1.msra.mxu0 %v605
        %714 = vmatprep.subr.mxu0 0.0
        %715 = vmatpush1.msra.mxu0 %v606
        %716 = vmatprep.subr.mxu0 0.0
        %717 = vmatpush1.msra.mxu0 %v607
        %718 = vmatprep.subr.mxu0 0.0
        %719 = vmatpush1.msra.mxu0 %v608
        %720 = vmatprep.subr.mxu0 0.0
        %721 = vmatpush1.msra.mxu0 %v609
        %722 = vmatprep.subr.mxu0 0.0
        %723 = vmatpush1.msra.mxu0 %v610
        %724 = vmatprep.subr.mxu0 0.0
        %725 = vmatpush1.msra.mxu0 %v611
        %726 = vmatprep.subr.mxu0 0.0
        %727 = vmatpush1.msra.mxu0 %v612
        %728 = vmatprep.subr.mxu0 0.0
        %729 = vmatpush1.msra.mxu0 %v613
        %730 = vmatprep.subr.mxu0 0.0
        %731 = vmatpush1.msra.mxu0 %v614
        %732 = vmatprep.subr.mxu0 0.0
        %733 = vmatpush1.msra.mxu0 %v615
        %734 = vmatprep.subr.mxu0 0.0
        %735 = vmatpush1.msra.mxu0 %v616
        %736 = vmatprep.mubr.f32.mxu0 %v574
        %737 = vmatmul.mubr.f32.gmra.mrb[0].mxu0 %v572
        %v738 = vpop.f32.mrb[0].mxu0
        %v739 = vadd.f32 %v670, %v738
        %v740 = vpop.f32.mrb[0].mxu0
        %741 = vdwg.mxu0
        %742 = vmatprep.subr.mxu0 0.0
        %743 = vmatpush1.msra.mxu0 %v617
        %744 = vmatprep.subr.mxu0 0.0
        %745 = vmatpush1.msra.mxu0 %v618
        %746 = vmatprep.subr.mxu0 0.0
        %747 = vmatpush1.msra.mxu0 %v619
        %748 = vmatprep.subr.mxu0 0.0
        %749 = vmatpush1.msra.mxu0 %v620
        %750 = vmatprep.subr.mxu0 0.0
        %751 = vmatpush1.msra.mxu0 %v621
        %752 = vmatprep.subr.mxu0 0.0
        %753 = vmatpush1.msra.mxu0 %v622
        %754 = vmatprep.subr.mxu0 0.0
        %755 = vmatpush1.msra.mxu0 %v623
        %756 = vmatprep.subr.mxu0 0.0
        %757 = vmatpush1.msra.mxu0 %v624
        %758 = vmatprep.subr.mxu0 0.0
        %759 = vmatpush1.msra.mxu0 %v625
        %760 = vmatprep.subr.mxu0 0.0
        %761 = vmatpush1.msra.mxu0 %v626
        %762 = vmatprep.subr.mxu0 0.0
        %763 = vmatpush1.msra.mxu0 %v627
        %764 = vmatprep.subr.mxu0 0.0
        %765 = vmatpush1.msra.mxu0 %v628
        %766 = vmatprep.subr.mxu0 0.0
        %767 = vmatpush1.msra.mxu0 %v629
        %768 = vmatprep.subr.mxu0 0.0
        %769 = vmatpush1.msra.mxu0 %v630
        %770 = vmatprep.subr.mxu0 0.0
        %771 = vmatpush1.msra.mxu0 %v631
        %772 = vmatprep.subr.mxu0 0.0
        %773 = vmatpush1.msra.mxu0 %v632
        %774 = vmatprep.subr.mxu0 0.0
        %775 = vmatpush1.msra.mxu0 %v633
        %776 = vmatprep.subr.mxu0 0.0
        %777 = vmatpush1.msra.mxu0 %v634
        %778 = vmatprep.subr.mxu0 0.0
        %779 = vmatpush1.msra.mxu0 %v635
        %780 = vmatprep.subr.mxu0 0.0
        %781 = vmatpush1.msra.mxu0 %v636
        %782 = vmatprep.subr.mxu0 0.0
        %783 = vmatpush1.msra.mxu0 %v637
        %784 = vmatprep.subr.mxu0 0.0
        %785 = vmatpush1.msra.mxu0 %v638
        %786 = vmatprep.subr.mxu0 0.0
        %787 = vmatpush1.msra.mxu0 %v639
        %788 = vmatprep.subr.mxu0 0.0
        %789 = vmatpush1.msra.mxu0 %v640
        %790 = vmatprep.subr.mxu0 0.0
        %791 = vmatpush1.msra.mxu0 %v641
        %792 = vmatprep.subr.mxu0 0.0
        %793 = vmatpush1.msra.mxu0 %v642
        %794 = vmatprep.subr.mxu0 0.0
        %795 = vmatpush1.msra.mxu0 %v643
        %796 = vmatprep.subr.mxu0 0.0
        %797 = vmatpush1.msra.mxu0 %v644
        %798 = vmatprep.subr.mxu0 0.0
        %799 = vmatpush1.msra.mxu0 %v645
        %800 = vmatprep.subr.mxu0 0.0
        %801 = vmatpush1.msra.mxu0 %v646
        %802 = vmatprep.subr.mxu0 0.0
        %803 = vmatpush1.msra.mxu0 %v647
        %804 = vmatprep.subr.mxu0 0.0
        %805 = vmatpush1.msra.mxu0 %v648
        %806 = vmatprep.mubr.f32.mxu0 %v576
        %807 = vmatmul.mubr.f32.gmra.mrb[0].mxu0 %v564
        %v808 = vpop.f32.mrb[0].mxu0
        %v809 = vadd.f32 %v739, %v808
        %v810 = vpop.f32.mrb[0].mxu0
        %811 = vdwg.mxu0
        %812 = vmatprep.subr.mxu0 0.0
        %813 = vmatpush1.msra.mxu0 %v649
        %814 = vmatprep.subr.mxu0 0.0
        %815 = vmatpush1.msra.mxu0 %v650
        %816 = vmatprep.subr.mxu0 0.0
        %817 = vmatpush1.msra.mxu0 %v651
        %818 = vmatprep.subr.mxu0 0.0
        %819 = vmatpush1.msra.mxu0 %v652
        %820 = vmatprep.subr.mxu0 0.0
        %821 = vmatpush1.msra.mxu0 %v653
        %822 = vmatprep.subr.mxu0 0.0
        %823 = vmatpush1.msra.mxu0 %v654
        %824 = vmatprep.subr.mxu0 0.0
        %825 = vmatpush1.msra.mxu0 %v655
        %826 = vmatprep.subr.mxu0 0.0
        %827 = vmatpush1.msra.mxu0 %v656
        %828 = vmatprep.subr.mxu0 0.0
        %829 = vmatpush1.msra.mxu0 %v657
        %830 = vmatprep.subr.mxu0 0.0
        %831 = vmatpush1.msra.mxu0 %v658
        %832 = vmatprep.subr.mxu0 0.0
        %833 = vmatpush1.msra.mxu0 %v659
        %834 = vmatprep.subr.mxu0 0.0
        %835 = vmatpush1.msra.mxu0 %v660
        %836 = vmatprep.subr.mxu0 0.0
        %837 = vmatpush1.msra.mxu0 %v661
        %838 = vmatprep.subr.mxu0 0.0
        %839 = vmatpush1.msra.mxu0 %v662
        %840 = vmatprep.subr.mxu0 0.0
        %841 = vmatpush1.msra.mxu0 %v663
        %842 = vmatprep.subr.mxu0 0.0
        %843 = vmatpush1.msra.mxu0 %v664
        %844 = vmatprep.subr.mxu0 0.0
        %845 = vmatpush1.msra.mxu0 0.0
        %846 = vmatprep.subr.mxu0 0.0
        %847 = vmatpush1.msra.mxu0 0.0
        %848 = vmatprep.subr.mxu0 0.0
        %849 = vmatpush1.msra.mxu0 0.0
        %850 = vmatprep.subr.mxu0 0.0
        %851 = vmatpush1.msra.mxu0 0.0
        %852 = vmatprep.subr.mxu0 0.0
        %853 = vmatpush1.msra.mxu0 0.0
        %854 = vmatprep.subr.mxu0 0.0
        %855 = vmatpush1.msra.mxu0 0.0
        %856 = vmatprep.subr.mxu0 0.0
        %857 = vmatpush1.msra.mxu0 0.0
        %858 = vmatprep.subr.mxu0 0.0
        %859 = vmatpush1.msra.mxu0 0.0
        %860 = vmatprep.subr.mxu0 0.0
        %861 = vmatpush1.msra.mxu0 0.0
        %862 = vmatprep.subr.mxu0 0.0
        %863 = vmatpush1.msra.mxu0 0.0
        %864 = vmatprep.subr.mxu0 0.0
        %865 = vmatpush1.msra.mxu0 0.0
        %866 = vmatprep.subr.mxu0 0.0
        %867 = vmatpush1.msra.mxu0 0.0
        %868 = vmatprep.subr.mxu0 0.0
        %869 = vmatpush1.msra.mxu0 0.0
        %870 = vmatprep.subr.mxu0 0.0
        %871 = vmatpush1.msra.mxu0 0.0
        %872 = vmatprep.subr.mxu0 0.0
        %873 = vmatpush1.msra.mxu0 0.0
        %874 = vmatprep.subr.mxu0 0.0
        %875 = vmatpush1.msra.mxu0 0.0
        %876 = vmatprep.mubr.f32.mxu0 0.0
        %877 = vmatmul.mubr.f32.gmra.mrb[0].mxu0 %v584
        %v878 = vpop.f32.mrb[0].mxu0
        %v879 = vadd.f32 %v809, %v878
        %v880 = vpop.f32.mrb[0].mxu0
        %881 = vdwg.mxu0
        %v882 = vmax.f32 %v879, 0.0
        %v883 = vadd.f32 %v564, %v882
        %v884 = vrot.slane %v882, 5
        %v885 = vadd.s32 %v351, 4294967293
        %vm886 = vcmp.ge.s32.totalorder %v885, 0
        %vm887 = vcmp.lt.s32.totalorder %v885, 8
        %vm888 = vmand %vm886, %vm887
        %v889 = vsel %vm888, 1, 0
        %vm890 = vcmp.eq.s32.totalorder %v889, 1
        %v891 = vsel %vm890, %v884, 0.0
        %v892 = vrot.slane %v882, 6
        %v893 = vsel %vm571, %v892, 0.0
        %v894 = vrot.slane %v882, 7
        %v895 = vsel %vm359, %v894, 0.0
        %v896 = vrot.slane %v882, 1
        %v897 = vsel %vm367, %v896, 0.0
        %v898 = vrot.slane %v882, 2
        %v899 = vsel %vm583, %v898, 0.0
        %v900 = vrot.slane %v882, 3
        %v901 = vadd.s32 %v351, 3
        %vm902 = vcmp.ge.s32.totalorder %v901, 0
        %vm903 = vcmp.lt.s32.totalorder %v901, 8
        %vm904 = vmand %vm902, %vm903
        %v905 = vsel %vm904, 1, 0
        %vm906 = vcmp.eq.s32.totalorder %v905, 1
        %v907 = vsel %vm906, %v900, 0.0
        %v908 = vld [vmem:[#allocation8] sm:$0xff]
        %v909 = vld [vmem:[#allocation8 + $0x8] sm:$0xff]
        %v910 = vld [vmem:[#allocation8 + $0x10] sm:$0xff]
        %v911 = vld [vmem:[#allocation8 + $0x18] sm:$0xff]
        %v912 = vld [vmem:[#allocation8 + $0x20] sm:$0xff]
        %v913 = vld [vmem:[#allocation8 + $0x28] sm:$0xff]
        %v914 = vld [vmem:[#allocation8 + $0x30] sm:$0xff]
        %v915 = vld [vmem:[#allocation8 + $0x38] sm:$0xff]
        %v916 = vld [vmem:[#allocation8 + $0x40] sm:$0xff]
        %v917 = vld [vmem:[#allocation8 + $0x48] sm:$0xff]
        %v918 = vld [vmem:[#allocation8 + $0x50] sm:$0xff]
        %v919 = vld [vmem:[#allocation8 + $0x58] sm:$0xff]
        %v920 = vld [vmem:[#allocation8 + $0x60] sm:$0xff]
        %v921 = vld [vmem:[#allocation8 + $0x68] sm:$0xff]
        %v922 = vld [vmem:[#allocation8 + $0x70] sm:$0xff]
        %v923 = vld [vmem:[#allocation8 + $0x78] sm:$0xff]
        %v924 = vld [vmem:[#allocation8 + $0x80] sm:$0xff]
        %v925 = vld [vmem:[#allocation8 + $0x88] sm:$0xff]
        %v926 = vld [vmem:[#allocation8 + $0x90] sm:$0xff]
        %v927 = vld [vmem:[#allocation8 + $0x98] sm:$0xff]
        %v928 = vld [vmem:[#allocation8 + $0xa0] sm:$0xff]
        %v929 = vld [vmem:[#allocation8 + $0xa8] sm:$0xff]
        %v930 = vld [vmem:[#allocation8 + $0xb0] sm:$0xff]
        %v931 = vld [vmem:[#allocation8 + $0xb8] sm:$0xff]
        %v932 = vld [vmem:[#allocation8 + $0xc0] sm:$0xff]
        %v933 = vld [vmem:[#allocation8 + $0xc8] sm:$0xff]
        %v934 = vld [vmem:[#allocation8 + $0xd0] sm:$0xff]
        %v935 = vld [vmem:[#allocation8 + $0xd8] sm:$0xff]
        %v936 = vld [vmem:[#allocation8 + $0xe0] sm:$0xff]
        %v937 = vld [vmem:[#allocation8 + $0xe8] sm:$0xff]
        %v938 = vld [vmem:[#allocation8 + $0xf0] sm:$0xff]
        %v939 = vld [vmem:[#allocation8 + $0xf8] sm:$0xff]
        %v940 = vld [vmem:[#allocation8 + $0x100] sm:$0xff]
        %v941 = vld [vmem:[#allocation8 + $0x108] sm:$0xff]
        %v942 = vld [vmem:[#allocation8 + $0x110] sm:$0xff]
        %v943 = vld [vmem:[#allocation8 + $0x118] sm:$0xff]
        %v944 = vld [vmem:[#allocation8 + $0x120] sm:$0xff]
        %v945 = vld [vmem:[#allocation8 + $0x128] sm:$0xff]
        %v946 = vld [vmem:[#allocation8 + $0x130] sm:$0xff]
        %v947 = vld [vmem:[#allocation8 + $0x138] sm:$0xff]
        %v948 = vld [vmem:[#allocation8 + $0x140] sm:$0xff]
        %v949 = vld [vmem:[#allocation8 + $0x148] sm:$0xff]
        %v950 = vld [vmem:[#allocation8 + $0x150] sm:$0xff]
        %v951 = vld [vmem:[#allocation8 + $0x158] sm:$0xff]
        %v952 = vld [vmem:[#allocation8 + $0x160] sm:$0xff]
        %v953 = vld [vmem:[#allocation8 + $0x168] sm:$0xff]
        %v954 = vld [vmem:[#allocation8 + $0x170] sm:$0xff]
        %v955 = vld [vmem:[#allocation8 + $0x178] sm:$0xff]
        %v956 = vld [vmem:[#allocation8 + $0x180] sm:$0xff]
        %v957 = vld [vmem:[#allocation8 + $0x188] sm:$0xff]
        %v958 = vld [vmem:[#allocation8 + $0x190] sm:$0xff]
        %v959 = vld [vmem:[#allocation8 + $0x198] sm:$0xff]
        %v960 = vld [vmem:[#allocation8 + $0x1a0] sm:$0xff]
        %v961 = vld [vmem:[#allocation8 + $0x1a8] sm:$0xff]
        %v962 = vld [vmem:[#allocation8 + $0x1b0] sm:$0xff]
        %v963 = vld [vmem:[#allocation8 + $0x1b8] sm:$0xff]
        %v964 = vld [vmem:[#allocation8 + $0x1c0] sm:$0xff]
        %v965 = vld [vmem:[#allocation8 + $0x1c8] sm:$0xff]
        %v966 = vld [vmem:[#allocation8 + $0x1d0] sm:$0xff]
        %v967 = vld [vmem:[#allocation8 + $0x1d8] sm:$0xff]
        %v968 = vld [vmem:[#allocation8 + $0x1e0] sm:$0xff]
        %v969 = vld [vmem:[#allocation8 + $0x1e8] sm:$0xff]
        %v970 = vld [vmem:[#allocation8 + $0x1f0] sm:$0xff]
        %v971 = vld [vmem:[#allocation8 + $0x1f8] sm:$0xff]
        %v972 = vld [vmem:[#allocation8 + $0x200] sm:$0xff]
        %v973 = vld [vmem:[#allocation8 + $0x208] sm:$0xff]
        %v974 = vld [vmem:[#allocation8 + $0x210] sm:$0xff]
        %v975 = vld [vmem:[#allocation8 + $0x218] sm:$0xff]
        %v976 = vld [vmem:[#allocation8 + $0x220] sm:$0xff]
        %v977 = vld [vmem:[#allocation8 + $0x228] sm:$0xff]
        %v978 = vld [vmem:[#allocation8 + $0x230] sm:$0xff]
        %v979 = vld [vmem:[#allocation8 + $0x238] sm:$0xff]
        %v980 = vld [vmem:[#allocation8 + $0x240] sm:$0xff]
        %v981 = vld [vmem:[#allocation8 + $0x248] sm:$0xff]
        %v982 = vld [vmem:[#allocation8 + $0x250] sm:$0xff]
        %v983 = vld [vmem:[#allocation8 + $0x258] sm:$0xff]
        %v984 = vld [vmem:[#allocation8 + $0x260] sm:$0xff]
        %v985 = vld [vmem:[#allocation8 + $0x268] sm:$0xff]
        %v986 = vld [vmem:[#allocation8 + $0x270] sm:$0xff]
        %v987 = vld [vmem:[#allocation8 + $0x278] sm:$0xff]
        %v988 = vld [vmem:[#allocation8 + $0x280] sm:$0xff]
        %v989 = vld [vmem:[#allocation8 + $0x288] sm:$0xff]
        %v990 = vld [vmem:[#allocation8 + $0x290] sm:$0xff]
        %v991 = vld [vmem:[#allocation8 + $0x298] sm:$0xff]
        %v992 = vld [vmem:[#allocation8 + $0x2a0] sm:$0xff]
        %v993 = vld [vmem:[#allocation8 + $0x2a8] sm:$0xff]
        %v994 = vld [vmem:[#allocation8 + $0x2b0] sm:$0xff]
        %v995 = vld [vmem:[#allocation8 + $0x2b8] sm:$0xff]
        %v996 = vld [vmem:[#allocation8 + $0x2c0] sm:$0xff]
        %v997 = vld [vmem:[#allocation8 + $0x2c8] sm:$0xff]
        %v998 = vld [vmem:[#allocation8 + $0x2d0] sm:$0xff]
        %v999 = vld [vmem:[#allocation8 + $0x2d8] sm:$0xff]
        %v1000 = vld [vmem:[#allocation8 + $0x2e0] sm:$0xff]
        %v1001 = vld [vmem:[#allocation8 + $0x2e8] sm:$0xff]
        %v1002 = vld [vmem:[#allocation8 + $0x2f0] sm:$0xff]
        %v1003 = vld [vmem:[#allocation8 + $0x2f8] sm:$0xff]
        %v1004 = vld [vmem:[#allocation8 + $0x300] sm:$0xff]
        %v1005 = vld [vmem:[#allocation8 + $0x308] sm:$0xff]
        %v1006 = vld [vmem:[#allocation8 + $0x310] sm:$0xff]
        %v1007 = vld [vmem:[#allocation8 + $0x318] sm:$0xff]
        %v1008 = vld [vmem:[#allocation8 + $0x320] sm:$0xff]
        %v1009 = vld [vmem:[#allocation8 + $0x328] sm:$0xff]
        %v1010 = vld [vmem:[#allocation8 + $0x330] sm:$0xff]
        %v1011 = vld [vmem:[#allocation8 + $0x338] sm:$0xff]
        %v1012 = vld [vmem:[#allocation8 + $0x340] sm:$0xff]
        %v1013 = vld [vmem:[#allocation8 + $0x348] sm:$0xff]
        %v1014 = vld [vmem:[#allocation8 + $0x350] sm:$0xff]
        %v1015 = vld [vmem:[#allocation8 + $0x358] sm:$0xff]
        %v1016 = vld [vmem:[#allocation8 + $0x360] sm:$0xff]
        %v1017 = vld [vmem:[#allocation8 + $0x368] sm:$0xff]
        %v1018 = vld [vmem:[#allocation8 + $0x370] sm:$0xff]
        %v1019 = vld [vmem:[#allocation8 + $0x378] sm:$0xff]
        %v1020 = vld [vmem:[%s6] sm:$0x1]
        %v1022 = vlaneseq
        %v1023 = vshrl.u32 %v1022, 7
        %v1024 = vsub.s32 0, %v1023
        %v1025 = vrot.slane %v1020, %v1024
        %1027 = vmatprep.subr.mxu0 0.0
        %1028 = vmatpush1.msra.mxu0 %v908
        %1029 = vmatprep.subr.mxu0 0.0
        %1030 = vmatpush1.msra.mxu0 %v909
        %1031 = vmatprep.subr.mxu0 0.0
        %1032 = vmatpush1.msra.mxu0 %v910
        %1033 = vmatprep.subr.mxu0 0.0
        %1034 = vmatpush1.msra.mxu0 %v911
        %1035 = vmatprep.subr.mxu0 0.0
        %1036 = vmatpush1.msra.mxu0 %v912
        %1037 = vmatprep.subr.mxu0 0.0
        %1038 = vmatpush1.msra.mxu0 %v913
        %1039 = vmatprep.subr.mxu0 0.0
        %1040 = vmatpush1.msra.mxu0 %v914
        %1041 = vmatprep.subr.mxu0 0.0
        %1042 = vmatpush1.msra.mxu0 %v915
        %1043 = vmatprep.subr.mxu0 0.0
        %1044 = vmatpush1.msra.mxu0 %v916
        %1045 = vmatprep.subr.mxu0 0.0
        %1046 = vmatpush1.msra.mxu0 %v917
        %1047 = vmatprep.subr.mxu0 0.0
        %1048 = vmatpush1.msra.mxu0 %v918
        %1049 = vmatprep.subr.mxu0 0.0
        %1050 = vmatpush1.msra.mxu0 %v919
        %1051 = vmatprep.subr.mxu0 0.0
        %1052 = vmatpush1.msra.mxu0 %v920
        %1053 = vmatprep.subr.mxu0 0.0
        %1054 = vmatpush1.msra.mxu0 %v921
        %1055 = vmatprep.subr.mxu0 0.0
        %1056 = vmatpush1.msra.mxu0 %v922
        %1057 = vmatprep.subr.mxu0 0.0
        %1058 = vmatpush1.msra.mxu0 %v923
        %1059 = vmatprep.subr.mxu0 0.0
        %1060 = vmatpush1.msra.mxu0 %v924
        %1061 = vmatprep.subr.mxu0 0.0
        %1062 = vmatpush1.msra.mxu0 %v925
        %1063 = vmatprep.subr.mxu0 0.0
        %1064 = vmatpush1.msra.mxu0 %v926
        %1065 = vmatprep.subr.mxu0 0.0
        %1066 = vmatpush1.msra.mxu0 %v927
        %1067 = vmatprep.subr.mxu0 0.0
        %1068 = vmatpush1.msra.mxu0 %v928
        %1069 = vmatprep.subr.mxu0 0.0
        %1070 = vmatpush1.msra.mxu0 %v929
        %1071 = vmatprep.subr.mxu0 0.0
        %1072 = vmatpush1.msra.mxu0 %v930
        %1073 = vmatprep.subr.mxu0 0.0
        %1074 = vmatpush1.msra.mxu0 %v931
        %1075 = vmatprep.subr.mxu0 0.0
        %1076 = vmatpush1.msra.mxu0 %v932
        %1077 = vmatprep.subr.mxu0 0.0
        %1078 = vmatpush1.msra.mxu0 %v933
        %1079 = vmatprep.subr.mxu0 0.0
        %1080 = vmatpush1.msra.mxu0 %v934
        %1081 = vmatprep.subr.mxu0 0.0
        %1082 = vmatpush1.msra.mxu0 %v935
        %1083 = vmatprep.subr.mxu0 0.0
        %1084 = vmatpush1.msra.mxu0 %v936
        %1085 = vmatprep.subr.mxu0 0.0
        %1086 = vmatpush1.msra.mxu0 %v937
        %1087 = vmatprep.subr.mxu0 0.0
        %1088 = vmatpush1.msra.mxu0 %v938
        %1089 = vmatprep.subr.mxu0 0.0
        %1090 = vmatpush1.msra.mxu0 %v939
        %1091 = vmatprep.mubr.f32.mxu0 %v893
        %1092 = vmatmul.mubr.f32.gmra.mrb[0].mxu0 %v891
        %v1093 = vpop.f32.mrb[0].mxu0
        %v1094 = vadd.f32 %v1025, %v1093
        %v1095 = vpop.f32.mrb[0].mxu0
        %1096 = vdwg.mxu0
        %1097 = vmatprep.subr.mxu0 0.0
        %1098 = vmatpush1.msra.mxu0 %v940
        %1099 = vmatprep.subr.mxu0 0.0
        %1100 = vmatpush1.msra.mxu0 %v941
        %1101 = vmatprep.subr.mxu0 0.0
        %1102 = vmatpush1.msra.mxu0 %v942
        %1103 = vmatprep.subr.mxu0 0.0
        %1104 = vmatpush1.msra.mxu0 %v943
        %1105 = vmatprep.subr.mxu0 0.0
        %1106 = vmatpush1.msra.mxu0 %v944
        %1107 = vmatprep.subr.mxu0 0.0
        %1108 = vmatpush1.msra.mxu0 %v945
        %1109 = vmatprep.subr.mxu0 0.0
        %1110 = vmatpush1.msra.mxu0 %v946
        %1111 = vmatprep.subr.mxu0 0.0
        %1112 = vmatpush1.msra.mxu0 %v947
        %1113 = vmatprep.subr.mxu0 0.0
        %1114 = vmatpush1.msra.mxu0 %v948
        %1115 = vmatprep.subr.mxu0 0.0
        %1116 = vmatpush1.msra.mxu0 %v949
        %1117 = vmatprep.subr.mxu0 0.0
        %1118 = vmatpush1.msra.mxu0 %v950
        %1119 = vmatprep.subr.mxu0 0.0
        %1120 = vmatpush1.msra.mxu0 %v951
        %1121 = vmatprep.subr.mxu0 0.0
        %1122 = vmatpush1.msra.mxu0 %v952
        %1123 = vmatprep.subr.mxu0 0.0
        %1124 = vmatpush1.msra.mxu0 %v953
        %1125 = vmatprep.subr.mxu0 0.0
        %1126 = vmatpush1.msra.mxu0 %v954
        %1127 = vmatprep.subr.mxu0 0.0
        %1128 = vmatpush1.msra.mxu0 %v955
        %1129 = vmatprep.subr.mxu0 0.0
        %1130 = vmatpush1.msra.mxu0 %v956
        %1131 = vmatprep.subr.mxu0 0.0
        %1132 = vmatpush1.msra.mxu0 %v957
        %1133 = vmatprep.subr.mxu0 0.0
        %1134 = vmatpush1.msra.mxu0 %v958
        %1135 = vmatprep.subr.mxu0 0.0
        %1136 = vmatpush1.msra.mxu0 %v959
        %1137 = vmatprep.subr.mxu0 0.0
        %1138 = vmatpush1.msra.mxu0 %v960
        %1139 = vmatprep.subr.mxu0 0.0
        %1140 = vmatpush1.msra.mxu0 %v961
        %1141 = vmatprep.subr.mxu0 0.0
        %1142 = vmatpush1.msra.mxu0 %v962
        %1143 = vmatprep.subr.mxu0 0.0
        %1144 = vmatpush1.msra.mxu0 %v963
        %1145 = vmatprep.subr.mxu0 0.0
        %1146 = vmatpush1.msra.mxu0 %v964
        %1147 = vmatprep.subr.mxu0 0.0
        %1148 = vmatpush1.msra.mxu0 %v965
        %1149 = vmatprep.subr.mxu0 0.0
        %1150 = vmatpush1.msra.mxu0 %v966
        %1151 = vmatprep.subr.mxu0 0.0
        %1152 = vmatpush1.msra.mxu0 %v967
        %1153 = vmatprep.subr.mxu0 0.0
        %1154 = vmatpush1.msra.mxu0 %v968
        %1155 = vmatprep.subr.mxu0 0.0
        %1156 = vmatpush1.msra.mxu0 %v969
        %1157 = vmatprep.subr.mxu0 0.0
        %1158 = vmatpush1.msra.mxu0 %v970
        %1159 = vmatprep.subr.mxu0 0.0
        %1160 = vmatpush1.msra.mxu0 %v971
        %1161 = vmatprep.mubr.f32.mxu0 %v882
        %1162 = vmatmul.mubr.f32.gmra.mrb[0].mxu0 %v895
        %v1163 = vpop.f32.mrb[0].mxu0
        %v1164 = vadd.f32 %v1094, %v1163
        %v1165 = vpop.f32.mrb[0].mxu0
        %1166 = vdwg.mxu0
        %1167 = vmatprep.subr.mxu0 0.0
        %1168 = vmatpush1.msra.mxu0 %v972
        %1169 = vmatprep.subr.mxu0 0.0
        %1170 = vmatpush1.msra.mxu0 %v973
        %1171 = vmatprep.subr.mxu0 0.0
        %1172 = vmatpush1.msra.mxu0 %v974
        %1173 = vmatprep.subr.mxu0 0.0
        %1174 = vmatpush1.msra.mxu0 %v975
        %1175 = vmatprep.subr.mxu0 0.0
        %1176 = vmatpush1.msra.mxu0 %v976
        %1177 = vmatprep.subr.mxu0 0.0
        %1178 = vmatpush1.msra.mxu0 %v977
        %1179 = vmatprep.subr.mxu0 0.0
        %1180 = vmatpush1.msra.mxu0 %v978
        %1181 = vmatprep.subr.mxu0 0.0
        %1182 = vmatpush1.msra.mxu0 %v979
        %1183 = vmatprep.subr.mxu0 0.0
        %1184 = vmatpush1.msra.mxu0 %v980
        %1185 = vmatprep.subr.mxu0 0.0
        %1186 = vmatpush1.msra.mxu0 %v981
        %1187 = vmatprep.subr.mxu0 0.0
        %1188 = vmatpush1.msra.mxu0 %v982
        %1189 = vmatprep.subr.mxu0 0.0
        %1190 = vmatpush1.msra.mxu0 %v983
        %1191 = vmatprep.subr.mxu0 0.0
        %1192 = vmatpush1.msra.mxu0 %v984
        %1193 = vmatprep.subr.mxu0 0.0
        %1194 = vmatpush1.msra.mxu0 %v985
        %1195 = vmatprep.subr.mxu0 0.0
        %1196 = vmatpush1.msra.mxu0 %v986
        %1197 = vmatprep.subr.mxu0 0.0
        %1198 = vmatpush1.msra.mxu0 %v987
        %1199 = vmatprep.subr.mxu0 0.0
        %1200 = vmatpush1.msra.mxu0 %v988
        %1201 = vmatprep.subr.mxu0 0.0
        %1202 = vmatpush1.msra.mxu0 %v989
        %1203 = vmatprep.subr.mxu0 0.0
        %1204 = vmatpush1.msra.mxu0 %v990
        %1205 = vmatprep.subr.mxu0 0.0
        %1206 = vmatpush1.msra.mxu0 %v991
        %1207 = vmatprep.subr.mxu0 0.0
        %1208 = vmatpush1.msra.mxu0 %v992
        %1209 = vmatprep.subr.mxu0 0.0
        %1210 = vmatpush1.msra.mxu0 %v993
        %1211 = vmatprep.subr.mxu0 0.0
        %1212 = vmatpush1.msra.mxu0 %v994
        %1213 = vmatprep.subr.mxu0 0.0
        %1214 = vmatpush1.msra.mxu0 %v995
        %1215 = vmatprep.subr.mxu0 0.0
        %1216 = vmatpush1.msra.mxu0 %v996
        %1217 = vmatprep.subr.mxu0 0.0
        %1218 = vmatpush1.msra.mxu0 %v997
        %1219 = vmatprep.subr.mxu0 0.0
        %1220 = vmatpush1.msra.mxu0 %v998
        %1221 = vmatprep.subr.mxu0 0.0
        %1222 = vmatpush1.msra.mxu0 %v999
        %1223 = vmatprep.subr.mxu0 0.0
        %1224 = vmatpush1.msra.mxu0 %v1000
        %1225 = vmatprep.subr.mxu0 0.0
        %1226 = vmatpush1.msra.mxu0 %v1001
        %1227 = vmatprep.subr.mxu0 0.0
        %1228 = vmatpush1.msra.mxu0 %v1002
        %1229 = vmatprep.subr.mxu0 0.0
        %1230 = vmatpush1.msra.mxu0 %v1003
        %1231 = vmatprep.mubr.f32.mxu0 %v899
        %1232 = vmatmul.mubr.f32.gmra.mrb[0].mxu0 %v897
        %v1233 = vpop.f32.mrb[0].mxu0
        %v1234 = vadd.f32 %v1164, %v1233
        %v1235 = vpop.f32.mrb[0].mxu0
        %1236 = vdwg.mxu0
        %1237 = vmatprep.subr.mxu0 0.0
        %1238 = vmatpush1.msra.mxu0 %v1004
        %1239 = vmatprep.subr.mxu0 0.0
        %1240 = vmatpush1.msra.mxu0 %v1005
        %1241 = vmatprep.subr.mxu0 0.0
        %1242 = vmatpush1.msra.mxu0 %v1006
        %1243 = vmatprep.subr.mxu0 0.0
        %1244 = vmatpush1.msra.mxu0 %v1007
        %1245 = vmatprep.subr.mxu0 0.0
        %1246 = vmatpush1.msra.mxu0 %v1008
        %1247 = vmatprep.subr.mxu0 0.0
        %1248 = vmatpush1.msra.mxu0 %v1009
        %1249 = vmatprep.subr.mxu0 0.0
        %1250 = vmatpush1.msra.mxu0 %v1010
        %1251 = vmatprep.subr.mxu0 0.0
        %1252 = vmatpush1.msra.mxu0 %v1011
        %1253 = vmatprep.subr.mxu0 0.0
        %1254 = vmatpush1.msra.mxu0 %v1012
        %1255 = vmatprep.subr.mxu0 0.0
        %1256 = vmatpush1.msra.mxu0 %v1013
        %1257 = vmatprep.subr.mxu0 0.0
        %1258 = vmatpush1.msra.mxu0 %v1014
        %1259 = vmatprep.subr.mxu0 0.0
        %1260 = vmatpush1.msra.mxu0 %v1015
        %1261 = vmatprep.subr.mxu0 0.0
        %1262 = vmatpush1.msra.mxu0 %v1016
        %1263 = vmatprep.subr.mxu0 0.0
        %1264 = vmatpush1.msra.mxu0 %v1017
        %1265 = vmatprep.subr.mxu0 0.0
        %1266 = vmatpush1.msra.mxu0 %v1018
        %1267 = vmatprep.subr.mxu0 0.0
        %1268 = vmatpush1.msra.mxu0 %v1019
        %1269 = vmatprep.subr.mxu0 0.0
        %1270 = vmatpush1.msra.mxu0 0.0
        %1271 = vmatprep.subr.mxu0 0.0
        %1272 = vmatpush1.msra.mxu0 0.0
        %1273 = vmatprep.subr.mxu0 0.0
        %1274 = vmatpush1.msra.mxu0 0.0
        %1275 = vmatprep.subr.mxu0 0.0
        %1276 = vmatpush1.msra.mxu0 0.0
        %1277 = vmatprep.subr.mxu0 0.0
        %1278 = vmatpush1.msra.mxu0 0.0
        %1279 = vmatprep.subr.mxu0 0.0
        %1280 = vmatpush1.msra.mxu0 0.0
        %1281 = vmatprep.subr.mxu0 0.0
        %1282 = vmatpush1.msra.mxu0 0.0
        %1283 = vmatprep.subr.mxu0 0.0
        %1284 = vmatpush1.msra.mxu0 0.0
        %1285 = vmatprep.subr.mxu0 0.0
        %1286 = vmatpush1.msra.mxu0 0.0
        %1287 = vmatprep.subr.mxu0 0.0
        %1288 = vmatpush1.msra.mxu0 0.0
        %1289 = vmatprep.subr.mxu0 0.0
        %1290 = vmatpush1.msra.mxu0 0.0
        %1291 = vmatprep.subr.mxu0 0.0
        %1292 = vmatpush1.msra.mxu0 0.0
        %1293 = vmatprep.subr.mxu0 0.0
        %1294 = vmatpush1.msra.mxu0 0.0
        %1295 = vmatprep.subr.mxu0 0.0
        %1296 = vmatpush1.msra.mxu0 0.0
        %1297 = vmatprep.subr.mxu0 0.0
        %1298 = vmatpush1.msra.mxu0 0.0
        %1299 = vmatprep.subr.mxu0 0.0
        %1300 = vmatpush1.msra.mxu0 0.0
        %1301 = vmatprep.mubr.f32.mxu0 0.0
        %1302 = vmatmul.mubr.f32.gmra.mrb[0].mxu0 %v907
        %v1303 = vpop.f32.mrb[0].mxu0
        %v1304 = vadd.f32 %v1234, %v1303
        %v1305 = vpop.f32.mrb[0].mxu0
        %1306 = vdwg.mxu0
        %v1307 = vmax.f32 %v1304, 0.0
        %v1308 = vadd.f32 %v883, %v1307
        %1309 = vst [vmem:[%s337] sm:$0xff] %v1308
        %s1310 = sand.u32 %s186, 1
        %s1311 = scalar_lea.sflag [#allocation4], %s1310
        %s1312 = sand.u32 %s186, 1
        %s1313 = smul.addr %s1312, 8
        %s1314 = scalar_lea.vmem [#allocation10], %s1313
        // Predicated region
        $region65: #{tpu_custom_call.1} parent=47 // pred_check
          %p1315 = pneg %p196
        $region66: #{tpu_custom_call.1} parent=47 // pred_check_branch
          %1317 = sbr.rel (%p1315) target = $region68
        $region67: #{tpu_custom_call.1} parent=47 // pred_region
          %s1319 = ssub.s32 128, 128
          %1320 = vsyncadd %s1311, %s1319
          %s1321 = smul.addr %s26, 128
          %s1322 = scalar_lea.hbm %s7, %s1321
          %s1324 = sshll.u32 %s1314, 4
          %s1325 = int_to_ptr.vmem [resolvable:$true] %s1324
          %1327 = dma.vmem_to_hbm [thread:$0]  %s1325, 128, %s1322, %s1311
        $region68: #{tpu_custom_call.1} parent=47 // pred_fallthru
          _
      $region48: #{tpu_custom_call.1} parent=5 // pred_fallthru
        _
      %p1328 = scmp.le.s32.totalorder 2, %s21
      // Predicated region
      $region69: #{tpu_custom_call.1} parent=5 // pred_check
        %p1329 = pneg %p1328
      $region70: #{tpu_custom_call.1} parent=5 // pred_check_branch
        %1331 = sbr.rel (%p1329) target = $region72
      $region71: #{tpu_custom_call.1} parent=5 // pred_region
        %s1332 = ssub.s32 %s21, 2
        // Predicated region
        $region73: #{tpu_custom_call.1} parent=71 // pred_check
          %p1333 = pneg %p202
        $region74: #{tpu_custom_call.1} parent=71 // pred_check_branch
          %1335 = sbr.rel (%p1333) target = $region76
        $region75: #{tpu_custom_call.1} parent=71 // pred_region
          %s1336 = sand.u32 %s187, 1
          %s1337 = scalar_lea.sflag [#allocation4], %s1336
          %s1338 = sand.u32 %s187, 1
          %s1339 = smul.addr %s1338, 8
          %s1340 = scalar_lea.vmem [#allocation10], %s1339
          %1341 = dma.done %s1337, 128
        $region76: #{tpu_custom_call.1} parent=71 // pred_fallthru
          _
      $region72: #{tpu_custom_call.1} parent=5 // pred_fallthru
        _
    $region6: #{tpu_custom_call.1} parent=1 // loop_footer
      %s25 = sadd.s32 1, %s21
    $region7: #{tpu_custom_call.1} parent=1 // loop_footer_branch
      %20 = sbr.rel target = $region3
    $region8: #{tpu_custom_call.1} parent=1 // loop_exit
      _
    %1342 = vsyncpa [#allocation3], 1
    %s1343 = scalar_lea.sflag [#allocation3], 1
    %1344 = vsyncpa %s1343, 1
    %1345 = vsyncpa [#allocation6], 1
    %1346 = vsyncpa [#allocation9], 1
    %1347 = vsyncpa [#allocation4], 1
    %s1348 = scalar_lea.sflag [#allocation4], 1
    %1349 = vsyncpa %s1348, 1

// kernel: tpu_custom_call.1
$region0: #{tpu_custom_call.1}
  #allocation0 [shape = 'u32[]', space=smem, size = 0x4, offset = 0x4, fixed_abs, tag = 'smem constant byte address 0x4 - core index']
  #allocation1 [shape = 'u32[144,128]{1,0:T(1,128)}', space=vmem, size = 0x12000, scoped, tag = 'internal scratch']
  %s0 = inlined_call_operand.hbm [shape: f32[16,128], index: 0, kind: input, shape index: {}]
  %s1 = inlined_call_operand.hbm [shape: f32[384,128], index: 1, kind: input, shape index: {}]
  %s2 = inlined_call_operand.vmem [shape: f32[1,128], index: 2, kind: input, shape index: {}]
  %s3 = inlined_call_operand.hbm [shape: f32[640,128], index: 3, kind: input, shape index: {}]
  %s4 = inlined_call_operand.vmem [shape: f32[1,128], index: 4, kind: input, shape index: {}]
  %s5 = inlined_call_operand.hbm [shape: f32[896,128], index: 5, kind: input, shape index: {}]
  %s6 = inlined_call_operand.vmem [shape: f32[1,128], index: 6, kind: input, shape index: {}]
  %s7 = inlined_call_operand.hbm [shape: f32[16,128], index: 7, kind: output, shape index: {}]
  %s8 = sld [smem:[#allocation0]]
  $region77: #{tpu_custom_call.1} parent=0
    _
  %s10 = ssub.s32 1, %s8
  %s11 = scalar_select 0, %s10, %s8
  $region1: #{tpu_custom_call.1} parent=0
    #allocation2 [shape = 'u8[8192]{0}', space=vmem, size = 0x2000, scoped, tag = 'input window, operand 0']
    #allocation3 [shape = 's32[2]{0}', space=sflag, size = 0x8, scoped, tag = 'scoped memory for tpu_custom_call.1']
    #allocation4 [shape = 's32[2]{0}', space=sflag, size = 0x8, scoped, tag = 'scoped memory for tpu_custom_call.1']
    #allocation5 [shape = 'u8[196608]{0}', space=vmem, size = 0x30000, scoped, tag = 'input window, operand 1, single buffered']
    #allocation6 [shape = 's32[1]{0}', space=sflag, size = 0x4, scoped, tag = 'scoped memory for tpu_custom_call.1']
    #allocation7 [shape = 'u8[327680]{0}', space=vmem, size = 0x50000, scoped, tag = 'input window, operand 3, single buffered']
    #allocation8 [shape = 'u8[458752]{0}', space=vmem, size = 0x70000, scoped, tag = 'input window, operand 5, single buffered']
    #allocation9 [shape = 's32[1]{0}', space=sflag, size = 0x4, scoped, tag = 'scoped memory for tpu_custom_call.1']
    #allocation10 [shape = 'u8[8192]{0}', space=vmem, size = 0x2000, scoped, tag = 'output window, operand 0']
    %12 = vsyncpa [#allocation3], 0
    %s13 = scalar_lea.sflag [#allocation3], 1
    %14 = vsyncpa %s13, 0
    %15 = vsyncpa [#allocation6], 0
    %16 = vsyncpa [#allocation9], 0
    %17 = vsyncpa [#allocation4], 0
    %s18 = scalar_lea.sflag [#allocation4], 1
    %19 = vsyncpa %s18, 0
    loop: start=0, step=1, limit=4
    $region2: #{tpu_custom_call.1} parent=1 // loop_pre_header
      _
    $region3: #{tpu_custom_call.1} parent=1 // loop_header
      %s21 = sphi 0, %s25
      %p22 = scmp.ge.s32.totalorder %s21, 4
      %s31 = sphi 0, %s33
      %s34 = sphi 0, %s31
      %s35 = sphi 0, %s34
      %s51 = sphi 0, %s35
      %s55 = sphi 0, %s55
      %s57 = sphi 0, %s55
      %s58 = sphi 0, %s57
      %s72 = sphi 0, %s58
      %s76 = sphi 0, %s76
      %s78 = sphi 0, %s76
      %s79 = sphi 0, %s78
      %s93 = sphi 0, %s79
      %s97 = sphi 0, %s97
      %s99 = sphi 0, %s97
      %s100 = sphi 0, %s99
      %s114 = sphi 0, %s100
      %s118 = sphi 0, %s118
      %s120 = sphi 0, %s118
      %s121 = sphi 0, %s120
      %s135 = sphi 0, %s121
      %s139 = sphi 0, %s139
      %s141 = sphi 0, %s139
      %s142 = sphi 0, %s141
      %s156 = sphi 0, %s142
      %s160 = sphi 0, %s160
      %s162 = sphi 0, %s160
      %s163 = sphi 0, %s162
      %s177 = sphi 0, %s163
      %s183 = sphi 0, %s185
      %s186 = sphi 0, %s183
      %s187 = sphi 0, %s186
      %s203 = sphi 0, %s187
    $region4: #{tpu_custom_call.1} parent=1 // loop_header_branch
      %24 = sbr.rel (%p22) target = $region8
    $region5: #{tpu_custom_call.1} parent=1 // loop_body
      %s26 = ssub.s32 %s21, 1
      %s27 = ssub.s32 %s21, 2
      %s28 = sadd.s32 %s21, 1
      %s29 = ssub.s32 %s21, %s28
      %p30 = scmp.eq.s32.totalorder %s29, 0
      %s32 = sadd.s32 %s31, 1
      %s33 = scalar_select %p30, %s31, %s32
      %p36 = pneg %p30
      %p37 = scmp.eq.s32.totalorder %s21, 1
      %p38 = por %p36, %p37
      %p39 = scmp.ne.s32.totalorder %s31, %s34
      %p40 = scmp.eq.s32.totalorder %s21, 0
      %p41 = por %p39, %p40
      %p42 = scmp.ne.s32.totalorder %s31, %s34
      %p43 = scmp.eq.s32.totalorder %s26, 1
      %p44 = por %p42, %p43
      %p45 = scmp.ne.s32.totalorder %s34, %s35
      %p46 = scmp.eq.s32.totalorder %s26, 0
      %p47 = por %p45, %p46
      %p48 = scmp.ne.s32.totalorder %s34, %s35
      %p49 = scmp.eq.s32.totalorder %s27, 1
      %p50 = por %p48, %p49
      %p52 = scmp.ne.s32.totalorder %s35, %s51
      %p53 = scmp.eq.s32.totalorder %s27, 0
      %p54 = por %p52, %p53
      %s56 = sadd.s32 %s55, 1
      %p59 = scmp.eq.s32.totalorder %s21, 1
      %p60 = scmp.ne.s32.totalorder %s55, %s57
      %p61 = scmp.eq.s32.totalorder %s21, 0
      %p62 = por %p60, %p61
      %p63 = scmp.ne.s32.totalorder %s55, %s57
      %p64 = scmp.eq.s32.totalorder %s26, 1
      %p65 = por %p63, %p64
      %p66 = scmp.ne.s32.totalorder %s57, %s58
      %p67 = scmp.eq.s32.totalorder %s26, 0
      %p68 = por %p66, %p67
      %p69 = scmp.ne.s32.totalorder %s57, %s58
      %p70 = scmp.eq.s32.totalorder %s27, 1
      %p71 = por %p69, %p70
      %p73 = scmp.ne.s32.totalorder %s58, %s72
      %p74 = scmp.eq.s32.totalorder %s27, 0
      %p75 = por %p73, %p74
      %s77 = sadd.s32 %s76, 1
      %p80 = scmp.eq.s32.totalorder %s21, 1
      %p81 = scmp.ne.s32.totalorder %s76, %s78
      %p82 = scmp.eq.s32.totalorder %s21, 0
      %p83 = por %p81, %p82
      %p84 = scmp.ne.s32.totalorder %s76, %s78
      %p85 = scmp.eq.s32.totalorder %s26, 1
      %p86 = por %p84, %p85
      %p87 = scmp.ne.s32.totalorder %s78, %s79
      %p88 = scmp.eq.s32.totalorder %s26, 0
      %p89 = por %p87, %p88
      %p90 = scmp.ne.s32.totalorder %s78, %s79
      %p91 = scmp.eq.s32.totalorder %s27, 1
      %p92 = por %p90, %p91
      %p94 = scmp.ne.s32.totalorder %s79, %s93
      %p95 = scmp.eq.s32.totalorder %s27, 0
      %p96 = por %p94, %p95
      %s98 = sadd.s32 %s97, 1
      %p101 = scmp.eq.s32.totalorder %s21, 1
      %p102 = scmp.ne.s32.totalorder %s97, %s99
      %p103 = scmp.eq.s32.totalorder %s21, 0
      %p104 = por %p102, %p103
      %p105 = scmp.ne.s32.totalorder %s97, %s99
      %p106 = scmp.eq.s32.totalorder %s26, 1
      %p107 = por %p105, %p106
      %p108 = scmp.ne.s32.totalorder %s99, %s100
      %p109 = scmp.eq.s32.totalorder %s26, 0
      %p110 = por %p108, %p109
      %p111 = scmp.ne.s32.totalorder %s99, %s100
      %p112 = scmp.eq.s32.totalorder %s27, 1
      %p113 = por %p111, %p112
      %p115 = scmp.ne.s32.totalorder %s100, %s114
      %p116 = scmp.eq.s32.totalorder %s27, 0
      %p117 = por %p115, %p116
      %s119 = sadd.s32 %s118, 1
      %p122 = scmp.eq.s32.totalorder %s21, 1
      %p123 = scmp.ne.s32.totalorder %s118, %s120
      %p124 = scmp.eq.s32.totalorder %s21, 0
      %p125 = por %p123, %p124
      %p126 = scmp.ne.s32.totalorder %s118, %s120
      %p127 = scmp.eq.s32.totalorder %s26, 1
      %p128 = por %p126, %p127
      %p129 = scmp.ne.s32.totalorder %s120, %s121
      %p130 = scmp.eq.s32.totalorder %s26, 0
      %p131 = por %p129, %p130
      %p132 = scmp.ne.s32.totalorder %s120, %s121
      %p133 = scmp.eq.s32.totalorder %s27, 1
      %p134 = por %p132, %p133
      %p136 = scmp.ne.s32.totalorder %s121, %s135
      %p137 = scmp.eq.s32.totalorder %s27, 0
      %p138 = por %p136, %p137
      %s140 = sadd.s32 %s139, 1
      %p143 = scmp.eq.s32.totalorder %s21, 1
      %p144 = scmp.ne.s32.totalorder %s139, %s141
      %p145 = scmp.eq.s32.totalorder %s21, 0
      %p146 = por %p144, %p145
      %p147 = scmp.ne.s32.totalorder %s139, %s141
      %p148 = scmp.eq.s32.totalorder %s26, 1
      %p149 = por %p147, %p148
      %p150 = scmp.ne.s32.totalorder %s141, %s142
      %p151 = scmp.eq.s32.totalorder %s26, 0
      %p152 = por %p150, %p151
      %p153 = scmp.ne.s32.totalorder %s141, %s142
      %p154 = scmp.eq.s32.totalorder %s27, 1
      %p155 = por %p153, %p154
      %p157 = scmp.ne.s32.totalorder %s142, %s156
      %p158 = scmp.eq.s32.totalorder %s27, 0
      %p159 = por %p157, %p158
      %s161 = sadd.s32 %s160, 1
      %p164 = scmp.eq.s32.totalorder %s21, 1
      %p165 = scmp.ne.s32.totalorder %s160, %s162
      %p166 = scmp.eq.s32.totalorder %s21, 0
      %p167 = por %p165, %p166
      %p168 = scmp.ne.s32.totalorder %s160, %s162
      %p169 = scmp.eq.s32.totalorder %s26, 1
      %p170 = por %p168, %p169
      %p171 = scmp.ne.s32.totalorder %s162, %s163
      %p172 = scmp.eq.s32.totalorder %s26, 0
      %p173 = por %p171, %p172
      %p174 = scmp.ne.s32.totalorder %s162, %s163
      %p175 = scmp.eq.s32.totalorder %s27, 1
      %p176 = por %p174, %p175
      %p178 = scmp.ne.s32.totalorder %s163, %s177
      %p179 = scmp.eq.s32.totalorder %s27, 0
      %p180 = por %p178, %p179
      %s181 = ssub.s32 %s21, %s28
      %p182 = scmp.eq.s32.totalorder %s181, 0
      %s184 = sadd.s32 %s183, 1
      %s185 = scalar_select %p182, %s183, %s184
      %p188 = pneg %p182
      %p189 = scmp.eq.s32.totalorder %s21, 1
      %p190 = por %p188, %p189
      %p191 = scmp.ne.s32.totalorder %s183, %s186
      %p192 = scmp.eq.s32.totalorder %s21, 0
      %p193 = por %p191, %p192
      %p194 = scmp.ne.s32.totalorder %s183, %s186
      %p195 = scmp.eq.s32.totalorder %s26, 1
      %p196 = por %p194, %p195
      %p197 = scmp.ne.s32.totalorder %s186, %s187
      %p198 = scmp.eq.s32.totalorder %s26, 0
      %p199 = por %p197, %p198
      %p200 = scmp.ne.s32.totalorder %s186, %s187
      %p201 = scmp.eq.s32.totalorder %s27, 1
      %p202 = por %p200, %p201
      %p204 = scmp.ne.s32.totalorder %s187, %s203
      %p205 = scmp.eq.s32.totalorder %s27, 0
      %p206 = por %p204, %p205
      %p207 = scmp.le.s32.totalorder 1, %s21
      %p208 = scmp.lt.s32.totalorder %s21, 3
      %p209 = pnand %p207, %p208
      %p210 = pneg %p209
      // Predicated region
      $region9: #{tpu_custom_call.1} parent=5 // pred_check
        _
      $region10: #{tpu_custom_call.1} parent=5 // pred_check_branch
        %212 = sbr.rel (%p209) target = $region12
      $region11: #{tpu_custom_call.1} parent=5 // pred_region
        %s213 = ssub.s32 %s21, 1
        // Predicated region
        $region13: #{tpu_custom_call.1} parent=11 // pred_check
          %p214 = pneg %p68
        $region14: #{tpu_custom_call.1} parent=11 // pred_check_branch
          %216 = sbr.rel (%p214) target = $region16
        $region15: #{tpu_custom_call.1} parent=11 // pred_region
          %s218 = ssub.s32 6144, 6144
          %219 = vsyncadd [#allocation6], %s218
          %s220 = sshll.u32 [#allocation5], 4
          %s221 = int_to_ptr.vmem [resolvable:$true] %s220
          %226 = dma.hbm_to_vmem [thread:$0]  %s1, 6144, %s221, [#allocation6], 128, 128, 8
        $region16: #{tpu_custom_call.1} parent=11 // pred_fallthru
          _
        // Predicated region
        $region17: #{tpu_custom_call.1} parent=11 // pred_check
          %p227 = pneg %p89
        $region18: #{tpu_custom_call.1} parent=11 // pred_check_branch
          %229 = sbr.rel (%p227) target = $region20
        $region19: #{tpu_custom_call.1} parent=11 // pred_region
          _
        $region20: #{tpu_custom_call.1} parent=11 // pred_fallthru
          _
        // Predicated region
        $region21: #{tpu_custom_call.1} parent=11 // pred_check
          %p230 = pneg %p110
        $region22: #{tpu_custom_call.1} parent=11 // pred_check_branch
          %232 = sbr.rel (%p230) target = $region24
        $region23: #{tpu_custom_call.1} parent=11 // pred_region
          %s234 = ssub.s32 10240, 10240
          %235 = vsyncadd [#allocation6], %s234
          %s236 = sshll.u32 [#allocation7], 4
          %s237 = int_to_ptr.vmem [resolvable:$true] %s236
          %242 = dma.hbm_to_vmem [thread:$0]  %s3, 10240, %s237, [#allocation6], 128, 128, 8
        $region24: #{tpu_custom_call.1} parent=11 // pred_fallthru
          _
        // Predicated region
        $region25: #{tpu_custom_call.1} parent=11 // pred_check
          %p243 = pneg %p131
        $region26: #{tpu_custom_call.1} parent=11 // pred_check_branch
          %245 = sbr.rel (%p243) target = $region28
        $region27: #{tpu_custom_call.1} parent=11 // pred_region
          _
        $region28: #{tpu_custom_call.1} parent=11 // pred_fallthru
          _
        // Predicated region
        $region29: #{tpu_custom_call.1} parent=11 // pred_check
          %p246 = pneg %p152
        $region30: #{tpu_custom_call.1} parent=11 // pred_check_branch
          %248 = sbr.rel (%p246) target = $region32
        $region31: #{tpu_custom_call.1} parent=11 // pred_region
          %s250 = ssub.s32 14336, 14336
          %251 = vsyncadd [#allocation9], %s250
          %s252 = sshll.u32 [#allocation8], 4
          %s253 = int_to_ptr.vmem [resolvable:$true] %s252
          %258 = dma.hbm_to_vmem [thread:$0]  %s5, 14336, %s253, [#allocation9], 128, 128, 8
        $region32: #{tpu_custom_call.1} parent=11 // pred_fallthru
          _
        // Predicated region
        $region33: #{tpu_custom_call.1} parent=11 // pred_check
          %p259 = pneg %p173
        $region34: #{tpu_custom_call.1} parent=11 // pred_check_branch
          %261 = sbr.rel (%p259) target = $region36
        $region35: #{tpu_custom_call.1} parent=11 // pred_region
          _
        $region36: #{tpu_custom_call.1} parent=11 // pred_fallthru
          _
      $region12: #{tpu_custom_call.1} parent=5 // pred_fallthru
        _
      %p262 = scmp.lt.s32.totalorder %s21, 2
      // Predicated region
      $region37: #{tpu_custom_call.1} parent=5 // pred_check
        %p263 = pneg %p262
      $region38: #{tpu_custom_call.1} parent=5 // pred_check_branch
        %265 = sbr.rel (%p263) target = $region40
      $region39: #{tpu_custom_call.1} parent=5 // pred_region
        // Predicated region
        $region41: #{tpu_custom_call.1} parent=39 // pred_check
          %p266 = pneg %p41
        $region42: #{tpu_custom_call.1} parent=39 // pred_check_branch
          %268 = sbr.rel (%p266) target = $region44
        $region43: #{tpu_custom_call.1} parent=39 // pred_region
          %s269 = sand.u32 %s31, 1
          %s270 = scalar_lea.sflag [#allocation3], %s269
          %s271 = sand.u32 %s31, 1
          %s272 = smul.addr %s271, 8
          %s273 = scalar_lea.vmem [#allocation2], %s272
          %s275 = ssub.s32 128, 128
          %276 = vsyncadd %s270, %s275
          %s277 = smul.addr %s21, 128
          %s278 = scalar_lea.hbm %s0, %s277
          %s280 = sshll.u32 %s273, 4
          %s281 = int_to_ptr.vmem [resolvable:$true] %s280
          %283 = dma.hbm_to_vmem [thread:$0]  %s278, 128, %s281, %s270
        $region44: #{tpu_custom_call.1} parent=39 // pred_fallthru
          _
      $region40: #{tpu_custom_call.1} parent=5 // pred_fallthru
        _
      %p284 = scmp.le.s32.totalorder 1, %s21
      %p285 = scmp.lt.s32.totalorder %s21, 3
      %p286 = pnand %p284, %p285
      %p287 = pneg %p286
      // Predicated region
      $region45: #{tpu_custom_call.1} parent=5 // pred_check
        _
      $region46: #{tpu_custom_call.1} parent=5 // pred_check_branch
        %289 = sbr.rel (%p286) target = $region48
      $region47: #{tpu_custom_call.1} parent=5 // pred_region
        %s290 = ssub.s32 %s21, 1
        %s291 = sand.u32 %s34, 1
        %s292 = scalar_lea.sflag [#allocation3], %s291
        %s293 = sand.u32 %s34, 1
        %s294 = smul.addr %s293, 8
        %s295 = scalar_lea.vmem [#allocation2], %s294
        // Predicated region
        $region49: #{tpu_custom_call.1} parent=47 // pred_check
          %p296 = pneg %p47
        $region50: #{tpu_custom_call.1} parent=47 // pred_check_branch
          %298 = sbr.rel (%p296) target = $region52
        $region51: #{tpu_custom_call.1} parent=47 // pred_region
          %299 = dma.done %s292, 128
        $region52: #{tpu_custom_call.1} parent=47 // pred_fallthru
          _
        // Predicated region
        $region53: #{tpu_custom_call.1} parent=47 // pred_check
          %p300 = pneg %p68
        $region54: #{tpu_custom_call.1} parent=47 // pred_check_branch
          %302 = sbr.rel (%p300) target = $region56
        $region55: #{tpu_custom_call.1} parent=47 // pred_region
          %303 = dma.done [#allocation6], 6144
        $region56: #{tpu_custom_call.1} parent=47 // pred_fallthru
          _
        // Predicated region
        $region57: #{tpu_custom_call.1} parent=47 // pred_check
          %p304 = pneg %p110
        $region58: #{tpu_custom_call.1} parent=47 // pred_check_branch
          %306 = sbr.rel (%p304) target = $region60
        $region59: #{tpu_custom_call.1} parent=47 // pred_region
          %307 = dma.done [#allocation6], 10240
        $region60: #{tpu_custom_call.1} parent=47 // pred_fallthru
          _
        // Predicated region
        $region61: #{tpu_custom_call.1} parent=47 // pred_check
          %p308 = pneg %p152
        $region62: #{tpu_custom_call.1} parent=47 // pred_check_branch
          %310 = sbr.rel (%p308) target = $region64
        $region63: #{tpu_custom_call.1} parent=47 // pred_region
          %311 = dma.done [#allocation9], 14336
        $region64: #{tpu_custom_call.1} parent=47 // pred_fallthru
          _
        %s312 = sand.u32 %s34, 1
        %s313 = scalar_lea.sflag [#allocation3], %s312
        %s314 = sand.u32 %s34, 1
        %s315 = smul.addr %s314, 8
        %s316 = scalar_lea.vmem [#allocation2], %s315
        %p317 = pneg %p47
        %p318 = pneg %p44
        %p319 = pneg %p68
        %p320 = pneg %p65
        %p321 = pneg %p89
        %p322 = pneg %p86
        %p323 = pneg %p110
        %p324 = pneg %p107
        %p325 = pneg %p131
        %p326 = pneg %p128
        %p327 = pneg %p152
        %p328 = pneg %p149
        %p329 = pneg %p173
        %p330 = pneg %p170
        %p331 = pneg %p199
        %p332 = pneg %p196
        %s333 = sand.u32 %s186, 1
        %s334 = scalar_lea.sflag [#allocation4], %s333
        %s335 = sand.u32 %s186, 1
        %s336 = smul.addr %s335, 8
        %s337 = scalar_lea.vmem [#allocation10], %s336
        %v338 = vlaneseq
        %v339 = vshrl.u32 %v338, 7
        %vm340 = vcmp.lt.s32.totalorder %v339, 0
        %v341 = vsub.s32 0, %v339
        %v342 = vsel %vm340, %v341, %v339
        %v343 = vshrl.u32 %v342, 3
        %v344 = vand.u32 %v342, 7
        %v345 = vsub.s32 0, %v344
        %v346 = vsel %vm340, %v345, %v344
        %vm347 = vcmp.ne.s32.totalorder %v346, 0
        %vm348 = vcmp.lt.s32.totalorder %v346, 0
        %vm349 = vmand %vm348, %vm347
        %v350 = vadd.s32 %v346, 8
        %v351 = vsel %vm349, %v350, %v346
        %v352 = vld [vmem:[%s295] sm:$0xff]
        %v353 = vrot.slane %v352, 7
        %v354 = vadd.s32 %v351, 4294967295
        %vm355 = vcmp.ge.s32.totalorder %v354, 0
        %vm356 = vcmp.lt.s32.totalorder %v354, 8
        %vm357 = vmand %vm355, %vm356
        %v358 = vsel %vm357, 1, 0
        %vm359 = vcmp.eq.s32.totalorder %v358, 1
        %v360 = vsel %vm359, %v353, 0.0
        %v361 = vrot.slane %v352, 1
        %v362 = vadd.s32 %v351, 1
        %vm363 = vcmp.ge.s32.totalorder %v362, 0
        %vm364 = vcmp.lt.s32.totalorder %v362, 8
        %vm365 = vmand %vm363, %vm364
        %v366 = vsel %vm365, 1, 0
        %vm367 = vcmp.eq.s32.totalorder %v366, 1
        %v368 = vsel %vm367, %v361, 0.0
        %v369 = vld [vmem:[#allocation5] sm:$0xff]
        %v370 = vld [vmem:[#allocation5 + $0x8] sm:$0xff]
        %v371 = vld [vmem:[#allocation5 + $0x10] sm:$0xff]
        %v372 = vld [vmem:[#allocation5 + $0x18] sm:$0xff]
        %v373 = vld [vmem:[#allocation5 + $0x20] sm:$0xff]
        %v374 = vld [vmem:[#allocation5 + $0x28] sm:$0xff]
        %v375 = vld [vmem:[#allocation5 + $0x30] sm:$0xff]
        %v376 = vld [vmem:[#allocation5 + $0x38] sm:$0xff]
        %v377 = vld [vmem:[#allocation5 + $0x40] sm:$0xff]
        %v378 = vld [vmem:[#allocation5 + $0x48] sm:$0xff]
        %v379 = vld [vmem:[#allocation5 + $0x50] sm:$0xff]
        %v380 = vld [vmem:[#allocation5 + $0x58] sm:$0xff]
        %v381 = vld [vmem:[#allocation5 + $0x60] sm:$0xff]
        %v382 = vld [vmem:[#allocation5 + $0x68] sm:$0xff]
        %v383 = vld [vmem:[#allocation5 + $0x70] sm:$0xff]
        %v384 = vld [vmem:[#allocation5 + $0x78] sm:$0xff]
        %v385 = vld [vmem:[#allocation5 + $0x80] sm:$0xff]
        %v386 = vld [vmem:[#allocation5 + $0x88] sm:$0xff]
        %v387 = vld [vmem:[#allocation5 + $0x90] sm:$0xff]
        %v388 = vld [vmem:[#allocation5 + $0x98] sm:$0xff]
        %v389 = vld [vmem:[#allocation5 + $0xa0] sm:$0xff]
        %v390 = vld [vmem:[#allocation5 + $0xa8] sm:$0xff]
        %v391 = vld [vmem:[#allocation5 + $0xb0] sm:$0xff]
        %v392 = vld [vmem:[#allocation5 + $0xb8] sm:$0xff]
        %v393 = vld [vmem:[#allocation5 + $0xc0] sm:$0xff]
        %v394 = vld [vmem:[#allocation5 + $0xc8] sm:$0xff]
        %v395 = vld [vmem:[#allocation5 + $0xd0] sm:$0xff]
        %v396 = vld [vmem:[#allocation5 + $0xd8] sm:$0xff]
        %v397 = vld [vmem:[#allocation5 + $0xe0] sm:$0xff]
        %v398 = vld [vmem:[#allocation5 + $0xe8] sm:$0xff]
        %v399 = vld [vmem:[#allocation5 + $0xf0] sm:$0xff]
        %v400 = vld [vmem:[#allocation5 + $0xf8] sm:$0xff]
        %v401 = vld [vmem:[#allocation5 + $0x100] sm:$0xff]
        %v402 = vld [vmem:[#allocation5 + $0x108] sm:$0xff]
        %v403 = vld [vmem:[#allocation5 + $0x110] sm:$0xff]
        %v404 = vld [vmem:[#allocation5 + $0x118] sm:$0xff]
        %v405 = vld [vmem:[#allocation5 + $0x120] sm:$0xff]
        %v406 = vld [vmem:[#allocation5 + $0x128] sm:$0xff]
        %v407 = vld [vmem:[#allocation5 + $0x130] sm:$0xff]
        %v408 = vld [vmem:[#allocation5 + $0x138] sm:$0xff]
        %v409 = vld [vmem:[#allocation5 + $0x140] sm:$0xff]
        %v410 = vld [vmem:[#allocation5 + $0x148] sm:$0xff]
        %v411 = vld [vmem:[#allocation5 + $0x150] sm:$0xff]
        %v412 = vld [vmem:[#allocation5 + $0x158] sm:$0xff]
        %v413 = vld [vmem:[#allocation5 + $0x160] sm:$0xff]
        %v414 = vld [vmem:[#allocation5 + $0x168] sm:$0xff]
        %v415 = vld [vmem:[#allocation5 + $0x170] sm:$0xff]
        %v416 = vld [vmem:[#allocation5 + $0x178] sm:$0xff]
        %v417 = vld [vmem:[%s2] sm:$0x1]
        %v419 = vlaneseq
        %v420 = vshrl.u32 %v419, 7
        %v421 = vsub.s32 0, %v420
        %v422 = vrot.slane %v417, %v421
        %424 = vmatprep.subr.mxu0 0.0
        %425 = vmatpush1.msra.mxu0 %v369
        %426 = vmatprep.subr.mxu0 0.0
        %427 = vmatpush1.msra.mxu0 %v370
        %428 = vmatprep.subr.mxu0 0.0
        %429 = vmatpush1.msra.mxu0 %v371
        %430 = vmatprep.subr.mxu0 0.0
        %431 = vmatpush1.msra.mxu0 %v372
        %432 = vmatprep.subr.mxu0 0.0
        %433 = vmatpush1.msra.mxu0 %v373
        %434 = vmatprep.subr.mxu0 0.0
        %435 = vmatpush1.msra.mxu0 %v374
        %436 = vmatprep.subr.mxu0 0.0
        %437 = vmatpush1.msra.mxu0 %v375
        %438 = vmatprep.subr.mxu0 0.0
        %439 = vmatpush1.msra.mxu0 %v376
        %440 = vmatprep.subr.mxu0 0.0
        %441 = vmatpush1.msra.mxu0 %v377
        %442 = vmatprep.subr.mxu0 0.0
        %443 = vmatpush1.msra.mxu0 %v378
        %444 = vmatprep.subr.mxu0 0.0
        %445 = vmatpush1.msra.mxu0 %v379
        %446 = vmatprep.subr.mxu0 0.0
        %447 = vmatpush1.msra.mxu0 %v380
        %448 = vmatprep.subr.mxu0 0.0
        %449 = vmatpush1.msra.mxu0 %v381
        %450 = vmatprep.subr.mxu0 0.0
        %451 = vmatpush1.msra.mxu0 %v382
        %452 = vmatprep.subr.mxu0 0.0
        %453 = vmatpush1.msra.mxu0 %v383
        %454 = vmatprep.subr.mxu0 0.0
        %455 = vmatpush1.msra.mxu0 %v384
        %456 = vmatprep.subr.mxu0 0.0
        %457 = vmatpush1.msra.mxu0 %v385
        %458 = vmatprep.subr.mxu0 0.0
        %459 = vmatpush1.msra.mxu0 %v386
        %460 = vmatprep.subr.mxu0 0.0
        %461 = vmatpush1.msra.mxu0 %v387
        %462 = vmatprep.subr.mxu0 0.0
        %463 = vmatpush1.msra.mxu0 %v388
        %464 = vmatprep.subr.mxu0 0.0
        %465 = vmatpush1.msra.mxu0 %v389
        %466 = vmatprep.subr.mxu0 0.0
        %467 = vmatpush1.msra.mxu0 %v390
        %468 = vmatprep.subr.mxu0 0.0
        %469 = vmatpush1.msra.mxu0 %v391
        %470 = vmatprep.subr.mxu0 0.0
        %471 = vmatpush1.msra.mxu0 %v392
        %472 = vmatprep.subr.mxu0 0.0
        %473 = vmatpush1.msra.mxu0 %v393
        %474 = vmatprep.subr.mxu0 0.0
        %475 = vmatpush1.msra.mxu0 %v394
        %476 = vmatprep.subr.mxu0 0.0
        %477 = vmatpush1.msra.mxu0 %v395
        %478 = vmatprep.subr.mxu0 0.0
        %479 = vmatpush1.msra.mxu0 %v396
        %480 = vmatprep.subr.mxu0 0.0
        %481 = vmatpush1.msra.mxu0 %v397
        %482 = vmatprep.subr.mxu0 0.0
        %483 = vmatpush1.msra.mxu0 %v398
        %484 = vmatprep.subr.mxu0 0.0
        %485 = vmatpush1.msra.mxu0 %v399
        %486 = vmatprep.subr.mxu0 0.0
        %487 = vmatpush1.msra.mxu0 %v400
        %488 = vmatprep.mubr.f32.mxu0 %v352
        %489 = vmatmul.mubr.f32.gmra.mrb[0].mxu0 %v360
        %v490 = vpop.f32.mrb[0].mxu0
        %v491 = vadd.f32 %v422, %v490
        %v492 = vpop.f32.mrb[0].mxu0
        %493 = vdwg.mxu0
        %494 = vmatprep.subr.mxu0 0.0
        %495 = vmatpush1.msra.mxu0 %v401
        %496 = vmatprep.subr.mxu0 0.0
        %497 = vmatpush1.msra.mxu0 %v402
        %498 = vmatprep.subr.mxu0 0.0
        %499 = vmatpush1.msra.mxu0 %v403
        %500 = vmatprep.subr.mxu0 0.0
        %501 = vmatpush1.msra.mxu0 %v404
        %502 = vmatprep.subr.mxu0 0.0
        %503 = vmatpush1.msra.mxu0 %v405
        %504 = vmatprep.subr.mxu0 0.0
        %505 = vmatpush1.msra.mxu0 %v406
        %506 = vmatprep.subr.mxu0 0.0
        %507 = vmatpush1.msra.mxu0 %v407
        %508 = vmatprep.subr.mxu0 0.0
        %509 = vmatpush1.msra.mxu0 %v408
        %510 = vmatprep.subr.mxu0 0.0
        %511 = vmatpush1.msra.mxu0 %v409
        %512 = vmatprep.subr.mxu0 0.0
        %513 = vmatpush1.msra.mxu0 %v410
        %514 = vmatprep.subr.mxu0 0.0
        %515 = vmatpush1.msra.mxu0 %v411
        %516 = vmatprep.subr.mxu0 0.0
        %517 = vmatpush1.msra.mxu0 %v412
        %518 = vmatprep.subr.mxu0 0.0
        %519 = vmatpush1.msra.mxu0 %v413
        %520 = vmatprep.subr.mxu0 0.0
        %521 = vmatpush1.msra.mxu0 %v414
        %522 = vmatprep.subr.mxu0 0.0
        %523 = vmatpush1.msra.mxu0 %v415
        %524 = vmatprep.subr.mxu0 0.0
        %525 = vmatpush1.msra.mxu0 %v416
        %526 = vmatprep.subr.mxu0 0.0
        %527 = vmatpush1.msra.mxu0 0.0
        %528 = vmatprep.subr.mxu0 0.0
        %529 = vmatpush1.msra.mxu0 0.0
        %530 = vmatprep.subr.mxu0 0.0
        %531 = vmatpush1.msra.mxu0 0.0
        %532 = vmatprep.subr.mxu0 0.0
        %533 = vmatpush1.msra.mxu0 0.0
        %534 = vmatprep.subr.mxu0 0.0
        %535 = vmatpush1.msra.mxu0 0.0
        %536 = vmatprep.subr.mxu0 0.0
        %537 = vmatpush1.msra.mxu0 0.0
        %538 = vmatprep.subr.mxu0 0.0
        %539 = vmatpush1.msra.mxu0 0.0
        %540 = vmatprep.subr.mxu0 0.0
        %541 = vmatpush1.msra.mxu0 0.0
        %542 = vmatprep.subr.mxu0 0.0
        %543 = vmatpush1.msra.mxu0 0.0
        %544 = vmatprep.subr.mxu0 0.0
        %545 = vmatpush1.msra.mxu0 0.0
        %546 = vmatprep.subr.mxu0 0.0
        %547 = vmatpush1.msra.mxu0 0.0
        %548 = vmatprep.subr.mxu0 0.0
        %549 = vmatpush1.msra.mxu0 0.0
        %550 = vmatprep.subr.mxu0 0.0
        %551 = vmatpush1.msra.mxu0 0.0
        %552 = vmatprep.subr.mxu0 0.0
        %553 = vmatpush1.msra.mxu0 0.0
        %554 = vmatprep.subr.mxu0 0.0
        %555 = vmatpush1.msra.mxu0 0.0
        %556 = vmatprep.subr.mxu0 0.0
        %557 = vmatpush1.msra.mxu0 0.0
        %558 = vmatprep.mubr.f32.mxu0 0.0
        %559 = vmatmul.mubr.f32.gmra.mrb[0].mxu0 %v368
        %v560 = vpop.f32.mrb[0].mxu0
        %v561 = vadd.f32 %v491, %v560
        %v562 = vpop.f32.mrb[0].mxu0
        %563 = vdwg.mxu0
        %v564 = vmax.f32 %v561, 0.0
        %v565 = vrot.slane %v564, 6
        %v566 = vadd.s32 %v351, 4294967294
        %vm567 = vcmp.ge.s32.totalorder %v566, 0
        %vm568 = vcmp.lt.s32.totalorder %v566, 8
        %vm569 = vmand %vm567, %vm568
        %v570 = vsel %vm569, 1, 0
        %vm571 = vcmp.eq.s32.totalorder %v570, 1
        %v572 = vsel %vm571, %v565, 0.0
        %v573 = vrot.slane %v564, 7
        %v574 = vsel %vm359, %v573, 0.0
        %v575 = vrot.slane %v564, 1
        %v576 = vsel %vm367, %v575, 0.0
        %v577 = vrot.slane %v564, 2
        %v578 = vadd.s32 %v351, 2
        %vm579 = vcmp.ge.s32.totalorder %v578, 0
        %vm580 = vcmp.lt.s32.totalorder %v578, 8
        %vm581 = vmand %vm579, %vm580
        %v582 = vsel %vm581, 1, 0
        %vm583 = vcmp.eq.s32.totalorder %v582, 1
        %v584 = vsel %vm583, %v577, 0.0
        %v585 = vld [vmem:[#allocation7] sm:$0xff]
        %v586 = vld [vmem:[#allocation7 + $0x8] sm:$0xff]
        %v587 = vld [vmem:[#allocation7 + $0x10] sm:$0xff]
        %v588 = vld [vmem:[#allocation7 + $0x18] sm:$0xff]
        %v589 = vld [vmem:[#allocation7 + $0x20] sm:$0xff]
        %v590 = vld [vmem:[#allocation7 + $0x28] sm:$0xff]
        %v591 = vld [vmem:[#allocation7 + $0x30] sm:$0xff]
        %v592 = vld [vmem:[#allocation7 + $0x38] sm:$0xff]
        %v593 = vld [vmem:[#allocation7 + $0x40] sm:$0xff]
        %v594 = vld [vmem:[#allocation7 + $0x48] sm:$0xff]
        %v595 = vld [vmem:[#allocation7 + $0x50] sm:$0xff]
        %v596 = vld [vmem:[#allocation7 + $0x58] sm:$0xff]
        %v597 = vld [vmem:[#allocation7 + $0x60] sm:$0xff]
        %v598 = vld [vmem:[#allocation7 + $0x68] sm:$0xff]
        %v599 = vld [vmem:[#allocation7 + $0x70] sm:$0xff]
        %v600 = vld [vmem:[#allocation7 + $0x78] sm:$0xff]
        %v601 = vld [vmem:[#allocation7 + $0x80] sm:$0xff]
        %v602 = vld [vmem:[#allocation7 + $0x88] sm:$0xff]
        %v603 = vld [vmem:[#allocation7 + $0x90] sm:$0xff]
        %v604 = vld [vmem:[#allocation7 + $0x98] sm:$0xff]
        %v605 = vld [vmem:[#allocation7 + $0xa0] sm:$0xff]
        %v606 = vld [vmem:[#allocation7 + $0xa8] sm:$0xff]
        %v607 = vld [vmem:[#allocation7 + $0xb0] sm:$0xff]
        %v608 = vld [vmem:[#allocation7 + $0xb8] sm:$0xff]
        %v609 = vld [vmem:[#allocation7 + $0xc0] sm:$0xff]
        %v610 = vld [vmem:[#allocation7 + $0xc8] sm:$0xff]
        %v611 = vld [vmem:[#allocation7 + $0xd0] sm:$0xff]
        %v612 = vld [vmem:[#allocation7 + $0xd8] sm:$0xff]
        %v613 = vld [vmem:[#allocation7 + $0xe0] sm:$0xff]
        %v614 = vld [vmem:[#allocation7 + $0xe8] sm:$0xff]
        %v615 = vld [vmem:[#allocation7 + $0xf0] sm:$0xff]
        %v616 = vld [vmem:[#allocation7 + $0xf8] sm:$0xff]
        %v617 = vld [vmem:[#allocation7 + $0x100] sm:$0xff]
        %v618 = vld [vmem:[#allocation7 + $0x108] sm:$0xff]
        %v619 = vld [vmem:[#allocation7 + $0x110] sm:$0xff]
        %v620 = vld [vmem:[#allocation7 + $0x118] sm:$0xff]
        %v621 = vld [vmem:[#allocation7 + $0x120] sm:$0xff]
        %v622 = vld [vmem:[#allocation7 + $0x128] sm:$0xff]
        %v623 = vld [vmem:[#allocation7 + $0x130] sm:$0xff]
        %v624 = vld [vmem:[#allocation7 + $0x138] sm:$0xff]
        %v625 = vld [vmem:[#allocation7 + $0x140] sm:$0xff]
        %v626 = vld [vmem:[#allocation7 + $0x148] sm:$0xff]
        %v627 = vld [vmem:[#allocation7 + $0x150] sm:$0xff]
        %v628 = vld [vmem:[#allocation7 + $0x158] sm:$0xff]
        %v629 = vld [vmem:[#allocation7 + $0x160] sm:$0xff]
        %v630 = vld [vmem:[#allocation7 + $0x168] sm:$0xff]
        %v631 = vld [vmem:[#allocation7 + $0x170] sm:$0xff]
        %v632 = vld [vmem:[#allocation7 + $0x178] sm:$0xff]
        %v633 = vld [vmem:[#allocation7 + $0x180] sm:$0xff]
        %v634 = vld [vmem:[#allocation7 + $0x188] sm:$0xff]
        %v635 = vld [vmem:[#allocation7 + $0x190] sm:$0xff]
        %v636 = vld [vmem:[#allocation7 + $0x198] sm:$0xff]
        %v637 = vld [vmem:[#allocation7 + $0x1a0] sm:$0xff]
        %v638 = vld [vmem:[#allocation7 + $0x1a8] sm:$0xff]
        %v639 = vld [vmem:[#allocation7 + $0x1b0] sm:$0xff]
        %v640 = vld [vmem:[#allocation7 + $0x1b8] sm:$0xff]
        %v641 = vld [vmem:[#allocation7 + $0x1c0] sm:$0xff]
        %v642 = vld [vmem:[#allocation7 + $0x1c8] sm:$0xff]
        %v643 = vld [vmem:[#allocation7 + $0x1d0] sm:$0xff]
        %v644 = vld [vmem:[#allocation7 + $0x1d8] sm:$0xff]
        %v645 = vld [vmem:[#allocation7 + $0x1e0] sm:$0xff]
        %v646 = vld [vmem:[#allocation7 + $0x1e8] sm:$0xff]
        %v647 = vld [vmem:[#allocation7 + $0x1f0] sm:$0xff]
        %v648 = vld [vmem:[#allocation7 + $0x1f8] sm:$0xff]
        %v649 = vld [vmem:[#allocation7 + $0x200] sm:$0xff]
        %v650 = vld [vmem:[#allocation7 + $0x208] sm:$0xff]
        %v651 = vld [vmem:[#allocation7 + $0x210] sm:$0xff]
        %v652 = vld [vmem:[#allocation7 + $0x218] sm:$0xff]
        %v653 = vld [vmem:[#allocation7 + $0x220] sm:$0xff]
        %v654 = vld [vmem:[#allocation7 + $0x228] sm:$0xff]
        %v655 = vld [vmem:[#allocation7 + $0x230] sm:$0xff]
        %v656 = vld [vmem:[#allocation7 + $0x238] sm:$0xff]
        %v657 = vld [vmem:[#allocation7 + $0x240] sm:$0xff]
        %v658 = vld [vmem:[#allocation7 + $0x248] sm:$0xff]
        %v659 = vld [vmem:[#allocation7 + $0x250] sm:$0xff]
        %v660 = vld [vmem:[#allocation7 + $0x258] sm:$0xff]
        %v661 = vld [vmem:[#allocation7 + $0x260] sm:$0xff]
        %v662 = vld [vmem:[#allocation7 + $0x268] sm:$0xff]
        %v663 = vld [vmem:[#allocation7 + $0x270] sm:$0xff]
        %v664 = vld [vmem:[#allocation7 + $0x278] sm:$0xff]
        %v665 = vld [vmem:[%s4] sm:$0x1]
        %v667 = vlaneseq
        %v668 = vshrl.u32 %v667, 7
        %v669 = vsub.s32 0, %v668
        %v670 = vrot.slane %v665, %v669
        %672 = vmatprep.subr.mxu0 0.0
        %673 = vmatpush1.msra.mxu0 %v585
        %674 = vmatprep.subr.mxu0 0.0
        %675 = vmatpush1.msra.mxu0 %v586
        %676 = vmatprep.subr.mxu0 0.0
        %677 = vmatpush1.msra.mxu0 %v587
        %678 = vmatprep.subr.mxu0 0.0
        %679 = vmatpush1.msra.mxu0 %v588
        %680 = vmatprep.subr.mxu0 0.0
        %681 = vmatpush1.msra.mxu0 %v589
        %682 = vmatprep.subr.mxu0 0.0
        %683 = vmatpush1.msra.mxu0 %v590
        %684 = vmatprep.subr.mxu0 0.0
        %685 = vmatpush1.msra.mxu0 %v591
        %686 = vmatprep.subr.mxu0 0.0
        %687 = vmatpush1.msra.mxu0 %v592
        %688 = vmatprep.subr.mxu0 0.0
        %689 = vmatpush1.msra.mxu0 %v593
        %690 = vmatprep.subr.mxu0 0.0
        %691 = vmatpush1.msra.mxu0 %v594
        %692 = vmatprep.subr.mxu0 0.0
        %693 = vmatpush1.msra.mxu0 %v595
        %694 = vmatprep.subr.mxu0 0.0
        %695 = vmatpush1.msra.mxu0 %v596
        %696 = vmatprep.subr.mxu0 0.0
        %697 = vmatpush1.msra.mxu0 %v597
        %698 = vmatprep.subr.mxu0 0.0
        %699 = vmatpush1.msra.mxu0 %v598
        %700 = vmatprep.subr.mxu0 0.0
        %701 = vmatpush1.msra.mxu0 %v599
        %702 = vmatprep.subr.mxu0 0.0
        %703 = vmatpush1.msra.mxu0 %v600
        %704 = vmatprep.subr.mxu0 0.0
        %705 = vmatpush1.msra.mxu0 %v601
        %706 = vmatprep.subr.mxu0 0.0
        %707 = vmatpush1.msra.mxu0 %v602
        %708 = vmatprep.subr.mxu0 0.0
        %709 = vmatpush1.msra.mxu0 %v603
        %710 = vmatprep.subr.mxu0 0.0
        %711 = vmatpush1.msra.mxu0 %v604
        %712 = vmatprep.subr.mxu0 0.0
        %713 = vmatpush1.msra.mxu0 %v605
        %714 = vmatprep.subr.mxu0 0.0
        %715 = vmatpush1.msra.mxu0 %v606
        %716 = vmatprep.subr.mxu0 0.0
        %717 = vmatpush1.msra.mxu0 %v607
        %718 = vmatprep.subr.mxu0 0.0
        %719 = vmatpush1.msra.mxu0 %v608
        %720 = vmatprep.subr.mxu0 0.0
        %721 = vmatpush1.msra.mxu0 %v609
        %722 = vmatprep.subr.mxu0 0.0
        %723 = vmatpush1.msra.mxu0 %v610
        %724 = vmatprep.subr.mxu0 0.0
        %725 = vmatpush1.msra.mxu0 %v611
        %726 = vmatprep.subr.mxu0 0.0
        %727 = vmatpush1.msra.mxu0 %v612
        %728 = vmatprep.subr.mxu0 0.0
        %729 = vmatpush1.msra.mxu0 %v613
        %730 = vmatprep.subr.mxu0 0.0
        %731 = vmatpush1.msra.mxu0 %v614
        %732 = vmatprep.subr.mxu0 0.0
        %733 = vmatpush1.msra.mxu0 %v615
        %734 = vmatprep.subr.mxu0 0.0
        %735 = vmatpush1.msra.mxu0 %v616
        %736 = vmatprep.mubr.f32.mxu0 %v574
        %737 = vmatmul.mubr.f32.gmra.mrb[0].mxu0 %v572
        %v738 = vpop.f32.mrb[0].mxu0
        %v739 = vadd.f32 %v670, %v738
        %v740 = vpop.f32.mrb[0].mxu0
        %741 = vdwg.mxu0
        %742 = vmatprep.subr.mxu0 0.0
        %743 = vmatpush1.msra.mxu0 %v617
        %744 = vmatprep.subr.mxu0 0.0
        %745 = vmatpush1.msra.mxu0 %v618
        %746 = vmatprep.subr.mxu0 0.0
        %747 = vmatpush1.msra.mxu0 %v619
        %748 = vmatprep.subr.mxu0 0.0
        %749 = vmatpush1.msra.mxu0 %v620
        %750 = vmatprep.subr.mxu0 0.0
        %751 = vmatpush1.msra.mxu0 %v621
        %752 = vmatprep.subr.mxu0 0.0
        %753 = vmatpush1.msra.mxu0 %v622
        %754 = vmatprep.subr.mxu0 0.0
        %755 = vmatpush1.msra.mxu0 %v623
        %756 = vmatprep.subr.mxu0 0.0
        %757 = vmatpush1.msra.mxu0 %v624
        %758 = vmatprep.subr.mxu0 0.0
        %759 = vmatpush1.msra.mxu0 %v625
        %760 = vmatprep.subr.mxu0 0.0
        %761 = vmatpush1.msra.mxu0 %v626
        %762 = vmatprep.subr.mxu0 0.0
        %763 = vmatpush1.msra.mxu0 %v627
        %764 = vmatprep.subr.mxu0 0.0
        %765 = vmatpush1.msra.mxu0 %v628
        %766 = vmatprep.subr.mxu0 0.0
        %767 = vmatpush1.msra.mxu0 %v629
        %768 = vmatprep.subr.mxu0 0.0
        %769 = vmatpush1.msra.mxu0 %v630
        %770 = vmatprep.subr.mxu0 0.0
        %771 = vmatpush1.msra.mxu0 %v631
        %772 = vmatprep.subr.mxu0 0.0
        %773 = vmatpush1.msra.mxu0 %v632
        %774 = vmatprep.subr.mxu0 0.0
        %775 = vmatpush1.msra.mxu0 %v633
        %776 = vmatprep.subr.mxu0 0.0
        %777 = vmatpush1.msra.mxu0 %v634
        %778 = vmatprep.subr.mxu0 0.0
        %779 = vmatpush1.msra.mxu0 %v635
        %780 = vmatprep.subr.mxu0 0.0
        %781 = vmatpush1.msra.mxu0 %v636
        %782 = vmatprep.subr.mxu0 0.0
        %783 = vmatpush1.msra.mxu0 %v637
        %784 = vmatprep.subr.mxu0 0.0
        %785 = vmatpush1.msra.mxu0 %v638
        %786 = vmatprep.subr.mxu0 0.0
        %787 = vmatpush1.msra.mxu0 %v639
        %788 = vmatprep.subr.mxu0 0.0
        %789 = vmatpush1.msra.mxu0 %v640
        %790 = vmatprep.subr.mxu0 0.0
        %791 = vmatpush1.msra.mxu0 %v641
        %792 = vmatprep.subr.mxu0 0.0
        %793 = vmatpush1.msra.mxu0 %v642
        %794 = vmatprep.subr.mxu0 0.0
        %795 = vmatpush1.msra.mxu0 %v643
        %796 = vmatprep.subr.mxu0 0.0
        %797 = vmatpush1.msra.mxu0 %v644
        %798 = vmatprep.subr.mxu0 0.0
        %799 = vmatpush1.msra.mxu0 %v645
        %800 = vmatprep.subr.mxu0 0.0
        %801 = vmatpush1.msra.mxu0 %v646
        %802 = vmatprep.subr.mxu0 0.0
        %803 = vmatpush1.msra.mxu0 %v647
        %804 = vmatprep.subr.mxu0 0.0
        %805 = vmatpush1.msra.mxu0 %v648
        %806 = vmatprep.mubr.f32.mxu0 %v576
        %807 = vmatmul.mubr.f32.gmra.mrb[0].mxu0 %v564
        %v808 = vpop.f32.mrb[0].mxu0
        %v809 = vadd.f32 %v739, %v808
        %v810 = vpop.f32.mrb[0].mxu0
        %811 = vdwg.mxu0
        %812 = vmatprep.subr.mxu0 0.0
        %813 = vmatpush1.msra.mxu0 %v649
        %814 = vmatprep.subr.mxu0 0.0
        %815 = vmatpush1.msra.mxu0 %v650
        %816 = vmatprep.subr.mxu0 0.0
        %817 = vmatpush1.msra.mxu0 %v651
        %818 = vmatprep.subr.mxu0 0.0
        %819 = vmatpush1.msra.mxu0 %v652
        %820 = vmatprep.subr.mxu0 0.0
        %821 = vmatpush1.msra.mxu0 %v653
        %822 = vmatprep.subr.mxu0 0.0
        %823 = vmatpush1.msra.mxu0 %v654
        %824 = vmatprep.subr.mxu0 0.0
        %825 = vmatpush1.msra.mxu0 %v655
        %826 = vmatprep.subr.mxu0 0.0
        %827 = vmatpush1.msra.mxu0 %v656
        %828 = vmatprep.subr.mxu0 0.0
        %829 = vmatpush1.msra.mxu0 %v657
        %830 = vmatprep.subr.mxu0 0.0
        %831 = vmatpush1.msra.mxu0 %v658
        %832 = vmatprep.subr.mxu0 0.0
        %833 = vmatpush1.msra.mxu0 %v659
        %834 = vmatprep.subr.mxu0 0.0
        %835 = vmatpush1.msra.mxu0 %v660
        %836 = vmatprep.subr.mxu0 0.0
        %837 = vmatpush1.msra.mxu0 %v661
        %838 = vmatprep.subr.mxu0 0.0
        %839 = vmatpush1.msra.mxu0 %v662
        %840 = vmatprep.subr.mxu0 0.0
        %841 = vmatpush1.msra.mxu0 %v663
        %842 = vmatprep.subr.mxu0 0.0
        %843 = vmatpush1.msra.mxu0 %v664
        %844 = vmatprep.subr.mxu0 0.0
        %845 = vmatpush1.msra.mxu0 0.0
        %846 = vmatprep.subr.mxu0 0.0
        %847 = vmatpush1.msra.mxu0 0.0
        %848 = vmatprep.subr.mxu0 0.0
        %849 = vmatpush1.msra.mxu0 0.0
        %850 = vmatprep.subr.mxu0 0.0
        %851 = vmatpush1.msra.mxu0 0.0
        %852 = vmatprep.subr.mxu0 0.0
        %853 = vmatpush1.msra.mxu0 0.0
        %854 = vmatprep.subr.mxu0 0.0
        %855 = vmatpush1.msra.mxu0 0.0
        %856 = vmatprep.subr.mxu0 0.0
        %857 = vmatpush1.msra.mxu0 0.0
        %858 = vmatprep.subr.mxu0 0.0
        %859 = vmatpush1.msra.mxu0 0.0
        %860 = vmatprep.subr.mxu0 0.0
        %861 = vmatpush1.msra.mxu0 0.0
        %862 = vmatprep.subr.mxu0 0.0
        %863 = vmatpush1.msra.mxu0 0.0
        %864 = vmatprep.subr.mxu0 0.0
        %865 = vmatpush1.msra.mxu0 0.0
        %866 = vmatprep.subr.mxu0 0.0
        %867 = vmatpush1.msra.mxu0 0.0
        %868 = vmatprep.subr.mxu0 0.0
        %869 = vmatpush1.msra.mxu0 0.0
        %870 = vmatprep.subr.mxu0 0.0
        %871 = vmatpush1.msra.mxu0 0.0
        %872 = vmatprep.subr.mxu0 0.0
        %873 = vmatpush1.msra.mxu0 0.0
        %874 = vmatprep.subr.mxu0 0.0
        %875 = vmatpush1.msra.mxu0 0.0
        %876 = vmatprep.mubr.f32.mxu0 0.0
        %877 = vmatmul.mubr.f32.gmra.mrb[0].mxu0 %v584
        %v878 = vpop.f32.mrb[0].mxu0
        %v879 = vadd.f32 %v809, %v878
        %v880 = vpop.f32.mrb[0].mxu0
        %881 = vdwg.mxu0
        %v882 = vmax.f32 %v879, 0.0
        %v883 = vadd.f32 %v564, %v882
        %v884 = vrot.slane %v882, 5
        %v885 = vadd.s32 %v351, 4294967293
        %vm886 = vcmp.ge.s32.totalorder %v885, 0
        %vm887 = vcmp.lt.s32.totalorder %v885, 8
        %vm888 = vmand %vm886, %vm887
        %v889 = vsel %vm888, 1, 0
        %vm890 = vcmp.eq.s32.totalorder %v889, 1
        %v891 = vsel %vm890, %v884, 0.0
        %v892 = vrot.slane %v882, 6
        %v893 = vsel %vm571, %v892, 0.0
        %v894 = vrot.slane %v882, 7
        %v895 = vsel %vm359, %v894, 0.0
        %v896 = vrot.slane %v882, 1
        %v897 = vsel %vm367, %v896, 0.0
        %v898 = vrot.slane %v882, 2
        %v899 = vsel %vm583, %v898, 0.0
        %v900 = vrot.slane %v882, 3
        %v901 = vadd.s32 %v351, 3
        %vm902 = vcmp.ge.s32.totalorder %v901, 0
        %vm903 = vcmp.lt.s32.totalorder %v901, 8
        %vm904 = vmand %vm902, %vm903
        %v905 = vsel %vm904, 1, 0
        %vm906 = vcmp.eq.s32.totalorder %v905, 1
        %v907 = vsel %vm906, %v900, 0.0
        %v908 = vld [vmem:[#allocation8] sm:$0xff]
        %v909 = vld [vmem:[#allocation8 + $0x8] sm:$0xff]
        %v910 = vld [vmem:[#allocation8 + $0x10] sm:$0xff]
        %v911 = vld [vmem:[#allocation8 + $0x18] sm:$0xff]
        %v912 = vld [vmem:[#allocation8 + $0x20] sm:$0xff]
        %v913 = vld [vmem:[#allocation8 + $0x28] sm:$0xff]
        %v914 = vld [vmem:[#allocation8 + $0x30] sm:$0xff]
        %v915 = vld [vmem:[#allocation8 + $0x38] sm:$0xff]
        %v916 = vld [vmem:[#allocation8 + $0x40] sm:$0xff]
        %v917 = vld [vmem:[#allocation8 + $0x48] sm:$0xff]
        %v918 = vld [vmem:[#allocation8 + $0x50] sm:$0xff]
        %v919 = vld [vmem:[#allocation8 + $0x58] sm:$0xff]
        %v920 = vld [vmem:[#allocation8 + $0x60] sm:$0xff]
        %v921 = vld [vmem:[#allocation8 + $0x68] sm:$0xff]
        %v922 = vld [vmem:[#allocation8 + $0x70] sm:$0xff]
        %v923 = vld [vmem:[#allocation8 + $0x78] sm:$0xff]
        %v924 = vld [vmem:[#allocation8 + $0x80] sm:$0xff]
        %v925 = vld [vmem:[#allocation8 + $0x88] sm:$0xff]
        %v926 = vld [vmem:[#allocation8 + $0x90] sm:$0xff]
        %v927 = vld [vmem:[#allocation8 + $0x98] sm:$0xff]
        %v928 = vld [vmem:[#allocation8 + $0xa0] sm:$0xff]
        %v929 = vld [vmem:[#allocation8 + $0xa8] sm:$0xff]
        %v930 = vld [vmem:[#allocation8 + $0xb0] sm:$0xff]
        %v931 = vld [vmem:[#allocation8 + $0xb8] sm:$0xff]
        %v932 = vld [vmem:[#allocation8 + $0xc0] sm:$0xff]
        %v933 = vld [vmem:[#allocation8 + $0xc8] sm:$0xff]
        %v934 = vld [vmem:[#allocation8 + $0xd0] sm:$0xff]
        %v935 = vld [vmem:[#allocation8 + $0xd8] sm:$0xff]
        %v936 = vld [vmem:[#allocation8 + $0xe0] sm:$0xff]
        %v937 = vld [vmem:[#allocation8 + $0xe8] sm:$0xff]
        %v938 = vld [vmem:[#allocation8 + $0xf0] sm:$0xff]
        %v939 = vld [vmem:[#allocation8 + $0xf8] sm:$0xff]
        %v940 = vld [vmem:[#allocation8 + $0x100] sm:$0xff]
        %v941 = vld [vmem:[#allocation8 + $0x108] sm:$0xff]
        %v942 = vld [vmem:[#allocation8 + $0x110] sm:$0xff]
        %v943 = vld [vmem:[#allocation8 + $0x118] sm:$0xff]
        %v944 = vld [vmem:[#allocation8 + $0x120] sm:$0xff]
        %v945 = vld [vmem:[#allocation8 + $0x128] sm:$0xff]
        %v946 = vld [vmem:[#allocation8 + $0x130] sm:$0xff]
        %v947 = vld [vmem:[#allocation8 + $0x138] sm:$0xff]
        %v948 = vld [vmem:[#allocation8 + $0x140] sm:$0xff]
        %v949 = vld [vmem:[#allocation8 + $0x148] sm:$0xff]
        %v950 = vld [vmem:[#allocation8 + $0x150] sm:$0xff]
        %v951 = vld [vmem:[#allocation8 + $0x158] sm:$0xff]
        %v952 = vld [vmem:[#allocation8 + $0x160] sm:$0xff]
        %v953 = vld [vmem:[#allocation8 + $0x168] sm:$0xff]
        %v954 = vld [vmem:[#allocation8 + $0x170] sm:$0xff]
        %v955 = vld [vmem:[#allocation8 + $0x178] sm:$0xff]
        %v956 = vld [vmem:[#allocation8 + $0x180] sm:$0xff]
        %v957 = vld [vmem:[#allocation8 + $0x188] sm:$0xff]
        %v958 = vld [vmem:[#allocation8 + $0x190] sm:$0xff]
        %v959 = vld [vmem:[#allocation8 + $0x198] sm:$0xff]
        %v960 = vld [vmem:[#allocation8 + $0x1a0] sm:$0xff]
        %v961 = vld [vmem:[#allocation8 + $0x1a8] sm:$0xff]
        %v962 = vld [vmem:[#allocation8 + $0x1b0] sm:$0xff]
        %v963 = vld [vmem:[#allocation8 + $0x1b8] sm:$0xff]
        %v964 = vld [vmem:[#allocation8 + $0x1c0] sm:$0xff]
        %v965 = vld [vmem:[#allocation8 + $0x1c8] sm:$0xff]
        %v966 = vld [vmem:[#allocation8 + $0x1d0] sm:$0xff]
        %v967 = vld [vmem:[#allocation8 + $0x1d8] sm:$0xff]
        %v968 = vld [vmem:[#allocation8 + $0x1e0] sm:$0xff]
        %v969 = vld [vmem:[#allocation8 + $0x1e8] sm:$0xff]
        %v970 = vld [vmem:[#allocation8 + $0x1f0] sm:$0xff]
        %v971 = vld [vmem:[#allocation8 + $0x1f8] sm:$0xff]
        %v972 = vld [vmem:[#allocation8 + $0x200] sm:$0xff]
        %v973 = vld [vmem:[#allocation8 + $0x208] sm:$0xff]
        %v974 = vld [vmem:[#allocation8 + $0x210] sm:$0xff]
        %v975 = vld [vmem:[#allocation8 + $0x218] sm:$0xff]
        %v976 = vld [vmem:[#allocation8 + $0x220] sm:$0xff]
        %v977 = vld [vmem:[#allocation8 + $0x228] sm:$0xff]
        %v978 = vld [vmem:[#allocation8 + $0x230] sm:$0xff]
        %v979 = vld [vmem:[#allocation8 + $0x238] sm:$0xff]
        %v980 = vld [vmem:[#allocation8 + $0x240] sm:$0xff]
        %v981 = vld [vmem:[#allocation8 + $0x248] sm:$0xff]
        %v982 = vld [vmem:[#allocation8 + $0x250] sm:$0xff]
        %v983 = vld [vmem:[#allocation8 + $0x258] sm:$0xff]
        %v984 = vld [vmem:[#allocation8 + $0x260] sm:$0xff]
        %v985 = vld [vmem:[#allocation8 + $0x268] sm:$0xff]
        %v986 = vld [vmem:[#allocation8 + $0x270] sm:$0xff]
        %v987 = vld [vmem:[#allocation8 + $0x278] sm:$0xff]
        %v988 = vld [vmem:[#allocation8 + $0x280] sm:$0xff]
        %v989 = vld [vmem:[#allocation8 + $0x288] sm:$0xff]
        %v990 = vld [vmem:[#allocation8 + $0x290] sm:$0xff]
        %v991 = vld [vmem:[#allocation8 + $0x298] sm:$0xff]
        %v992 = vld [vmem:[#allocation8 + $0x2a0] sm:$0xff]
        %v993 = vld [vmem:[#allocation8 + $0x2a8] sm:$0xff]
        %v994 = vld [vmem:[#allocation8 + $0x2b0] sm:$0xff]
        %v995 = vld [vmem:[#allocation8 + $0x2b8] sm:$0xff]
        %v996 = vld [vmem:[#allocation8 + $0x2c0] sm:$0xff]
        %v997 = vld [vmem:[#allocation8 + $0x2c8] sm:$0xff]
        %v998 = vld [vmem:[#allocation8 + $0x2d0] sm:$0xff]
        %v999 = vld [vmem:[#allocation8 + $0x2d8] sm:$0xff]
        %v1000 = vld [vmem:[#allocation8 + $0x2e0] sm:$0xff]
        %v1001 = vld [vmem:[#allocation8 + $0x2e8] sm:$0xff]
        %v1002 = vld [vmem:[#allocation8 + $0x2f0] sm:$0xff]
        %v1003 = vld [vmem:[#allocation8 + $0x2f8] sm:$0xff]
        %v1004 = vld [vmem:[#allocation8 + $0x300] sm:$0xff]
        %v1005 = vld [vmem:[#allocation8 + $0x308] sm:$0xff]
        %v1006 = vld [vmem:[#allocation8 + $0x310] sm:$0xff]
        %v1007 = vld [vmem:[#allocation8 + $0x318] sm:$0xff]
        %v1008 = vld [vmem:[#allocation8 + $0x320] sm:$0xff]
        %v1009 = vld [vmem:[#allocation8 + $0x328] sm:$0xff]
        %v1010 = vld [vmem:[#allocation8 + $0x330] sm:$0xff]
        %v1011 = vld [vmem:[#allocation8 + $0x338] sm:$0xff]
        %v1012 = vld [vmem:[#allocation8 + $0x340] sm:$0xff]
        %v1013 = vld [vmem:[#allocation8 + $0x348] sm:$0xff]
        %v1014 = vld [vmem:[#allocation8 + $0x350] sm:$0xff]
        %v1015 = vld [vmem:[#allocation8 + $0x358] sm:$0xff]
        %v1016 = vld [vmem:[#allocation8 + $0x360] sm:$0xff]
        %v1017 = vld [vmem:[#allocation8 + $0x368] sm:$0xff]
        %v1018 = vld [vmem:[#allocation8 + $0x370] sm:$0xff]
        %v1019 = vld [vmem:[#allocation8 + $0x378] sm:$0xff]
        %v1020 = vld [vmem:[%s6] sm:$0x1]
        %v1022 = vlaneseq
        %v1023 = vshrl.u32 %v1022, 7
        %v1024 = vsub.s32 0, %v1023
        %v1025 = vrot.slane %v1020, %v1024
        %1027 = vmatprep.subr.mxu0 0.0
        %1028 = vmatpush1.msra.mxu0 %v908
        %1029 = vmatprep.subr.mxu0 0.0
        %1030 = vmatpush1.msra.mxu0 %v909
        %1031 = vmatprep.subr.mxu0 0.0
        %1032 = vmatpush1.msra.mxu0 %v910
        %1033 = vmatprep.subr.mxu0 0.0
        %1034 = vmatpush1.msra.mxu0 %v911
        %1035 = vmatprep.subr.mxu0 0.0
        %1036 = vmatpush1.msra.mxu0 %v912
        %1037 = vmatprep.subr.mxu0 0.0
        %1038 = vmatpush1.msra.mxu0 %v913
        %1039 = vmatprep.subr.mxu0 0.0
        %1040 = vmatpush1.msra.mxu0 %v914
        %1041 = vmatprep.subr.mxu0 0.0
        %1042 = vmatpush1.msra.mxu0 %v915
        %1043 = vmatprep.subr.mxu0 0.0
        %1044 = vmatpush1.msra.mxu0 %v916
        %1045 = vmatprep.subr.mxu0 0.0
        %1046 = vmatpush1.msra.mxu0 %v917
        %1047 = vmatprep.subr.mxu0 0.0
        %1048 = vmatpush1.msra.mxu0 %v918
        %1049 = vmatprep.subr.mxu0 0.0
        %1050 = vmatpush1.msra.mxu0 %v919
        %1051 = vmatprep.subr.mxu0 0.0
        %1052 = vmatpush1.msra.mxu0 %v920
        %1053 = vmatprep.subr.mxu0 0.0
        %1054 = vmatpush1.msra.mxu0 %v921
        %1055 = vmatprep.subr.mxu0 0.0
        %1056 = vmatpush1.msra.mxu0 %v922
        %1057 = vmatprep.subr.mxu0 0.0
        %1058 = vmatpush1.msra.mxu0 %v923
        %1059 = vmatprep.subr.mxu0 0.0
        %1060 = vmatpush1.msra.mxu0 %v924
        %1061 = vmatprep.subr.mxu0 0.0
        %1062 = vmatpush1.msra.mxu0 %v925
        %1063 = vmatprep.subr.mxu0 0.0
        %1064 = vmatpush1.msra.mxu0 %v926
        %1065 = vmatprep.subr.mxu0 0.0
        %1066 = vmatpush1.msra.mxu0 %v927
        %1067 = vmatprep.subr.mxu0 0.0
        %1068 = vmatpush1.msra.mxu0 %v928
        %1069 = vmatprep.subr.mxu0 0.0
        %1070 = vmatpush1.msra.mxu0 %v929
        %1071 = vmatprep.subr.mxu0 0.0
        %1072 = vmatpush1.msra.mxu0 %v930
        %1073 = vmatprep.subr.mxu0 0.0
        %1074 = vmatpush1.msra.mxu0 %v931
        %1075 = vmatprep.subr.mxu0 0.0
        %1076 = vmatpush1.msra.mxu0 %v932
        %1077 = vmatprep.subr.mxu0 0.0
        %1078 = vmatpush1.msra.mxu0 %v933
        %1079 = vmatprep.subr.mxu0 0.0
        %1080 = vmatpush1.msra.mxu0 %v934
        %1081 = vmatprep.subr.mxu0 0.0
        %1082 = vmatpush1.msra.mxu0 %v935
        %1083 = vmatprep.subr.mxu0 0.0
        %1084 = vmatpush1.msra.mxu0 %v936
        %1085 = vmatprep.subr.mxu0 0.0
        %1086 = vmatpush1.msra.mxu0 %v937
        %1087 = vmatprep.subr.mxu0 0.0
        %1088 = vmatpush1.msra.mxu0 %v938
        %1089 = vmatprep.subr.mxu0 0.0
        %1090 = vmatpush1.msra.mxu0 %v939
        %1091 = vmatprep.mubr.f32.mxu0 %v893
        %1092 = vmatmul.mubr.f32.gmra.mrb[0].mxu0 %v891
        %v1093 = vpop.f32.mrb[0].mxu0
        %v1094 = vadd.f32 %v1025, %v1093
        %v1095 = vpop.f32.mrb[0].mxu0
        %1096 = vdwg.mxu0
        %1097 = vmatprep.subr.mxu0 0.0
        %1098 = vmatpush1.msra.mxu0 %v940
        %1099 = vmatprep.subr.mxu0 0.0
        %1100 = vmatpush1.msra.mxu0 %v941
        %1101 = vmatprep.subr.mxu0 0.0
        %1102 = vmatpush1.msra.mxu0 %v942
        %1103 = vmatprep.subr.mxu0 0.0
        %1104 = vmatpush1.msra.mxu0 %v943
        %1105 = vmatprep.subr.mxu0 0.0
        %1106 = vmatpush1.msra.mxu0 %v944
        %1107 = vmatprep.subr.mxu0 0.0
        %1108 = vmatpush1.msra.mxu0 %v945
        %1109 = vmatprep.subr.mxu0 0.0
        %1110 = vmatpush1.msra.mxu0 %v946
        %1111 = vmatprep.subr.mxu0 0.0
        %1112 = vmatpush1.msra.mxu0 %v947
        %1113 = vmatprep.subr.mxu0 0.0
        %1114 = vmatpush1.msra.mxu0 %v948
        %1115 = vmatprep.subr.mxu0 0.0
        %1116 = vmatpush1.msra.mxu0 %v949
        %1117 = vmatprep.subr.mxu0 0.0
        %1118 = vmatpush1.msra.mxu0 %v950
        %1119 = vmatprep.subr.mxu0 0.0
        %1120 = vmatpush1.msra.mxu0 %v951
        %1121 = vmatprep.subr.mxu0 0.0
        %1122 = vmatpush1.msra.mxu0 %v952
        %1123 = vmatprep.subr.mxu0 0.0
        %1124 = vmatpush1.msra.mxu0 %v953
        %1125 = vmatprep.subr.mxu0 0.0
        %1126 = vmatpush1.msra.mxu0 %v954
        %1127 = vmatprep.subr.mxu0 0.0
        %1128 = vmatpush1.msra.mxu0 %v955
        %1129 = vmatprep.subr.mxu0 0.0
        %1130 = vmatpush1.msra.mxu0 %v956
        %1131 = vmatprep.subr.mxu0 0.0
        %1132 = vmatpush1.msra.mxu0 %v957
        %1133 = vmatprep.subr.mxu0 0.0
        %1134 = vmatpush1.msra.mxu0 %v958
        %1135 = vmatprep.subr.mxu0 0.0
        %1136 = vmatpush1.msra.mxu0 %v959
        %1137 = vmatprep.subr.mxu0 0.0
        %1138 = vmatpush1.msra.mxu0 %v960
        %1139 = vmatprep.subr.mxu0 0.0
        %1140 = vmatpush1.msra.mxu0 %v961
        %1141 = vmatprep.subr.mxu0 0.0
        %1142 = vmatpush1.msra.mxu0 %v962
        %1143 = vmatprep.subr.mxu0 0.0
        %1144 = vmatpush1.msra.mxu0 %v963
        %1145 = vmatprep.subr.mxu0 0.0
        %1146 = vmatpush1.msra.mxu0 %v964
        %1147 = vmatprep.subr.mxu0 0.0
        %1148 = vmatpush1.msra.mxu0 %v965
        %1149 = vmatprep.subr.mxu0 0.0
        %1150 = vmatpush1.msra.mxu0 %v966
        %1151 = vmatprep.subr.mxu0 0.0
        %1152 = vmatpush1.msra.mxu0 %v967
        %1153 = vmatprep.subr.mxu0 0.0
        %1154 = vmatpush1.msra.mxu0 %v968
        %1155 = vmatprep.subr.mxu0 0.0
        %1156 = vmatpush1.msra.mxu0 %v969
        %1157 = vmatprep.subr.mxu0 0.0
        %1158 = vmatpush1.msra.mxu0 %v970
        %1159 = vmatprep.subr.mxu0 0.0
        %1160 = vmatpush1.msra.mxu0 %v971
        %1161 = vmatprep.mubr.f32.mxu0 %v882
        %1162 = vmatmul.mubr.f32.gmra.mrb[0].mxu0 %v895
        %v1163 = vpop.f32.mrb[0].mxu0
        %v1164 = vadd.f32 %v1094, %v1163
        %v1165 = vpop.f32.mrb[0].mxu0
        %1166 = vdwg.mxu0
        %1167 = vmatprep.subr.mxu0 0.0
        %1168 = vmatpush1.msra.mxu0 %v972
        %1169 = vmatprep.subr.mxu0 0.0
        %1170 = vmatpush1.msra.mxu0 %v973
        %1171 = vmatprep.subr.mxu0 0.0
        %1172 = vmatpush1.msra.mxu0 %v974
        %1173 = vmatprep.subr.mxu0 0.0
        %1174 = vmatpush1.msra.mxu0 %v975
        %1175 = vmatprep.subr.mxu0 0.0
        %1176 = vmatpush1.msra.mxu0 %v976
        %1177 = vmatprep.subr.mxu0 0.0
        %1178 = vmatpush1.msra.mxu0 %v977
        %1179 = vmatprep.subr.mxu0 0.0
        %1180 = vmatpush1.msra.mxu0 %v978
        %1181 = vmatprep.subr.mxu0 0.0
        %1182 = vmatpush1.msra.mxu0 %v979
        %1183 = vmatprep.subr.mxu0 0.0
        %1184 = vmatpush1.msra.mxu0 %v980
        %1185 = vmatprep.subr.mxu0 0.0
        %1186 = vmatpush1.msra.mxu0 %v981
        %1187 = vmatprep.subr.mxu0 0.0
        %1188 = vmatpush1.msra.mxu0 %v982
        %1189 = vmatprep.subr.mxu0 0.0
        %1190 = vmatpush1.msra.mxu0 %v983
        %1191 = vmatprep.subr.mxu0 0.0
        %1192 = vmatpush1.msra.mxu0 %v984
        %1193 = vmatprep.subr.mxu0 0.0
        %1194 = vmatpush1.msra.mxu0 %v985
        %1195 = vmatprep.subr.mxu0 0.0
        %1196 = vmatpush1.msra.mxu0 %v986
        %1197 = vmatprep.subr.mxu0 0.0
        %1198 = vmatpush1.msra.mxu0 %v987
        %1199 = vmatprep.subr.mxu0 0.0
        %1200 = vmatpush1.msra.mxu0 %v988
        %1201 = vmatprep.subr.mxu0 0.0
        %1202 = vmatpush1.msra.mxu0 %v989
        %1203 = vmatprep.subr.mxu0 0.0
        %1204 = vmatpush1.msra.mxu0 %v990
        %1205 = vmatprep.subr.mxu0 0.0
        %1206 = vmatpush1.msra.mxu0 %v991
        %1207 = vmatprep.subr.mxu0 0.0
        %1208 = vmatpush1.msra.mxu0 %v992
        %1209 = vmatprep.subr.mxu0 0.0
        %1210 = vmatpush1.msra.mxu0 %v993
        %1211 = vmatprep.subr.mxu0 0.0
        %1212 = vmatpush1.msra.mxu0 %v994
        %1213 = vmatprep.subr.mxu0 0.0
        %1214 = vmatpush1.msra.mxu0 %v995
        %1215 = vmatprep.subr.mxu0 0.0
        %1216 = vmatpush1.msra.mxu0 %v996
        %1217 = vmatprep.subr.mxu0 0.0
        %1218 = vmatpush1.msra.mxu0 %v997
        %1219 = vmatprep.subr.mxu0 0.0
        %1220 = vmatpush1.msra.mxu0 %v998
        %1221 = vmatprep.subr.mxu0 0.0
        %1222 = vmatpush1.msra.mxu0 %v999
        %1223 = vmatprep.subr.mxu0 0.0
        %1224 = vmatpush1.msra.mxu0 %v1000
        %1225 = vmatprep.subr.mxu0 0.0
        %1226 = vmatpush1.msra.mxu0 %v1001
        %1227 = vmatprep.subr.mxu0 0.0
        %1228 = vmatpush1.msra.mxu0 %v1002
        %1229 = vmatprep.subr.mxu0 0.0
        %1230 = vmatpush1.msra.mxu0 %v1003
        %1231 = vmatprep.mubr.f32.mxu0 %v899
        %1232 = vmatmul.mubr.f32.gmra.mrb[0].mxu0 %v897
        %v1233 = vpop.f32.mrb[0].mxu0
        %v1234 = vadd.f32 %v1164, %v1233
        %v1235 = vpop.f32.mrb[0].mxu0
        %1236 = vdwg.mxu0
        %1237 = vmatprep.subr.mxu0 0.0
        %1238 = vmatpush1.msra.mxu0 %v1004
        %1239 = vmatprep.subr.mxu0 0.0
        %1240 = vmatpush1.msra.mxu0 %v1005
        %1241 = vmatprep.subr.mxu0 0.0
        %1242 = vmatpush1.msra.mxu0 %v1006
        %1243 = vmatprep.subr.mxu0 0.0
        %1244 = vmatpush1.msra.mxu0 %v1007
        %1245 = vmatprep.subr.mxu0 0.0
        %1246 = vmatpush1.msra.mxu0 %v1008
        %1247 = vmatprep.subr.mxu0 0.0
        %1248 = vmatpush1.msra.mxu0 %v1009
        %1249 = vmatprep.subr.mxu0 0.0
        %1250 = vmatpush1.msra.mxu0 %v1010
        %1251 = vmatprep.subr.mxu0 0.0
        %1252 = vmatpush1.msra.mxu0 %v1011
        %1253 = vmatprep.subr.mxu0 0.0
        %1254 = vmatpush1.msra.mxu0 %v1012
        %1255 = vmatprep.subr.mxu0 0.0
        %1256 = vmatpush1.msra.mxu0 %v1013
        %1257 = vmatprep.subr.mxu0 0.0
        %1258 = vmatpush1.msra.mxu0 %v1014
        %1259 = vmatprep.subr.mxu0 0.0
        %1260 = vmatpush1.msra.mxu0 %v1015
        %1261 = vmatprep.subr.mxu0 0.0
        %1262 = vmatpush1.msra.mxu0 %v1016
        %1263 = vmatprep.subr.mxu0 0.0
        %1264 = vmatpush1.msra.mxu0 %v1017
        %1265 = vmatprep.subr.mxu0 0.0
        %1266 = vmatpush1.msra.mxu0 %v1018
        %1267 = vmatprep.subr.mxu0 0.0
        %1268 = vmatpush1.msra.mxu0 %v1019
        %1269 = vmatprep.subr.mxu0 0.0
        %1270 = vmatpush1.msra.mxu0 0.0
        %1271 = vmatprep.subr.mxu0 0.0
        %1272 = vmatpush1.msra.mxu0 0.0
        %1273 = vmatprep.subr.mxu0 0.0
        %1274 = vmatpush1.msra.mxu0 0.0
        %1275 = vmatprep.subr.mxu0 0.0
        %1276 = vmatpush1.msra.mxu0 0.0
        %1277 = vmatprep.subr.mxu0 0.0
        %1278 = vmatpush1.msra.mxu0 0.0
        %1279 = vmatprep.subr.mxu0 0.0
        %1280 = vmatpush1.msra.mxu0 0.0
        %1281 = vmatprep.subr.mxu0 0.0
        %1282 = vmatpush1.msra.mxu0 0.0
        %1283 = vmatprep.subr.mxu0 0.0
        %1284 = vmatpush1.msra.mxu0 0.0
        %1285 = vmatprep.subr.mxu0 0.0
        %1286 = vmatpush1.msra.mxu0 0.0
        %1287 = vmatprep.subr.mxu0 0.0
        %1288 = vmatpush1.msra.mxu0 0.0
        %1289 = vmatprep.subr.mxu0 0.0
        %1290 = vmatpush1.msra.mxu0 0.0
        %1291 = vmatprep.subr.mxu0 0.0
        %1292 = vmatpush1.msra.mxu0 0.0
        %1293 = vmatprep.subr.mxu0 0.0
        %1294 = vmatpush1.msra.mxu0 0.0
        %1295 = vmatprep.subr.mxu0 0.0
        %1296 = vmatpush1.msra.mxu0 0.0
        %1297 = vmatprep.subr.mxu0 0.0
        %1298 = vmatpush1.msra.mxu0 0.0
        %1299 = vmatprep.subr.mxu0 0.0
        %1300 = vmatpush1.msra.mxu0 0.0
        %1301 = vmatprep.mubr.f32.mxu0 0.0
        %1302 = vmatmul.mubr.f32.gmra.mrb[0].mxu0 %v907
        %v1303 = vpop.f32.mrb[0].mxu0
        %v1304 = vadd.f32 %v1234, %v1303
        %v1305 = vpop.f32.mrb[0].mxu0
        %1306 = vdwg.mxu0
        %v1307 = vmax.f32 %v1304, 0.0
        %v1308 = vadd.f32 %v883, %v1307
        %1309 = vst [vmem:[%s337] sm:$0xff] %v1308
        %s1310 = sand.u32 %s186, 1
        %s1311 = scalar_lea.sflag [#allocation4], %s1310
        %s1312 = sand.u32 %s186, 1
        %s1313 = smul.addr %s1312, 8
        %s1314 = scalar_lea.vmem [#allocation10], %s1313
        // Predicated region
        $region65: #{tpu_custom_call.1} parent=47 // pred_check
          %p1315 = pneg %p196
        $region66: #{tpu_custom_call.1} parent=47 // pred_check_branch
          %1317 = sbr.rel (%p1315) target = $region68
        $region67: #{tpu_custom_call.1} parent=47 // pred_region
          %s1319 = ssub.s32 128, 128
          %1320 = vsyncadd %s1311, %s1319
          %s1321 = smul.addr %s26, 128
          %s1322 = scalar_lea.hbm %s7, %s1321
          %s1324 = sshll.u32 %s1314, 4
          %s1325 = int_to_ptr.vmem [resolvable:$true] %s1324
          %1327 = dma.vmem_to_hbm [thread:$0]  %s1325, 128, %s1322, %s1311
        $region68: #{tpu_custom_call.1} parent=47 // pred_fallthru
          _
      $region48: #{tpu_custom_call.1} parent=5 // pred_fallthru
        _
      %p1328 = scmp.le.s32.totalorder 2, %s21
      // Predicated region
      $region69: #{tpu_custom_call.1} parent=5 // pred_check
        %p1329 = pneg %p1328
      $region70: #{tpu_custom_call.1} parent=5 // pred_check_branch
        %1331 = sbr.rel (%p1329) target = $region72
      $region71: #{tpu_custom_call.1} parent=5 // pred_region
        %s1332 = ssub.s32 %s21, 2
        // Predicated region
        $region73: #{tpu_custom_call.1} parent=71 // pred_check
          %p1333 = pneg %p202
        $region74: #{tpu_custom_call.1} parent=71 // pred_check_branch
          %1335 = sbr.rel (%p1333) target = $region76
        $region75: #{tpu_custom_call.1} parent=71 // pred_region
          %s1336 = sand.u32 %s187, 1
          %s1337 = scalar_lea.sflag [#allocation4], %s1336
          %s1338 = sand.u32 %s187, 1
          %s1339 = smul.addr %s1338, 8
          %s1340 = scalar_lea.vmem [#allocation10], %s1339
          %1341 = dma.done %s1337, 128
        $region76: #{tpu_custom_call.1} parent=71 // pred_fallthru
          _
      $region72: #{tpu_custom_call.1} parent=5 // pred_fallthru
        _
    $region6: #{tpu_custom_call.1} parent=1 // loop_footer
      %s25 = sadd.s32 1, %s21
    $region7: #{tpu_custom_call.1} parent=1 // loop_footer_branch
      %20 = sbr.rel target = $region3
    $region8: #{tpu_custom_call.1} parent=1 // loop_exit
      _
    %1342 = vsyncpa [#allocation3], 1
    %s1343 = scalar_lea.sflag [#allocation3], 1
    %1344 = vsyncpa %s1343, 1
    %1345 = vsyncpa [#allocation6], 1
    %1346 = vsyncpa [#allocation9], 1
    %1347 = vsyncpa [#allocation4], 1
    %s1348 = scalar_lea.sflag [#allocation4], 1
    %1349 = vsyncpa %s1348, 1

</llo_original>
